<compile_context>
chip_gen: v6e
topology: v6e:2x2x1
jax: 0.10.0
libtpu: 0.0.40
codegen_flags: <defaults>
</compile_context>

<pallas_src>
import jax
import jax.numpy as jnp
from jax.experimental import pallas as pl
from jax.experimental.pallas import tpu as pltpu

# ---- small synthetic config ----
B = 2          # batch
LT = 8         # text sequence length
HB = 32        # bert hidden size (stand-in)
E = 32         # config.middle_hidden_size
NHEAD = 4      # config.attention_nhead
HD = E // NHEAD
S_IMG = 16     # config.img_hidden_seq
CR = 64        # resnet fc.in_features (stand-in for 2048)
P = 49         # 7 * 7
P_PAD = 64     # spatial dim zero-padded for aligned sublanes
HOUT = 16      # config.out_hidden_size
NL = 3         # config.num_labels
VOCAB = 100
IMG_HW = 56    # stand-in image spatial size (avg-pooled 8x -> 7x7)

_SCALE = 1.0 / (HD ** 0.5)
_PACK_W = 128


def _round8(n):
    return ((n + 7) // 8) * 8


# ---------------------------------------------------------------------------
# Packed parameter layout: every (pre-folded, pre-transposed) weight lives in a
# single bf16 [ROWS, 128] buffer -> one parameter DMA.  All block row offsets
# and sizes are multiples of 16 so bf16 (16,128) tiling stays aligned.
# ---------------------------------------------------------------------------
_PACK_SHAPES = (
    ('wt',         (HB, E)),             # TextModel.trans Linear (hidden + pooler rows)
    ('wc_convT',   (CR, S_IMG)),         # 1x1 conv as [in_ch, out_ch]  (y = x @ W)
    ('wl',         (P_PAD, E)),          # hidden_trans Linear(49 -> E), p zero-padded
    ('b_imghid',   (S_IMG, E)),          # conv bias folded through wl, + bl
    ('wi',         (CR, E)),             # ImageModel.trans Linear
    ('w_text_qkv', (E, 3 * E)),          # [K_A | V_A | Q_B*scale]
    ('w_img_qkv',  (E, 3 * E)),          # [Q_A*scale | K_B | V_B]
    ('w_cls1',     (4 * E, 2 * HOUT)),   # block-diag classifiers, out_proj folded in
    ('w_cls2',     (2 * HOUT, _PACK_W)), # block-diag classifier L2, lane-dense 128 cols
    ('biases',     (16, _PACK_W)),       # all 1-row biases share this slab (rows 0..5)
)

_BIAS_ROWS = {
    'bt':         (0, E),
    'bi':         (1, E),
    'b_text_qkv': (2, 3 * E),
    'b_img_qkv':  (3, 3 * E),
    'b_cls1':     (4, 2 * HOUT),
    'b_cls2':     (5, _PACK_W),
}


def _make_layout():
    layout, off = {}, 0
    for name, (r, c) in _PACK_SHAPES:
        layout[name] = (off, r, c)
        off += _round8(r)
    return layout, off


_PACK_LAYOUT, _PACK_ROWS = _make_layout()


def _fuse_kernel(t_cat_ref, r_img_ref, wp_ref, out_ref):
    """t_cat: [round8(B*LT + B), HB] bf16  (text hidden rows, pooler rows, zero pad)
       r_img: [B, P_PAD, CR]         bf16  channels-last 7x7 feature map (p zero-padded)
       wp:    [_PACK_ROWS, 128]      bf16  packed parameters
       out:   [B, 128]               f32   lane-dense slab; logits in cols [:2*NL]."""
    f32, bf16 = jnp.float32, jnp.bfloat16

    def getp(name):
        off, r, c = _PACK_LAYOUT[name]
        return wp_ref[off:off + r, 0:c]

    boff = _PACK_LAYOUT['biases'][0]
    bias_all = wp_ref[boff:boff + 16, :].astype(f32)     # one aligned load, then slice

    def getb(name):
        row, c = _BIAS_ROWS[name]
        return bias_all[row:row + 1, 0:c]

    t_cat = t_cat_ref[...]                               # bf16
    r_img = r_img_ref[...]                               # bf16
    nb = r_img.shape[0]

    # ---- TextModel.trans: one matmul covers hidden_state AND pooler rows ----
    t_all = jax.nn.relu(
        jnp.dot(t_cat, getp('wt'), preferred_element_type=f32) + getb('bt'))
    text_hidden = t_all[:nb * LT]                        # [B*LT, E] f32
    text_feature = t_all[nb * LT:nb * LT + nb]           # [B, E]    f32

    # ---- ImageModel.hidden_trans: 1x1 conv as ONE flattened 2-D matmul over CR,
    #      tiny per-batch transpose, Linear(49->E) (+ folded conv bias), ReLU ----
    conv = jnp.dot(r_img.reshape(nb * P_PAD, CR), getp('wc_convT'),
                   preferred_element_type=f32)           # [B*P_PAD, S]
    conv3 = conv.reshape(nb, P_PAD, S_IMG)
    conv_t = jnp.concatenate([conv3[b].T for b in range(nb)], axis=0)   # [B*S, P_PAD]
    img_hidden = jax.nn.relu(
        jnp.dot(conv_t.astype(bf16), getp('wl'),
                preferred_element_type=f32).reshape(nb, S_IMG, E)
        + getp('b_imghid')[None])                        # [B, S, E] f32

    # ---- ImageModel.resnet_p (avg pool over the 49 real positions) + trans ----
    pooled = (jnp.sum(r_img.astype(f32), axis=1) * (1.0 / P)).astype(bf16)   # [B, CR]
    img_feature = jax.nn.relu(
        jnp.dot(pooled, getp('wi'), preferred_element_type=f32) + getb('bi'))

    # ---- fused QKV projections (1/sqrt(head_dim) folded into Q blocks) ----
    text_proj = (jnp.dot(text_hidden.astype(bf16), getp('w_text_qkv'),
                         preferred_element_type=f32)
                 + getb('b_text_qkv')).reshape(nb, LT, 3 * E)
    img_proj = (jnp.dot(img_hidden.astype(bf16).reshape(nb * S_IMG, E),
                        getp('w_img_qkv'), preferred_element_type=f32)
                + getb('b_img_qkv')).reshape(nb, S_IMG, 3 * E)

    def head_fold(x):    # [B, L, E] -> [NHEAD*B, L, HD]   (heads folded into batch dim)
        return jnp.concatenate(
            [x[:, :, h * HD:(h + 1) * HD] for h in range(NHEAD)], axis=0)

    # NOTE: like the PyTorch module, no key_padding_mask; dropout = eval identity.
    def attn_pooled(q3, k3, v3):
        # mean over the query axis of MultiheadAttention(q, k, v), with the mean
        # pulled in front of the AV product; out_proj is folded into the
        # classifier weights at pack time, so this returns the pooled
        # concat-of-heads vector [B, E].
        s = jnp.einsum('bqd,bkd->bqk', q3, k3, preferred_element_type=f32)
        p = jax.nn.softmax(s, axis=-1)
        pbar = jnp.mean(p, axis=1, keepdims=True)                  # [H*B, 1, Lk]
        o = jnp.einsum('bqk,bkd->bqd', pbar, v3,
                       preferred_element_type=f32).reshape(NHEAD * nb, HD)
        return jnp.concatenate(                                     # heads -> lanes
            [o[h * nb:(h + 1) * nb] for h in range(NHEAD)], axis=-1)   # [B, E]

    # attention A = img_text_attention (query = img_hidden, k = v = text_hidden)
    attn_a = attn_pooled(head_fold(img_proj[:, :, 0:E]),
                         head_fold(text_proj[:, :, 0:E]),
                         head_fold(text_proj[:, :, E:2 * E]))
    # attention B = text_img_attention (query = text_hidden, k = v = img_hidden)
    attn_b = attn_pooled(head_fold(text_proj[:, :, 2 * E:3 * E]),
                         head_fold(img_proj[:, :, E:2 * E]),
                         head_fold(img_proj[:, :, 2 * E:3 * E]))

    # ---- both classifiers as one block-diagonal, lane-dense K=128 chain ----
    x_big = jnp.concatenate(
        [text_feature, attn_b, img_feature, attn_a], axis=-1).astype(bf16)   # [B, 128]
    h_big = jax.nn.relu(
        jnp.dot(x_big, getp('w_cls1'), preferred_element_type=f32) + getb('b_cls1'))
    out_ref[...] = (jnp.dot(h_big.astype(bf16), getp('w_cls2'),
                            preferred_element_type=f32) + getb('b_cls2'))


def make_params(key):
    def init(k, shape, scale=0.05):
        return scale * jax.random.normal(k, shape, dtype=jnp.float32)

    keys = jax.random.split(key, 28)
    return dict(
        # (PyTorch Linear / attention weights stored pre-transposed: y = x @ W)
        wt=init(keys[0], (HB, E)), bt=init(keys[1], (1, E)),
        wc=init(keys[2], (CR, S_IMG)), bc=init(keys[3], (1, S_IMG)),
        wl=init(keys[4], (P, E)), bl=init(keys[5], (1, E)),
        wi=init(keys[6], (CR, E)), bi=init(keys[7], (1, E)),
        w_in_it=init(keys[8], (E, 3 * E)), b_in_it=init(keys[9], (1, 3 * E)),
        w_o_it=init(keys[10], (E, E)), b_o_it=init(keys[11], (1, E)),
        w_in_ti=init(keys[12], (E, 3 * E)), b_in_ti=init(keys[13], (1, 3 * E)),
        w_o_ti=init(keys[14], (E, E)), b_o_ti=init(keys[15], (1, E)),
        wtc1=init(keys[16], (2 * E, HOUT)), btc1=init(keys[17], (1, HOUT)),
        wtc2=init(keys[18], (HOUT, NL)), btc2=init(keys[19], (1, NL)),
        wic1=init(keys[20], (2 * E, HOUT)), bic1=init(keys[21], (1, HOUT)),
        wic2=init(keys[22], (HOUT, NL)), bic2=init(keys[23], (1, NL)),
        # stand-in backbone params (plain-JAX glue)
        emb=init(keys[24], (VOCAB, HB), scale=0.5),
        wpool=init(keys[25], (HB, HB)), bpool=init(keys[26], (1, HB)),
        wproj=init(keys[27], (3, CR), scale=0.5),
    )


def pack_params(p):
    """Fold / transpose / block-diag pack all fusion-head weights into one bf16
    [_PACK_ROWS, 128] buffer.  Runs ONCE at init, outside the per-call jit."""
    f32 = jnp.float32
    ent = {}
    ent['wt'] = p['wt']
    ent['wc_convT'] = p['wc']                                   # [CR, S]: y = x @ W
    ent['wl'] = jnp.pad(p['wl'], ((0, P_PAD - P), (0, 0)))      # zero-pad p axis
    # hidden_trans conv bias folded through Linear(49->E):
    #   bias_eff[s,e] = bc[s] * sum_p wl[p,e] + bl[e]
    ent['b_imghid'] = jnp.outer(p['bc'][0], p['wl'].sum(axis=0)) + p['bl']
    ent['wi'] = p['wi']
    # A = img_text_attention (q=img, kv=text);  B = text_img_attention (q=text, kv=img)
    # 1/sqrt(head_dim) folded into the query weight AND bias blocks.
    ent['w_text_qkv'] = jnp.concatenate(
        [p['w_in_it'][:, E:2 * E], p['w_in_it'][:, 2 * E:],
         _SCALE * p['w_in_ti'][:, :E]], axis=1)
    b_text_qkv = jnp.concatenate(
        [p['b_in_it'][:, E:2 * E], p['b_in_it'][:, 2 * E:],
         _SCALE * p['b_in_ti'][:, :E]], axis=1)
    ent['w_img_qkv'] = jnp.concatenate(
        [_SCALE * p['w_in_it'][:, :E], p['w_in_ti'][:, E:2 * E],
         p['w_in_ti'][:, 2 * E:]], axis=1)
    b_img_qkv = jnp.concatenate(
        [_SCALE * p['b_in_it'][:, :E], p['b_in_ti'][:, E:2 * E],
         p['b_in_ti'][:, 2 * E:]], axis=1)
    # block-diagonal classifiers with each attention's out_proj folded into L1
    # (out_proj and classifier-L1 are back-to-back linear maps).
    w1 = jnp.zeros((4 * E, 2 * HOUT), f32)
    w1 = w1.at[:E, :HOUT].set(p['wtc1'][:E])
    w1 = w1.at[E:2 * E, :HOUT].set(p['w_o_ti'] @ p['wtc1'][E:])
    w1 = w1.at[2 * E:3 * E, HOUT:].set(p['wic1'][:E])
    w1 = w1.at[3 * E:, HOUT:].set(p['w_o_it'] @ p['wic1'][E:])
    ent['w_cls1'] = w1
    b_cls1 = jnp.concatenate(
        [p['btc1'] + p['b_o_ti'] @ p['wtc1'][E:],
         p['bic1'] + p['b_o_it'] @ p['wic1'][E:]], axis=1)
    w2 = jnp.zeros((2 * HOUT, _PACK_W), f32)                    # 128 cols -> lane-dense
    w2 = w2.at[:HOUT, :NL].set(p['wtc2'])
    w2 = w2.at[HOUT:, NL:2 * NL].set(p['wic2'])
    ent['w_cls2'] = w2
    b_cls2 = jnp.zeros((1, _PACK_W), f32)
    b_cls2 = b_cls2.at[:, :NL].set(p['btc2']).at[:, NL:2 * NL].set(p['bic2'])

    biases = jnp.zeros((16, _PACK_W), f32)
    for name, val in (('bt', p['bt']), ('bi', p['bi']),
                      ('b_text_qkv', b_text_qkv), ('b_img_qkv', b_img_qkv),
                      ('b_cls1', b_cls1), ('b_cls2', b_cls2)):
        row, c = _BIAS_ROWS[name]
        biases = biases.at[row, :c].set(val[0, :c])
    ent['biases'] = biases

    slabs = []
    for name, (r, c) in _PACK_SHAPES:
        x = ent[name].astype(f32)
        assert x.shape == (r, c), (name, x.shape, (r, c))
        slabs.append(jnp.pad(x, ((0, _round8(r) - r), (0, _PACK_W - c))))
    return jnp.concatenate(slabs, axis=0).astype(jnp.bfloat16)   # [_PACK_ROWS, 128]


@jax.jit
def fuse_forward(params, packed, texts, texts_mask, imgs):
    bf16 = jnp.bfloat16
    # ---- stand-in backbones (glue; not the Pallas hot path) ----
    # TODO(synk): pretrained BERT / ResNet50 feature extractors are replaced by tiny
    # deterministic stand-ins; only the fusion head after the backbones runs in Pallas.
    emb = jnp.take(params['emb'], texts, axis=0)                           # [B, Lt, HB]
    t_hid = emb * texts_mask[..., None].astype(jnp.float32)
    t_pool = jnp.tanh(t_hid[:, 0, :] @ params['wpool'] + params['bpool'])  # [B, HB]

    bn, c, hh, ww = imgs.shape                                             # NCHW
    patches = imgs.reshape(bn, c, 7, hh // 7, 7, ww // 7).mean(axis=(3, 5))   # [B,3,7,7]
    # channels-LAST 7x7 feature map, spatial flattened + zero-padded 49 -> P_PAD so the
    # kernel sees aligned sublanes and a lane-dense CR minor dim.
    r_map = jnp.einsum('bchw,cd->bhwd', patches, params['wproj']).reshape(bn, P, CR)
    r_img = jnp.pad(r_map, ((0, 0), (0, P_PAD - P), (0, 0))).astype(bf16)

    # text hidden rows + pooler rows share the same trans Linear -> one matmul
    rows = bn * LT + bn
    t_cat = jnp.concatenate([t_hid.reshape(bn * LT, HB), t_pool], axis=0)
    t_cat = jnp.pad(t_cat, ((0, _round8(rows) - rows), (0, 0))).astype(bf16)

    vmem = pl.BlockSpec(memory_space=pltpu.MemorySpace.VMEM)
    # Grid-less single invocation: everything is VMEM-resident at these sizes.
    # (At real batch/CR, tile the batch with a 1-D "parallel" grid so v7x's second
    #  TensorCore is used and per-step VMEM stays bounded.)
    logits = pl.pallas_call(
        _fuse_kernel,
        out_shape=jax.ShapeDtypeStruct((bn, _PACK_W), jnp.float32),
        in_specs=[vmem, vmem, vmem],
        out_specs=vmem,
    )(t_cat, r_img, packed)

    # classifier softmaxes + final fuse softmax in the wrapper (kernel output stays
    # lane-dense); matches torch: softmax(softmax(text_logits) + softmax(img_logits)).
    text_prob = jax.nn.softmax(logits[:, :NL], axis=1)
    img_prob = jax.nn.softmax(logits[:, NL:2 * NL], axis=1)
    prob = jax.nn.softmax(text_prob + img_prob, axis=1)
    pred_labels = jnp.argmax(prob, axis=1)     # first-max index == torch.argmax
    return pred_labels, prob


if __name__ == "__main__":
    key = jax.random.PRNGKey(0)
    kp, kt, ki = jax.random.split(key, 3)
    params = make_params(kp)
    packed = pack_params(params)       # host-side fold/pack: runs ONCE, not per call
    texts = jax.random.randint(kt, (B, LT), 0, VOCAB, dtype=jnp.int32)
    texts_mask = jnp.ones((B, LT), dtype=jnp.int32)
    imgs = jax.random.normal(ki, (B, 3, IMG_HW, IMG_HW), dtype=jnp.float32)

    pred_labels, prob = fuse_forward(params, packed, texts, texts_mask, imgs)
    jax.block_until_ready((pred_labels, prob))
    assert pred_labels.shape == (B,) and prob.shape == (B, NL)
    print("KERNEL_OK")
</pallas_src>

<mosaic_0001>
module attributes {stable_mosaic.version = 11 : i64} {
  func.func @_fuse_kernel(%arg0: memref<24x32xbf16, #tpu.memory_space<vmem>>, %arg1: memref<2x64x64xbf16, #tpu.memory_space<vmem>>, %arg2: memref<480x128xbf16, #tpu.memory_space<vmem>>, %arg3: memref<2x128xf32, #tpu.memory_space<vmem>>) attributes {dimension_semantics = [], scalar_prefetch = 0 : i64, scratch_operands = 0 : i64, tpu.core_type = #tpu.core_type<tc>} {
    %c464 = arith.constant 464 : index
    %c0 = arith.constant 0 : index
    %0 = vector.load %arg2[%c464, %c0] : memref<480x128xbf16, #tpu.memory_space<vmem>>, vector<16x128xbf16>
    %1 = arith.extf %0 : vector<16x128xbf16> to vector<16x128xf32>
    %c0_0 = arith.constant 0 : index
    %c0_1 = arith.constant 0 : index
    %2 = vector.load %arg0[%c0_0, %c0_1] : memref<24x32xbf16, #tpu.memory_space<vmem>>, vector<24x32xbf16>
    %c0_2 = arith.constant 0 : index
    %c0_3 = arith.constant 0 : index
    %c0_4 = arith.constant 0 : index
    %3 = vector.load %arg1[%c0_2, %c0_3, %c0_4] : memref<2x64x64xbf16, #tpu.memory_space<vmem>>, vector<2x64x64xbf16>
    %c0_5 = arith.constant 0 : index
    %c0_6 = arith.constant 0 : index
    %4 = vector.load %arg2[%c0_5, %c0_6] : memref<480x128xbf16, #tpu.memory_space<vmem>>, vector<32x32xbf16>
    %cst = arith.constant dense<0.000000e+00> : vector<24x32xf32>
    %5 = tpu.matmul %2, %4, %cst {dimension_numbers = #tpu.dot_dimension_numbers<[1], [0], [0], [1], [0, 0, 1, 1], [], []>} : vector<24x32xbf16>, vector<32x32xbf16>, vector<24x32xf32> -> vector<24x32xf32>
    %6 = vector.extract_strided_slice %1 {offsets = [0, 0], sizes = [1, 32], strides = [1, 1]} : vector<16x128xf32> to vector<1x32xf32>
    %7 = vector.broadcast %6 : vector<1x32xf32> to vector<24x32xf32>
    %8 = arith.addf %5, %7 : vector<24x32xf32>
    %cst_7 = arith.constant 0.000000e+00 : f32
    %9 = vector.broadcast %cst_7 : f32 to vector<24x32xf32>
    %10 = arith.maximumf %8, %9 : vector<24x32xf32>
    %11 = vector.extract_strided_slice %10 {offsets = [0, 0], sizes = [16, 32], strides = [1, 1]} : vector<24x32xf32> to vector<16x32xf32>
    %12 = vector.extract_strided_slice %10 {offsets = [16, 0], sizes = [2, 32], strides = [1, 1]} : vector<24x32xf32> to vector<2x32xf32>
    %13 = vector.shape_cast %3 : vector<2x64x64xbf16> to vector<128x64xbf16>
    %c32 = arith.constant 32 : index
    %c0_8 = arith.constant 0 : index
    %14 = vector.load %arg2[%c32, %c0_8] : memref<480x128xbf16, #tpu.memory_space<vmem>>, vector<64x16xbf16>
    %cst_9 = arith.constant dense<0.000000e+00> : vector<128x16xf32>
    %15 = tpu.matmul %13, %14, %cst_9 {dimension_numbers = #tpu.dot_dimension_numbers<[1], [0], [0], [1], [0, 0, 1, 1], [], []>} : vector<128x64xbf16>, vector<64x16xbf16>, vector<128x16xf32> -> vector<128x16xf32>
    %16 = vector.shape_cast %15 : vector<128x16xf32> to vector<2x64x16xf32>
    %17 = vector.extract_strided_slice %16 {offsets = [0, 0, 0], sizes = [1, 64, 16], strides = [1, 1, 1]} : vector<2x64x16xf32> to vector<1x64x16xf32>
    %18 = vector.shape_cast %17 : vector<1x64x16xf32> to vector<64x16xf32>
    %19 = tpu.transpose %18, [1, 0] : vector<64x16xf32> -> vector<16x64xf32>
    %20 = vector.extract_strided_slice %16 {offsets = [1, 0, 0], sizes = [1, 64, 16], strides = [1, 1, 1]} : vector<2x64x16xf32> to vector<1x64x16xf32>
    %21 = vector.shape_cast %20 : vector<1x64x16xf32> to vector<64x16xf32>
    %22 = tpu.transpose %21, [1, 0] : vector<64x16xf32> -> vector<16x64xf32>
    %23 = tpu.concatenate %19, %22 in 0 : vector<16x64xf32>, vector<16x64xf32> -> vector<32x64xf32>
    %24 = arith.truncf %23 : vector<32x64xf32> to vector<32x64xbf16>
    %c96 = arith.constant 96 : index
    %c0_10 = arith.constant 0 : index
    %25 = vector.load %arg2[%c96, %c0_10] : memref<480x128xbf16, #tpu.memory_space<vmem>>, vector<64x32xbf16>
    %cst_11 = arith.constant dense<0.000000e+00> : vector<32x32xf32>
    %26 = tpu.matmul %24, %25, %cst_11 {dimension_numbers = #tpu.dot_dimension_numbers<[1], [0], [0], [1], [0, 0, 1, 1], [], []>} : vector<32x64xbf16>, vector<64x32xbf16>, vector<32x32xf32> -> vector<32x32xf32>
    %27 = vector.shape_cast %26 : vector<32x32xf32> to vector<2x16x32xf32>
    %c160 = arith.constant 160 : index
    %c0_12 = arith.constant 0 : index
    %28 = vector.load %arg2[%c160, %c0_12] : memref<480x128xbf16, #tpu.memory_space<vmem>>, vector<16x32xbf16>
    %29 = vector.shape_cast %28 : vector<16x32xbf16> to vector<1x16x32xbf16>
    %30 = arith.extf %29 : vector<1x16x32xbf16> to vector<1x16x32xf32>
    %31 = vector.broadcast %30 : vector<1x16x32xf32> to vector<2x16x32xf32>
    %32 = arith.addf %27, %31 : vector<2x16x32xf32>
    %cst_13 = arith.constant 0.000000e+00 : f32
    %33 = vector.broadcast %cst_13 : f32 to vector<2x16x32xf32>
    %34 = arith.maximumf %32, %33 : vector<2x16x32xf32>
    %35 = arith.extf %3 : vector<2x64x64xbf16> to vector<2x64x64xf32>
    %cst_14 = arith.constant dense<0.000000e+00> : vector<2x64xf32>
    %36 = vector.multi_reduction <add>, %35, %cst_14 [1] : vector<2x64x64xf32> to vector<2x64xf32>
    %cst_15 = arith.constant 0.0204081628 : f32
    %37 = vector.broadcast %cst_15 : f32 to vector<2x64xf32>
    %38 = arith.mulf %36, %37 : vector<2x64xf32>
    %39 = arith.truncf %38 : vector<2x64xf32> to vector<2x64xbf16>
    %c176 = arith.constant 176 : index
    %c0_16 = arith.constant 0 : index
    %40 = vector.load %arg2[%c176, %c0_16] : memref<480x128xbf16, #tpu.memory_space<vmem>>, vector<64x32xbf16>
    %cst_17 = arith.constant dense<0.000000e+00> : vector<2x32xf32>
    %41 = tpu.matmul %39, %40, %cst_17 {dimension_numbers = #tpu.dot_dimension_numbers<[1], [0], [0], [1], [0, 0, 1, 1], [], []>} : vector<2x64xbf16>, vector<64x32xbf16>, vector<2x32xf32> -> vector<2x32xf32>
    %42 = vector.extract_strided_slice %1 {offsets = [1, 0], sizes = [1, 32], strides = [1, 1]} : vector<16x128xf32> to vector<1x32xf32>
    %43 = vector.broadcast %42 : vector<1x32xf32> to vector<2x32xf32>
    %44 = arith.addf %41, %43 : vector<2x32xf32>
    %cst_18 = arith.constant 0.000000e+00 : f32
    %45 = vector.broadcast %cst_18 : f32 to vector<2x32xf32>
    %46 = arith.maximumf %44, %45 : vector<2x32xf32>
    %47 = arith.truncf %11 : vector<16x32xf32> to vector<16x32xbf16>
    %c240 = arith.constant 240 : index
    %c0_19 = arith.constant 0 : index
    %48 = vector.load %arg2[%c240, %c0_19] : memref<480x128xbf16, #tpu.memory_space<vmem>>, vector<32x96xbf16>
    %cst_20 = arith.constant dense<0.000000e+00> : vector<16x96xf32>
    %49 = tpu.matmul %47, %48, %cst_20 {dimension_numbers = #tpu.dot_dimension_numbers<[1], [0], [0], [1], [0, 0, 1, 1], [], []>} : vector<16x32xbf16>, vector<32x96xbf16>, vector<16x96xf32> -> vector<16x96xf32>
    %50 = vector.extract_strided_slice %1 {offsets = [2, 0], sizes = [1, 96], strides = [1, 1]} : vector<16x128xf32> to vector<1x96xf32>
    %51 = vector.broadcast %50 : vector<1x96xf32> to vector<16x96xf32>
    %52 = arith.addf %49, %51 : vector<16x96xf32>
    %53 = vector.shape_cast %52 : vector<16x96xf32> to vector<2x8x96xf32>
    %54 = arith.truncf %34 : vector<2x16x32xf32> to vector<2x16x32xbf16>
    %55 = vector.shape_cast %54 : vector<2x16x32xbf16> to vector<32x32xbf16>
    %c272 = arith.constant 272 : index
    %c0_21 = arith.constant 0 : index
    %56 = vector.load %arg2[%c272, %c0_21] : memref<480x128xbf16, #tpu.memory_space<vmem>>, vector<32x96xbf16>
    %cst_22 = arith.constant dense<0.000000e+00> : vector<32x96xf32>
    %57 = tpu.matmul %55, %56, %cst_22 {dimension_numbers = #tpu.dot_dimension_numbers<[1], [0], [0], [1], [0, 0, 1, 1], [], []>} : vector<32x32xbf16>, vector<32x96xbf16>, vector<32x96xf32> -> vector<32x96xf32>
    %58 = vector.extract_strided_slice %1 {offsets = [3, 0], sizes = [1, 96], strides = [1, 1]} : vector<16x128xf32> to vector<1x96xf32>
    %59 = vector.broadcast %58 : vector<1x96xf32> to vector<32x96xf32>
    %60 = arith.addf %57, %59 : vector<32x96xf32>
    %61 = vector.shape_cast %60 : vector<32x96xf32> to vector<2x16x96xf32>
    %62 = vector.extract_strided_slice %61 {offsets = [0, 0, 0], sizes = [2, 16, 32], strides = [1, 1, 1]} : vector<2x16x96xf32> to vector<2x16x32xf32>
    %63 = vector.extract_strided_slice %62 {offsets = [0, 0, 0], sizes = [2, 16, 8], strides = [1, 1, 1]} : vector<2x16x32xf32> to vector<2x16x8xf32>
    %64 = vector.extract_strided_slice %62 {offsets = [0, 0, 8], sizes = [2, 16, 8], strides = [1, 1, 1]} : vector<2x16x32xf32> to vector<2x16x8xf32>
    %65 = vector.extract_strided_slice %62 {offsets = [0, 0, 16], sizes = [2, 16, 8], strides = [1, 1, 1]} : vector<2x16x32xf32> to vector<2x16x8xf32>
    %66 = vector.extract_strided_slice %62 {offsets = [0, 0, 24], sizes = [2, 16, 8], strides = [1, 1, 1]} : vector<2x16x32xf32> to vector<2x16x8xf32>
    %67 = tpu.concatenate %63, %64, %65, %66 in 0 : vector<2x16x8xf32>, vector<2x16x8xf32>, vector<2x16x8xf32>, vector<2x16x8xf32> -> vector<8x16x8xf32>
    %68 = vector.extract_strided_slice %53 {offsets = [0, 0, 0], sizes = [2, 8, 32], strides = [1, 1, 1]} : vector<2x8x96xf32> to vector<2x8x32xf32>
    %69 = vector.extract_strided_slice %68 {offsets = [0, 0, 0], sizes = [2, 8, 8], strides = [1, 1, 1]} : vector<2x8x32xf32> to vector<2x8x8xf32>
    %70 = vector.extract_strided_slice %68 {offsets = [0, 0, 8], sizes = [2, 8, 8], strides = [1, 1, 1]} : vector<2x8x32xf32> to vector<2x8x8xf32>
    %71 = vector.extract_strided_slice %68 {offsets = [0, 0, 16], sizes = [2, 8, 8], strides = [1, 1, 1]} : vector<2x8x32xf32> to vector<2x8x8xf32>
    %72 = vector.extract_strided_slice %68 {offsets = [0, 0, 24], sizes = [2, 8, 8], strides = [1, 1, 1]} : vector<2x8x32xf32> to vector<2x8x8xf32>
    %73 = tpu.concatenate %69, %70, %71, %72 in 0 : vector<2x8x8xf32>, vector<2x8x8xf32>, vector<2x8x8xf32>, vector<2x8x8xf32> -> vector<8x8x8xf32>
    %74 = vector.extract_strided_slice %53 {offsets = [0, 0, 32], sizes = [2, 8, 32], strides = [1, 1, 1]} : vector<2x8x96xf32> to vector<2x8x32xf32>
    %75 = vector.extract_strided_slice %74 {offsets = [0, 0, 0], sizes = [2, 8, 8], strides = [1, 1, 1]} : vector<2x8x32xf32> to vector<2x8x8xf32>
    %76 = vector.extract_strided_slice %74 {offsets = [0, 0, 8], sizes = [2, 8, 8], strides = [1, 1, 1]} : vector<2x8x32xf32> to vector<2x8x8xf32>
    %77 = vector.extract_strided_slice %74 {offsets = [0, 0, 16], sizes = [2, 8, 8], strides = [1, 1, 1]} : vector<2x8x32xf32> to vector<2x8x8xf32>
    %78 = vector.extract_strided_slice %74 {offsets = [0, 0, 24], sizes = [2, 8, 8], strides = [1, 1, 1]} : vector<2x8x32xf32> to vector<2x8x8xf32>
    %79 = tpu.concatenate %75, %76, %77, %78 in 0 : vector<2x8x8xf32>, vector<2x8x8xf32>, vector<2x8x8xf32>, vector<2x8x8xf32> -> vector<8x8x8xf32>
    "tpu.trace_start"() <{level = 10 : i32, message = "bqd,bkd->bqk"}> : () -> ()
    %cst_23 = arith.constant dense<0.000000e+00> : vector<8x16x8xf32>
    %80 = tpu.matmul %67, %73, %cst_23 {dimension_numbers = #tpu.dot_dimension_numbers<[2], [2], [1], [1], [0, 0, 0, 1, 1, 1], [0], [0]>} : vector<8x16x8xf32>, vector<8x8x8xf32>, vector<8x16x8xf32> -> vector<8x16x8xf32>
    "tpu.trace_stop"() : () -> ()
    %cst_24 = arith.constant dense<0xFF800000> : vector<8x16xf32>
    %81 = vector.multi_reduction <maximumf>, %80, %cst_24 [2] : vector<8x16x8xf32> to vector<8x16xf32>
    %cst_25 = arith.constant 0xFF800000 : f32
    %82 = vector.broadcast %cst_25 : f32 to vector<8x16xf32>
    %83 = arith.maximumf %82, %81 : vector<8x16xf32>
    %84 = vector.shape_cast %83 : vector<8x16xf32> to vector<8x16x1xf32>
    %85 = vector.broadcast %84 : vector<8x16x1xf32> to vector<8x16x8xf32>
    %86 = arith.subf %80, %85 : vector<8x16x8xf32>
    %87 = math.exp %86 : vector<8x16x8xf32>
    %cst_26 = arith.constant dense<0.000000e+00> : vector<8x16xf32>
    %88 = vector.multi_reduction <add>, %87, %cst_26 [2] : vector<8x16x8xf32> to vector<8x16xf32>
    %89 = vector.shape_cast %88 : vector<8x16xf32> to vector<8x16x1xf32>
    %90 = vector.broadcast %89 : vector<8x16x1xf32> to vector<8x16x8xf32>
    %91 = arith.divf %87, %90 : vector<8x16x8xf32>
    %cst_27 = arith.constant dense<0.000000e+00> : vector<8x8xf32>
    %92 = vector.multi_reduction <add>, %91, %cst_27 [1] : vector<8x16x8xf32> to vector<8x8xf32>
    %93 = vector.shape_cast %92 : vector<8x8xf32> to vector<8x1x8xf32>
    %cst_28 = arith.constant 1.600000e+01 : f32
    %94 = vector.broadcast %cst_28 : f32 to vector<8x1x8xf32>
    %95 = arith.divf %93, %94 : vector<8x1x8xf32>
    "tpu.trace_start"() <{level = 10 : i32, message = "bqk,bkd->bqd"}> : () -> ()
    %cst_29 = arith.constant dense<0.000000e+00> : vector<8x1x8xf32>
    %96 = tpu.matmul %95, %79, %cst_29 {dimension_numbers = #tpu.dot_dimension_numbers<[2], [1], [1], [2], [0, 0, 0, 1, 1, 2], [0], [0]>} : vector<8x1x8xf32>, vector<8x8x8xf32>, vector<8x1x8xf32> -> vector<8x1x8xf32>
    "tpu.trace_stop"() : () -> ()
    %97 = vector.shape_cast %96 : vector<8x1x8xf32> to vector<8x8xf32>
    %98 = vector.extract_strided_slice %97 {offsets = [0, 0], sizes = [2, 8], strides = [1, 1]} : vector<8x8xf32> to vector<2x8xf32>
    %99 = vector.extract_strided_slice %97 {offsets = [2, 0], sizes = [2, 8], strides = [1, 1]} : vector<8x8xf32> to vector<2x8xf32>
    %100 = vector.extract_strided_slice %97 {offsets = [4, 0], sizes = [2, 8], strides = [1, 1]} : vector<8x8xf32> to vector<2x8xf32>
    %101 = vector.extract_strided_slice %97 {offsets = [6, 0], sizes = [2, 8], strides = [1, 1]} : vector<8x8xf32> to vector<2x8xf32>
    %102 = tpu.concatenate %98, %99, %100, %101 in 1 : vector<2x8xf32>, vector<2x8xf32>, vector<2x8xf32>, vector<2x8xf32> -> vector<2x32xf32>
    %103 = vector.extract_strided_slice %53 {offsets = [0, 0, 64], sizes = [2, 8, 32], strides = [1, 1, 1]} : vector<2x8x96xf32> to vector<2x8x32xf32>
    %104 = vector.extract_strided_slice %103 {offsets = [0, 0, 0], sizes = [2, 8, 8], strides = [1, 1, 1]} : vector<2x8x32xf32> to vector<2x8x8xf32>
    %105 = vector.extract_strided_slice %103 {offsets = [0, 0, 8], sizes = [2, 8, 8], strides = [1, 1, 1]} : vector<2x8x32xf32> to vector<2x8x8xf32>
    %106 = vector.extract_strided_slice %103 {offsets = [0, 0, 16], sizes = [2, 8, 8], strides = [1, 1, 1]} : vector<2x8x32xf32> to vector<2x8x8xf32>
    %107 = vector.extract_strided_slice %103 {offsets = [0, 0, 24], sizes = [2, 8, 8], strides = [1, 1, 1]} : vector<2x8x32xf32> to vector<2x8x8xf32>
    %108 = tpu.concatenate %104, %105, %106, %107 in 0 : vector<2x8x8xf32>, vector<2x8x8xf32>, vector<2x8x8xf32>, vector<2x8x8xf32> -> vector<8x8x8xf32>
    %109 = vector.extract_strided_slice %61 {offsets = [0, 0, 32], sizes = [2, 16, 32], strides = [1, 1, 1]} : vector<2x16x96xf32> to vector<2x16x32xf32>
    %110 = vector.extract_strided_slice %109 {offsets = [0, 0, 0], sizes = [2, 16, 8], strides = [1, 1, 1]} : vector<2x16x32xf32> to vector<2x16x8xf32>
    %111 = vector.extract_strided_slice %109 {offsets = [0, 0, 8], sizes = [2, 16, 8], strides = [1, 1, 1]} : vector<2x16x32xf32> to vector<2x16x8xf32>
    %112 = vector.extract_strided_slice %109 {offsets = [0, 0, 16], sizes = [2, 16, 8], strides = [1, 1, 1]} : vector<2x16x32xf32> to vector<2x16x8xf32>
    %113 = vector.extract_strided_slice %109 {offsets = [0, 0, 24], sizes = [2, 16, 8], strides = [1, 1, 1]} : vector<2x16x32xf32> to vector<2x16x8xf32>
    %114 = tpu.concatenate %110, %111, %112, %113 in 0 : vector<2x16x8xf32>, vector<2x16x8xf32>, vector<2x16x8xf32>, vector<2x16x8xf32> -> vector<8x16x8xf32>
    %115 = vector.extract_strided_slice %61 {offsets = [0, 0, 64], sizes = [2, 16, 32], strides = [1, 1, 1]} : vector<2x16x96xf32> to vector<2x16x32xf32>
    %116 = vector.extract_strided_slice %115 {offsets = [0, 0, 0], sizes = [2, 16, 8], strides = [1, 1, 1]} : vector<2x16x32xf32> to vector<2x16x8xf32>
    %117 = vector.extract_strided_slice %115 {offsets = [0, 0, 8], sizes = [2, 16, 8], strides = [1, 1, 1]} : vector<2x16x32xf32> to vector<2x16x8xf32>
    %118 = vector.extract_strided_slice %115 {offsets = [0, 0, 16], sizes = [2, 16, 8], strides = [1, 1, 1]} : vector<2x16x32xf32> to vector<2x16x8xf32>
    %119 = vector.extract_strided_slice %115 {offsets = [0, 0, 24], sizes = [2, 16, 8], strides = [1, 1, 1]} : vector<2x16x32xf32> to vector<2x16x8xf32>
    %120 = tpu.concatenate %116, %117, %118, %119 in 0 : vector<2x16x8xf32>, vector<2x16x8xf32>, vector<2x16x8xf32>, vector<2x16x8xf32> -> vector<8x16x8xf32>
    "tpu.trace_start"() <{level = 10 : i32, message = "bqd,bkd->bqk"}> : () -> ()
    %cst_30 = arith.constant dense<0.000000e+00> : vector<8x8x16xf32>
    %121 = tpu.matmul %108, %114, %cst_30 {dimension_numbers = #tpu.dot_dimension_numbers<[2], [2], [1], [1], [0, 0, 0, 1, 1, 1], [0], [0]>} : vector<8x8x8xf32>, vector<8x16x8xf32>, vector<8x8x16xf32> -> vector<8x8x16xf32>
    "tpu.trace_stop"() : () -> ()
    %cst_31 = arith.constant dense<0xFF800000> : vector<8x8xf32>
    %122 = vector.multi_reduction <maximumf>, %121, %cst_31 [2] : vector<8x8x16xf32> to vector<8x8xf32>
    %cst_32 = arith.constant 0xFF800000 : f32
    %123 = vector.broadcast %cst_32 : f32 to vector<8x8xf32>
    %124 = arith.maximumf %123, %122 : vector<8x8xf32>
    %125 = vector.shape_cast %124 : vector<8x8xf32> to vector<8x8x1xf32>
    %126 = vector.broadcast %125 : vector<8x8x1xf32> to vector<8x8x16xf32>
    %127 = arith.subf %121, %126 : vector<8x8x16xf32>
    %128 = math.exp %127 : vector<8x8x16xf32>
    %cst_33 = arith.constant dense<0.000000e+00> : vector<8x8xf32>
    %129 = vector.multi_reduction <add>, %128, %cst_33 [2] : vector<8x8x16xf32> to vector<8x8xf32>
    %130 = vector.shape_cast %129 : vector<8x8xf32> to vector<8x8x1xf32>
    %131 = vector.broadcast %130 : vector<8x8x1xf32> to vector<8x8x16xf32>
    %132 = arith.divf %128, %131 : vector<8x8x16xf32>
    %cst_34 = arith.constant dense<0.000000e+00> : vector<8x16xf32>
    %133 = vector.multi_reduction <add>, %132, %cst_34 [1] : vector<8x8x16xf32> to vector<8x16xf32>
    %134 = vector.shape_cast %133 : vector<8x16xf32> to vector<8x1x16xf32>
    %cst_35 = arith.constant 8.000000e+00 : f32
    %135 = vector.broadcast %cst_35 : f32 to vector<8x1x16xf32>
    %136 = arith.divf %134, %135 : vector<8x1x16xf32>
    "tpu.trace_start"() <{level = 10 : i32, message = "bqk,bkd->bqd"}> : () -> ()
    %cst_36 = arith.constant dense<0.000000e+00> : vector<8x1x8xf32>
    %137 = tpu.matmul %136, %120, %cst_36 {dimension_numbers = #tpu.dot_dimension_numbers<[2], [1], [1], [2], [0, 0, 0, 1, 1, 2], [0], [0]>} : vector<8x1x16xf32>, vector<8x16x8xf32>, vector<8x1x8xf32> -> vector<8x1x8xf32>
    "tpu.trace_stop"() : () -> ()
    %138 = vector.shape_cast %137 : vector<8x1x8xf32> to vector<8x8xf32>
    %139 = vector.extract_strided_slice %138 {offsets = [0, 0], sizes = [2, 8], strides = [1, 1]} : vector<8x8xf32> to vector<2x8xf32>
    %140 = vector.extract_strided_slice %138 {offsets = [2, 0], sizes = [2, 8], strides = [1, 1]} : vector<8x8xf32> to vector<2x8xf32>
    %141 = vector.extract_strided_slice %138 {offsets = [4, 0], sizes = [2, 8], strides = [1, 1]} : vector<8x8xf32> to vector<2x8xf32>
    %142 = vector.extract_strided_slice %138 {offsets = [6, 0], sizes = [2, 8], strides = [1, 1]} : vector<8x8xf32> to vector<2x8xf32>
    %143 = tpu.concatenate %139, %140, %141, %142 in 1 : vector<2x8xf32>, vector<2x8xf32>, vector<2x8xf32>, vector<2x8xf32> -> vector<2x32xf32>
    %144 = tpu.concatenate %12, %143, %46, %102 in 1 : vector<2x32xf32>, vector<2x32xf32>, vector<2x32xf32>, vector<2x32xf32> -> vector<2x128xf32>
    %145 = arith.truncf %144 : vector<2x128xf32> to vector<2x128xbf16>
    %c304 = arith.constant 304 : index
    %c0_37 = arith.constant 0 : index
    %146 = vector.load %arg2[%c304, %c0_37] : memref<480x128xbf16, #tpu.memory_space<vmem>>, vector<128x32xbf16>
    %cst_38 = arith.constant dense<0.000000e+00> : vector<2x32xf32>
    %147 = tpu.matmul %145, %146, %cst_38 {dimension_numbers = #tpu.dot_dimension_numbers<[1], [0], [0], [1], [0, 0, 1, 1], [], []>} : vector<2x128xbf16>, vector<128x32xbf16>, vector<2x32xf32> -> vector<2x32xf32>
    %148 = vector.extract_strided_slice %1 {offsets = [4, 0], sizes = [1, 32], strides = [1, 1]} : vector<16x128xf32> to vector<1x32xf32>
    %149 = vector.broadcast %148 : vector<1x32xf32> to vector<2x32xf32>
    %150 = arith.addf %147, %149 : vector<2x32xf32>
    %cst_39 = arith.constant 0.000000e+00 : f32
    %151 = vector.broadcast %cst_39 : f32 to vector<2x32xf32>
    %152 = arith.maximumf %150, %151 : vector<2x32xf32>
    %153 = arith.truncf %152 : vector<2x32xf32> to vector<2x32xbf16>
    %c432 = arith.constant 432 : index
    %c0_40 = arith.constant 0 : index
    %154 = vector.load %arg2[%c432, %c0_40] : memref<480x128xbf16, #tpu.memory_space<vmem>>, vector<32x128xbf16>
    %cst_41 = arith.constant dense<0.000000e+00> : vector<2x128xf32>
    %155 = tpu.matmul %153, %154, %cst_41 {dimension_numbers = #tpu.dot_dimension_numbers<[1], [0], [0], [1], [0, 0, 1, 1], [], []>} : vector<2x32xbf16>, vector<32x128xbf16>, vector<2x128xf32> -> vector<2x128xf32>
    %156 = vector.extract_strided_slice %1 {offsets = [5, 0], sizes = [1, 128], strides = [1, 1]} : vector<16x128xf32> to vector<1x128xf32>
    %157 = vector.broadcast %156 : vector<1x128xf32> to vector<2x128xf32>
    %158 = arith.addf %155, %157 : vector<2x128xf32>
    %c0_42 = arith.constant 0 : index
    %c0_43 = arith.constant 0 : index
    %159 = vector.load %arg3[%c0_42, %c0_43] : memref<2x128xf32, #tpu.memory_space<vmem>>, vector<2x128xf32>
    tpu.vector_store %arg3[%c0_42, %c0_43], %158 {strides = array<i32>} : memref<2x128xf32, #tpu.memory_space<vmem>>, vector<2x128xf32>,
    return
  }
}

</mosaic_0001>

<llo_original>
// kernel: fuse_forward.1
$region0: #{fuse_forward.1}
  #allocation0 [shape = 'u32[]', space=smem, size = 0x4, offset = 0x4, fixed_abs, tag = 'smem constant byte address 0x4 - core index']
  #allocation1 [shape = 'u32[144,128]{1,0:T(1,128)}', space=vmem, size = 0x12000, scoped, tag = 'internal scratch']
  %s0 = inlined_call_operand.vmem [shape: bf16[24,32], index: 0, kind: input, shape index: {}]
  %s1 = inlined_call_operand.vmem [shape: bf16[2,64,64], index: 1, kind: input, shape index: {}]
  %s2 = inlined_call_operand.vmem [shape: bf16[480,128], index: 2, kind: input, shape index: {}]
  %s3 = inlined_call_operand.vmem [shape: f32[2,128], index: 3, kind: output, shape index: {}]
  %s4 = sld [smem:[#allocation0]]
  $region22: #{fuse_forward.1} parent=0
    _
  %s6 = ssub.s32 1, %s4
  %s7 = scalar_select 0, %s6, %s4
  // Predicated region
  $region2: #{fuse_forward.1} parent=0 // pred_check
    _
  $region3: #{fuse_forward.1} parent=0 // pred_check_branch
    %9 = sbr.rel (0) target = $region5
  $region4: #{fuse_forward.1} parent=0 // pred_region
    _
  $region5: #{fuse_forward.1} parent=0 // pred_fallthru
    _
  // Predicated region
  $region6: #{fuse_forward.1} parent=0 // pred_check
    _
  $region7: #{fuse_forward.1} parent=0 // pred_check_branch
    %11 = sbr.rel (0) target = $region9
  $region8: #{fuse_forward.1} parent=0 // pred_region
    _
  $region9: #{fuse_forward.1} parent=0 // pred_fallthru
    _
  // Predicated region
  $region10: #{fuse_forward.1} parent=0 // pred_check
    _
  $region11: #{fuse_forward.1} parent=0 // pred_check_branch
    %13 = sbr.rel (0) target = $region13
  $region12: #{fuse_forward.1} parent=0 // pred_region
    _
  $region13: #{fuse_forward.1} parent=0 // pred_fallthru
    _
  %v15 = vld [vmem:[%s2 + $0xe8] sm:$0xf]
  %v16 = vunpack.c.l.bf16 %v15
  %v17 = vld [vmem:[%s0] sm:$0xf]
  %v18 = vld [vmem:[%s0 + $0x4] sm:$0xf]
  %v19 = vld [vmem:[%s0 + $0x8] sm:$0xf]
  %v20 = vld [vmem:[%s1] sm:$0xf]
  %v21 = vld [vmem:[%s1 + $0x4] sm:$0xf]
  %v22 = vld [vmem:[%s1 + $0x8] sm:$0xf]
  %v23 = vld [vmem:[%s1 + $0xc] sm:$0xf]
  %v24 = vld [vmem:[%s1 + $0x10] sm:$0xf]
  %v25 = vld [vmem:[%s1 + $0x14] sm:$0xf]
  %v26 = vld [vmem:[%s1 + $0x18] sm:$0xf]
  %v27 = vld [vmem:[%s1 + $0x1c] sm:$0xf]
  %v28 = vld [vmem:[%s1 + $0x20] sm:$0xf]
  %v29 = vld [vmem:[%s1 + $0x24] sm:$0xf]
  %v30 = vld [vmem:[%s1 + $0x28] sm:$0xf]
  %v31 = vld [vmem:[%s1 + $0x2c] sm:$0xf]
  %v32 = vld [vmem:[%s1 + $0x30] sm:$0xf]
  %v33 = vld [vmem:[%s1 + $0x34] sm:$0xf]
  %v34 = vld [vmem:[%s1 + $0x38] sm:$0xf]
  %v35 = vld [vmem:[%s1 + $0x3c] sm:$0xf]
  %v36 = vld [vmem:[%s2] sm:$0xf]
  %v37 = vld [vmem:[%s2 + $0x4] sm:$0xf]
  %v38 = vld [vmem:[%s2 + $0x8] sm:$0xf]
  %v39 = vld [vmem:[%s2 + $0xc] sm:$0xf]
  %v40 = vlaneseq
  %v41 = vshrl.u32 %v40, 7
  %v42 = vsub.s32 0, %v41
  %v43 = vrot.slane %v16, %v42
  %v47 = vunpack.c.l.b16 %v17
  %v48 = vunpack.c.l.b16 %v18
  %v49 = vunpack.c.l.b16 %v19
  %v50 = vpack.c.b16 %v48, %v47
  %v51 = vpack.c.b16 %v49, %v49
  %v56 = vunpack.c.l.b16 %v36
  %v57 = vunpack.c.l.b16 %v37
  %v58 = vunpack.c.l.b16 %v38
  %v59 = vunpack.c.l.b16 %v39
  %v60 = vpack.c.b16 %v57, %v56
  %v61 = vpack.c.b16 %v59, %v58
  %vm64 = vcmask 261120
  %v66 = vsel %vm64, %v50, 0
  %v69 = vsel %vm64, %v51, 0
  %71 = vmatprep.subr.bf16.mxu0 0
  %72 = vmatpush1.bf16.msra.mxu0 0
  %73 = vmatprep.subr.bf16.mxu0 0
  %74 = vmatpush1.bf16.msra.mxu0 0
  %75 = vmatprep.subr.bf16.mxu0 0
  %76 = vmatpush1.bf16.msra.mxu0 0
  %77 = vmatprep.subr.bf16.mxu0 0
  %78 = vmatpush1.bf16.msra.mxu0 0
  %79 = vmatprep.subr.bf16.mxu0 0
  %80 = vmatpush1.bf16.msra.mxu0 0
  %81 = vmatprep.subr.bf16.mxu0 0
  %82 = vmatpush1.bf16.msra.mxu0 0
  %83 = vmatprep.subr.bf16.mxu0 0
  %84 = vmatpush1.bf16.msra.mxu0 %v61
  %85 = vmatprep.subr.bf16.mxu0 0
  %86 = vmatpush1.bf16.msra.mxu0 %v60
  %87 = vmatprep.subr.bf16.mxu0 0
  %88 = vmatpush2.bf16.msra.mxu0 0
  %89 = vmatprep.subr.bf16.mxu0 0
  %90 = vmatpush2.bf16.msra.mxu0 0
  %91 = vmatprep.subr.bf16.mxu0 0
  %92 = vmatpush2.bf16.msra.mxu0 0
  %93 = vmatprep.subr.bf16.mxu0 0
  %94 = vmatpush2.bf16.msra.mxu0 0
  %95 = vmatprep.subr.bf16.mxu0 0
  %96 = vmatpush2.bf16.msra.mxu0 0
  %97 = vmatprep.subr.bf16.mxu0 0
  %98 = vmatpush2.bf16.msra.mxu0 0
  %99 = vmatprep.subr.bf16.mxu0 0
  %100 = vmatpush2.bf16.msra.mxu0 0
  %101 = vmatprep.subr.bf16.mxu0 0
  %102 = vmatpush2.bf16.msra.mxu0 0
  %103 = vmatprep.mubr.bf16.mxu0 0
  %104 = vmatmul.mubr.bf16.gmra.mxu0 %v66
  %v105 = vpop.f32.mrf.mxu0
  %v106 = vadd.f32 %v43, %v105
  %v107 = vpop.f32.mrf.mxu0
  %v108 = vpop.f32.mrf.mxu0
  %v109 = vadd.f32 %v43, %v108
  %v110 = vpop.f32.mrf.mxu0
  %111 = vmatprep.mubr.bf16.mxu0 0
  %112 = vmatmul.mubr.bf16.gmra.mxu0 %v69
  %v113 = vpop.f32.mrf.mxu0
  %v114 = vadd.f32 %v43, %v113
  %v115 = vpop.f32.mrf.mxu0
  %v116 = vpop.f32.mrf.mxu0
  %v117 = vpop.f32.mrf.mxu0
  %118 = vdwg.mxu0
  %v119 = vmax.f32 %v106, 0.0
  %v120 = vmax.f32 %v109, 0.0
  %v121 = vmax.f32 %v114, 0.0
  %v122 = vld [vmem:[%s2 + $0x10] sm:$0xf]
  %v123 = vld [vmem:[%s2 + $0x14] sm:$0xf]
  %v124 = vld [vmem:[%s2 + $0x18] sm:$0xf]
  %v125 = vld [vmem:[%s2 + $0x1c] sm:$0xf]
  %v126 = vld [vmem:[%s2 + $0x20] sm:$0xf]
  %v127 = vld [vmem:[%s2 + $0x24] sm:$0xf]
  %v128 = vld [vmem:[%s2 + $0x28] sm:$0xf]
  %v129 = vld [vmem:[%s2 + $0x2c] sm:$0xf]
  %v146 = vunpack.c.l.b16 %v20
  %v147 = vunpack.c.l.b16 %v21
  %v148 = vunpack.c.l.b16 %v22
  %v149 = vunpack.c.l.b16 %v23
  %v150 = vunpack.c.l.b16 %v24
  %v151 = vunpack.c.l.b16 %v25
  %v152 = vunpack.c.l.b16 %v26
  %v153 = vunpack.c.l.b16 %v27
  %v154 = vunpack.c.l.b16 %v28
  %v155 = vunpack.c.l.b16 %v29
  %v156 = vunpack.c.l.b16 %v30
  %v157 = vunpack.c.l.b16 %v31
  %v158 = vunpack.c.l.b16 %v32
  %v159 = vunpack.c.l.b16 %v33
  %v160 = vunpack.c.l.b16 %v34
  %v161 = vunpack.c.l.b16 %v35
  %v162 = vpack.c.b16 %v147, %v146
  %v163 = vpack.c.b16 %v149, %v148
  %v164 = vpack.c.b16 %v151, %v150
  %v165 = vpack.c.b16 %v153, %v152
  %v166 = vpack.c.b16 %v155, %v154
  %v167 = vpack.c.b16 %v157, %v156
  %v168 = vpack.c.b16 %v159, %v158
  %v169 = vpack.c.b16 %v161, %v160
  %v178 = vunpack.c.l.b16 %v122
  %v179 = vunpack.c.l.b16 %v123
  %v180 = vunpack.c.l.b16 %v124
  %v181 = vunpack.c.l.b16 %v125
  %v182 = vunpack.c.l.b16 %v126
  %v183 = vunpack.c.l.b16 %v127
  %v184 = vunpack.c.l.b16 %v128
  %v185 = vunpack.c.l.b16 %v129
  %v186 = vpack.c.b16 %v179, %v178
  %v187 = vpack.c.b16 %v181, %v180
  %v188 = vpack.c.b16 %v183, %v182
  %v189 = vpack.c.b16 %v185, %v184
  %vm194 = vcmask 523264
  %v196 = vsel %vm194, %v162, 0
  %v199 = vsel %vm194, %v163, 0
  %v202 = vsel %vm194, %v164, 0
  %v205 = vsel %vm194, %v165, 0
  %v208 = vsel %vm194, %v166, 0
  %v211 = vsel %vm194, %v167, 0
  %v214 = vsel %vm194, %v168, 0
  %v217 = vsel %vm194, %v169, 0
  %219 = vmatprep.subr.bf16.mxu0 0
  %220 = vmatpush1.bf16.msra.mxu0 0
  %221 = vmatprep.subr.bf16.mxu0 0
  %222 = vmatpush1.bf16.msra.mxu0 0
  %223 = vmatprep.subr.bf16.mxu0 0
  %224 = vmatpush1.bf16.msra.mxu0 0
  %225 = vmatprep.subr.bf16.mxu0 0
  %226 = vmatpush1.bf16.msra.mxu0 0
  %227 = vmatprep.subr.bf16.mxu0 0
  %228 = vmatpush1.bf16.msra.mxu0 %v189
  %229 = vmatprep.subr.bf16.mxu0 0
  %230 = vmatpush1.bf16.msra.mxu0 %v188
  %231 = vmatprep.subr.bf16.mxu0 0
  %232 = vmatpush1.bf16.msra.mxu0 %v187
  %233 = vmatprep.subr.bf16.mxu0 0
  %234 = vmatpush1.bf16.msra.mxu0 %v186
  %235 = vmatprep.subr.bf16.mxu0 0
  %236 = vmatpush2.bf16.msra.mxu0 0
  %237 = vmatprep.subr.bf16.mxu0 0
  %238 = vmatpush2.bf16.msra.mxu0 0
  %239 = vmatprep.subr.bf16.mxu0 0
  %240 = vmatpush2.bf16.msra.mxu0 0
  %241 = vmatprep.subr.bf16.mxu0 0
  %242 = vmatpush2.bf16.msra.mxu0 0
  %243 = vmatprep.subr.bf16.mxu0 0
  %244 = vmatpush2.bf16.msra.mxu0 0
  %245 = vmatprep.subr.bf16.mxu0 0
  %246 = vmatpush2.bf16.msra.mxu0 0
  %247 = vmatprep.subr.bf16.mxu0 0
  %248 = vmatpush2.bf16.msra.mxu0 0
  %249 = vmatprep.subr.bf16.mxu0 0
  %250 = vmatpush2.bf16.msra.mxu0 0
  %251 = vmatprep.mubr.bf16.mxu0 0
  %252 = vmatmul.mubr.bf16.gmra.mxu0 %v196
  %v253 = vpop.f32.mrf.mxu0
  %v254 = vadd.f32 0.0, %v253
  %v255 = vpop.f32.mrf.mxu0
  %v256 = vpop.f32.mrf.mxu0
  %v257 = vadd.f32 0.0, %v256
  %v258 = vpop.f32.mrf.mxu0
  %259 = vmatprep.mubr.bf16.mxu0 0
  %260 = vmatmul.mubr.bf16.gmra.mxu0 %v199
  %v261 = vpop.f32.mrf.mxu0
  %v262 = vadd.f32 0.0, %v261
  %v263 = vpop.f32.mrf.mxu0
  %v264 = vpop.f32.mrf.mxu0
  %v265 = vadd.f32 0.0, %v264
  %v266 = vpop.f32.mrf.mxu0
  %267 = vmatprep.mubr.bf16.mxu0 0
  %268 = vmatmul.mubr.bf16.gmra.mxu0 %v202
  %v269 = vpop.f32.mrf.mxu0
  %v270 = vadd.f32 0.0, %v269
  %v271 = vpop.f32.mrf.mxu0
  %v272 = vpop.f32.mrf.mxu0
  %v273 = vadd.f32 0.0, %v272
  %v274 = vpop.f32.mrf.mxu0
  %275 = vmatprep.mubr.bf16.mxu0 0
  %276 = vmatmul.mubr.bf16.gmra.mxu0 %v205
  %v277 = vpop.f32.mrf.mxu0
  %v278 = vadd.f32 0.0, %v277
  %v279 = vpop.f32.mrf.mxu0
  %v280 = vpop.f32.mrf.mxu0
  %v281 = vadd.f32 0.0, %v280
  %v282 = vpop.f32.mrf.mxu0
  %283 = vmatprep.mubr.bf16.mxu0 0
  %284 = vmatmul.mubr.bf16.gmra.mxu0 %v208
  %v285 = vpop.f32.mrf.mxu0
  %v286 = vadd.f32 0.0, %v285
  %v287 = vpop.f32.mrf.mxu0
  %v288 = vpop.f32.mrf.mxu0
  %v289 = vadd.f32 0.0, %v288
  %v290 = vpop.f32.mrf.mxu0
  %291 = vmatprep.mubr.bf16.mxu0 0
  %292 = vmatmul.mubr.bf16.gmra.mxu0 %v211
  %v293 = vpop.f32.mrf.mxu0
  %v294 = vadd.f32 0.0, %v293
  %v295 = vpop.f32.mrf.mxu0
  %v296 = vpop.f32.mrf.mxu0
  %v297 = vadd.f32 0.0, %v296
  %v298 = vpop.f32.mrf.mxu0
  %299 = vmatprep.mubr.bf16.mxu0 0
  %300 = vmatmul.mubr.bf16.gmra.mxu0 %v214
  %v301 = vpop.f32.mrf.mxu0
  %v302 = vadd.f32 0.0, %v301
  %v303 = vpop.f32.mrf.mxu0
  %v304 = vpop.f32.mrf.mxu0
  %v305 = vadd.f32 0.0, %v304
  %v306 = vpop.f32.mrf.mxu0
  %307 = vmatprep.mubr.bf16.mxu0 0
  %308 = vmatmul.mubr.bf16.gmra.mxu0 %v217
  %v309 = vpop.f32.mrf.mxu0
  %v310 = vadd.f32 0.0, %v309
  %v311 = vpop.f32.mrf.mxu0
  %v312 = vpop.f32.mrf.mxu0
  %v313 = vadd.f32 0.0, %v312
  %v314 = vpop.f32.mrf.mxu0
  %315 = vdwg.mxu0
  %316 = vxpose.xlu0.b32.start [1/16] %v254, 128
  %317 = vxpose.xlu0.b32.cont [2/16] %v257, 128
  %318 = vxpose.xlu0.b32.cont [3/16] %v262, 128
  %319 = vxpose.xlu0.b32.cont [4/16] %v265, 128
  %320 = vxpose.xlu0.b32.cont [5/16] %v270, 128
  %321 = vxpose.xlu0.b32.cont [6/16] %v273, 128
  %322 = vxpose.xlu0.b32.cont [7/16] %v278, 128
  %323 = vxpose.xlu0.b32.cont [8/16] %v281, 128
  %324 = vxpose.xlu0.b32.cont [9/16] 0.0, 128
  %325 = vxpose.xlu0.b32.cont [10/16] 0.0, 128
  %326 = vxpose.xlu0.b32.cont [11/16] 0.0, 128
  %327 = vxpose.xlu0.b32.cont [12/16] 0.0, 128
  %328 = vxpose.xlu0.b32.cont [13/16] 0.0, 128
  %329 = vxpose.xlu0.b32.cont [14/16] 0.0, 128
  %330 = vxpose.xlu0.b32.cont [15/16] 0.0, 128
  %331 = vxpose.xlu0.b32.end [16/16] 0.0, 128
  %v332 = vpop.trf.xlu0
  %v333 = vpop.trf.xlu0
  %v334 = vpop.trf.xlu0
  %v335 = vpop.trf.xlu0
  %v336 = vpop.trf.xlu0
  %v337 = vpop.trf.xlu0
  %v338 = vpop.trf.xlu0
  %v339 = vpop.trf.xlu0
  %v340 = vpop.trf.xlu0
  %v341 = vpop.trf.xlu0
  %v342 = vpop.trf.xlu0
  %v343 = vpop.trf.xlu0
  %v344 = vpop.trf.xlu0
  %v345 = vpop.trf.xlu0
  %v346 = vpop.trf.xlu0
  %v347 = vpop.trf.xlu0
  %348 = vxpose.xlu0.b32.start [1/16] %v286, 128
  %349 = vxpose.xlu0.b32.cont [2/16] %v289, 128
  %350 = vxpose.xlu0.b32.cont [3/16] %v294, 128
  %351 = vxpose.xlu0.b32.cont [4/16] %v297, 128
  %352 = vxpose.xlu0.b32.cont [5/16] %v302, 128
  %353 = vxpose.xlu0.b32.cont [6/16] %v305, 128
  %354 = vxpose.xlu0.b32.cont [7/16] %v310, 128
  %355 = vxpose.xlu0.b32.cont [8/16] %v313, 128
  %356 = vxpose.xlu0.b32.cont [9/16] 0.0, 128
  %357 = vxpose.xlu0.b32.cont [10/16] 0.0, 128
  %358 = vxpose.xlu0.b32.cont [11/16] 0.0, 128
  %359 = vxpose.xlu0.b32.cont [12/16] 0.0, 128
  %360 = vxpose.xlu0.b32.cont [13/16] 0.0, 128
  %361 = vxpose.xlu0.b32.cont [14/16] 0.0, 128
  %362 = vxpose.xlu0.b32.cont [15/16] 0.0, 128
  %363 = vxpose.xlu0.b32.end [16/16] 0.0, 128
  %v364 = vpop.trf.xlu0
  %v365 = vpop.trf.xlu0
  %v366 = vpop.trf.xlu0
  %v367 = vpop.trf.xlu0
  %v368 = vpop.trf.xlu0
  %v369 = vpop.trf.xlu0
  %v370 = vpop.trf.xlu0
  %v371 = vpop.trf.xlu0
  %v372 = vpop.trf.xlu0
  %v373 = vpop.trf.xlu0
  %v374 = vpop.trf.xlu0
  %v375 = vpop.trf.xlu0
  %v376 = vpop.trf.xlu0
  %v377 = vpop.trf.xlu0
  %v378 = vpop.trf.xlu0
  %v379 = vpop.trf.xlu0
  %v380 = vpack.c.bf16 %v333, %v332
  %v381 = vpack.c.bf16 %v365, %v364
  %v382 = vld [vmem:[%s2 + $0x30] sm:$0xf]
  %v383 = vld [vmem:[%s2 + $0x34] sm:$0xf]
  %v384 = vld [vmem:[%s2 + $0x38] sm:$0xf]
  %v385 = vld [vmem:[%s2 + $0x3c] sm:$0xf]
  %v386 = vld [vmem:[%s2 + $0x40] sm:$0xf]
  %v387 = vld [vmem:[%s2 + $0x44] sm:$0xf]
  %v388 = vld [vmem:[%s2 + $0x48] sm:$0xf]
  %v389 = vld [vmem:[%s2 + $0x4c] sm:$0xf]
  %v398 = vunpack.c.l.b16 %v382
  %v399 = vunpack.c.l.b16 %v383
  %v400 = vunpack.c.l.b16 %v384
  %v401 = vunpack.c.l.b16 %v385
  %v402 = vunpack.c.l.b16 %v386
  %v403 = vunpack.c.l.b16 %v387
  %v404 = vunpack.c.l.b16 %v388
  %v405 = vunpack.c.l.b16 %v389
  %v406 = vpack.c.b16 %v399, %v398
  %v407 = vpack.c.b16 %v401, %v400
  %v408 = vpack.c.b16 %v403, %v402
  %v409 = vpack.c.b16 %v405, %v404
  %v415 = vsel %vm194, %v380, 0
  %v418 = vsel %vm194, %v381, 0
  %420 = vmatprep.subr.bf16.mxu0 0
  %421 = vmatpush1.bf16.msra.mxu0 0
  %422 = vmatprep.subr.bf16.mxu0 0
  %423 = vmatpush1.bf16.msra.mxu0 0
  %424 = vmatprep.subr.bf16.mxu0 0
  %425 = vmatpush1.bf16.msra.mxu0 0
  %426 = vmatprep.subr.bf16.mxu0 0
  %427 = vmatpush1.bf16.msra.mxu0 0
  %428 = vmatprep.subr.bf16.mxu0 0
  %429 = vmatpush1.bf16.msra.mxu0 %v409
  %430 = vmatprep.subr.bf16.mxu0 0
  %431 = vmatpush1.bf16.msra.mxu0 %v408
  %432 = vmatprep.subr.bf16.mxu0 0
  %433 = vmatpush1.bf16.msra.mxu0 %v407
  %434 = vmatprep.subr.bf16.mxu0 0
  %435 = vmatpush1.bf16.msra.mxu0 %v406
  %436 = vmatprep.subr.bf16.mxu0 0
  %437 = vmatpush2.bf16.msra.mxu0 0
  %438 = vmatprep.subr.bf16.mxu0 0
  %439 = vmatpush2.bf16.msra.mxu0 0
  %440 = vmatprep.subr.bf16.mxu0 0
  %441 = vmatpush2.bf16.msra.mxu0 0
  %442 = vmatprep.subr.bf16.mxu0 0
  %443 = vmatpush2.bf16.msra.mxu0 0
  %444 = vmatprep.subr.bf16.mxu0 0
  %445 = vmatpush2.bf16.msra.mxu0 0
  %446 = vmatprep.subr.bf16.mxu0 0
  %447 = vmatpush2.bf16.msra.mxu0 0
  %448 = vmatprep.subr.bf16.mxu0 0
  %449 = vmatpush2.bf16.msra.mxu0 0
  %450 = vmatprep.subr.bf16.mxu0 0
  %451 = vmatpush2.bf16.msra.mxu0 0
  %452 = vmatprep.mubr.bf16.mxu0 0
  %453 = vmatmul.mubr.bf16.gmra.mxu0 %v415
  %v454 = vpop.f32.mrf.mxu0
  %v455 = vadd.f32 0.0, %v454
  %v456 = vpop.f32.mrf.mxu0
  %v457 = vpop.f32.mrf.mxu0
  %v458 = vadd.f32 0.0, %v457
  %v459 = vpop.f32.mrf.mxu0
  %460 = vmatprep.mubr.bf16.mxu0 0
  %461 = vmatmul.mubr.bf16.gmra.mxu0 %v418
  %v462 = vpop.f32.mrf.mxu0
  %v463 = vadd.f32 0.0, %v462
  %v464 = vpop.f32.mrf.mxu0
  %v465 = vpop.f32.mrf.mxu0
  %v466 = vadd.f32 0.0, %v465
  %v467 = vpop.f32.mrf.mxu0
  %468 = vdwg.mxu0
  %v469 = vld [vmem:[%s2 + $0x50] sm:$0xf]
  %v470 = vld [vmem:[%s2 + $0x54] sm:$0xf]
  %v471 = vunpack.c.l.bf16 %v469
  %v472 = vunpack.c.l.bf16 %v470
  %v473 = vadd.f32 %v455, %v471
  %v474 = vadd.f32 %v458, %v472
  %v475 = vadd.f32 %v463, %v471
  %v476 = vadd.f32 %v466, %v472
  %v477 = vmax.f32 %v473, 0.0
  %v478 = vmax.f32 %v474, 0.0
  %v479 = vmax.f32 %v475, 0.0
  %v480 = vmax.f32 %v476, 0.0
  %v481 = vunpack.c.l.bf16 %v20
  %v482 = vunpack.c.l.bf16 %v21
  %v483 = vunpack.c.l.bf16 %v22
  %v484 = vunpack.c.l.bf16 %v23
  %v485 = vunpack.c.l.bf16 %v24
  %v486 = vunpack.c.l.bf16 %v25
  %v487 = vunpack.c.l.bf16 %v26
  %v488 = vunpack.c.l.bf16 %v27
  %v489 = vunpack.c.l.bf16 %v28
  %v490 = vunpack.c.l.bf16 %v29
  %v491 = vunpack.c.l.bf16 %v30
  %v492 = vunpack.c.l.bf16 %v31
  %v493 = vunpack.c.l.bf16 %v32
  %v494 = vunpack.c.l.bf16 %v33
  %v495 = vunpack.c.l.bf16 %v34
  %v496 = vunpack.c.l.bf16 %v35
  %v497 = vsel %vm194, %v481, 0.0
  %v498 = vsel %vm194, %v482, 0.0
  %v499 = vadd.f32 %v497, %v498
  %v500 = vsel %vm194, %v483, 0.0
  %v501 = vadd.f32 %v499, %v500
  %v502 = vsel %vm194, %v484, 0.0
  %v503 = vadd.f32 %v501, %v502
  %v504 = vsel %vm194, %v485, 0.0
  %v505 = vadd.f32 %v503, %v504
  %v506 = vsel %vm194, %v486, 0.0
  %v507 = vadd.f32 %v505, %v506
  %v508 = vsel %vm194, %v487, 0.0
  %v509 = vadd.f32 %v507, %v508
  %v510 = vsel %vm194, %v488, 0.0
  %v511 = vadd.f32 %v509, %v510
  %v512 = vrot.slane %v511, 4
  %v513 = vadd.f32 %v511, %v512
  %v514 = vrot.slane %v513, 2
  %v515 = vadd.f32 %v513, %v514
  %v516 = vrot.slane %v515, 1
  %v517 = vadd.f32 %v515, %v516
  %v518 = vsel %vm194, %v489, 0.0
  %v519 = vsel %vm194, %v490, 0.0
  %v520 = vadd.f32 %v518, %v519
  %v521 = vsel %vm194, %v491, 0.0
  %v522 = vadd.f32 %v520, %v521
  %v523 = vsel %vm194, %v492, 0.0
  %v524 = vadd.f32 %v522, %v523
  %v525 = vsel %vm194, %v493, 0.0
  %v526 = vadd.f32 %v524, %v525
  %v527 = vsel %vm194, %v494, 0.0
  %v528 = vadd.f32 %v526, %v527
  %v529 = vsel %vm194, %v495, 0.0
  %v530 = vadd.f32 %v528, %v529
  %v531 = vsel %vm194, %v496, 0.0
  %v532 = vadd.f32 %v530, %v531
  %v533 = vrot.slane %v532, 4
  %v534 = vadd.f32 %v532, %v533
  %v535 = vrot.slane %v534, 2
  %v536 = vadd.f32 %v534, %v535
  %v537 = vrot.slane %v536, 1
  %v538 = vadd.f32 %v536, %v537
  %v539 = vmul.f32 %v517, 0.020408163
  %v540 = vmul.f32 %v538, 0.020408163
  %v541 = vpack.c.bf16 %v539, %v539
  %v542 = vpack.c.bf16 %v540, %v540
  %v543 = vld [vmem:[%s2 + $0x58] sm:$0xf]
  %v544 = vld [vmem:[%s2 + $0x5c] sm:$0xf]
  %v545 = vld [vmem:[%s2 + $0x60] sm:$0xf]
  %v546 = vld [vmem:[%s2 + $0x64] sm:$0xf]
  %v547 = vld [vmem:[%s2 + $0x68] sm:$0xf]
  %v548 = vld [vmem:[%s2 + $0x6c] sm:$0xf]
  %v549 = vld [vmem:[%s2 + $0x70] sm:$0xf]
  %v550 = vld [vmem:[%s2 + $0x74] sm:$0xf]
  %v551 = vlaneseq
  %v552 = vshrl.u32 %v551, 7
  %v553 = vsub.s32 1, %v552
  %v554 = vrot.slane %v16, %v553
  %v557 = vunpack.c.l.b16 %v541
  %v558 = vunpack.c.l.b16 %v542
  %vm559 = vcmask 1041409
  %v560 = vsel %vm559, %v558, %v557
  %v561 = vpack.c.b16 %v560, %v560
  %v570 = vunpack.c.l.b16 %v543
  %v571 = vunpack.c.l.b16 %v544
  %v572 = vunpack.c.l.b16 %v545
  %v573 = vunpack.c.l.b16 %v546
  %v574 = vunpack.c.l.b16 %v547
  %v575 = vunpack.c.l.b16 %v548
  %v576 = vunpack.c.l.b16 %v549
  %v577 = vunpack.c.l.b16 %v550
  %v578 = vpack.c.b16 %v571, %v570
  %v579 = vpack.c.b16 %v573, %v572
  %v580 = vpack.c.b16 %v575, %v574
  %v581 = vpack.c.b16 %v577, %v576
  %v587 = vsel %vm194, %v561, 0
  %589 = vmatprep.subr.bf16.mxu0 0
  %590 = vmatpush1.bf16.msra.mxu0 0
  %591 = vmatprep.subr.bf16.mxu0 0
  %592 = vmatpush1.bf16.msra.mxu0 0
  %593 = vmatprep.subr.bf16.mxu0 0
  %594 = vmatpush1.bf16.msra.mxu0 0
  %595 = vmatprep.subr.bf16.mxu0 0
  %596 = vmatpush1.bf16.msra.mxu0 0
  %597 = vmatprep.subr.bf16.mxu0 0
  %598 = vmatpush1.bf16.msra.mxu0 %v581
  %599 = vmatprep.subr.bf16.mxu0 0
  %600 = vmatpush1.bf16.msra.mxu0 %v580
  %601 = vmatprep.subr.bf16.mxu0 0
  %602 = vmatpush1.bf16.msra.mxu0 %v579
  %603 = vmatprep.subr.bf16.mxu0 0
  %604 = vmatpush1.bf16.msra.mxu0 %v578
  %605 = vmatprep.subr.bf16.mxu0 0
  %606 = vmatpush2.bf16.msra.mxu0 0
  %607 = vmatprep.subr.bf16.mxu0 0
  %608 = vmatpush2.bf16.msra.mxu0 0
  %609 = vmatprep.subr.bf16.mxu0 0
  %610 = vmatpush2.bf16.msra.mxu0 0
  %611 = vmatprep.subr.bf16.mxu0 0
  %612 = vmatpush2.bf16.msra.mxu0 0
  %613 = vmatprep.subr.bf16.mxu0 0
  %614 = vmatpush2.bf16.msra.mxu0 0
  %615 = vmatprep.subr.bf16.mxu0 0
  %616 = vmatpush2.bf16.msra.mxu0 0
  %617 = vmatprep.subr.bf16.mxu0 0
  %618 = vmatpush2.bf16.msra.mxu0 0
  %619 = vmatprep.subr.bf16.mxu0 0
  %620 = vmatpush2.bf16.msra.mxu0 0
  %621 = vmatprep.mubr.bf16.mxu0 0
  %622 = vmatmul.mubr.bf16.gmra.mxu0 %v587
  %v623 = vpop.f32.mrf.mxu0
  %v624 = vadd.f32 %v554, %v623
  %v625 = vpop.f32.mrf.mxu0
  %v626 = vpop.f32.mrf.mxu0
  %v627 = vpop.f32.mrf.mxu0
  %628 = vdwg.mxu0
  %v629 = vmax.f32 %v624, 0.0
  %v630 = vpack.c.bf16 %v120, %v119
  %v631 = vld [vmem:[%s2 + $0x78] sm:$0xf]
  %v632 = vld [vmem:[%s2 + $0x7c] sm:$0xf]
  %v633 = vld [vmem:[%s2 + $0x80] sm:$0xf]
  %v634 = vld [vmem:[%s2 + $0x84] sm:$0xf]
  %v635 = vlaneseq
  %v636 = vshrl.u32 %v635, 7
  %v637 = vsub.s32 2, %v636
  %v638 = vrot.slane %v16, %v637
  %v643 = vunpack.c.l.b16 %v631
  %v644 = vunpack.c.l.b16 %v632
  %v645 = vunpack.c.l.b16 %v633
  %v646 = vunpack.c.l.b16 %v634
  %v647 = vpack.c.b16 %v644, %v643
  %v648 = vpack.c.b16 %v646, %v645
  %v652 = vsel %vm64, %v630, 0
  %654 = vmatprep.subr.bf16.mxu0 0
  %655 = vmatpush1.bf16.msra.mxu0 0
  %656 = vmatprep.subr.bf16.mxu0 0
  %657 = vmatpush1.bf16.msra.mxu0 0
  %658 = vmatprep.subr.bf16.mxu0 0
  %659 = vmatpush1.bf16.msra.mxu0 0
  %660 = vmatprep.subr.bf16.mxu0 0
  %661 = vmatpush1.bf16.msra.mxu0 0
  %662 = vmatprep.subr.bf16.mxu0 0
  %663 = vmatpush1.bf16.msra.mxu0 0
  %664 = vmatprep.subr.bf16.mxu0 0
  %665 = vmatpush1.bf16.msra.mxu0 0
  %666 = vmatprep.subr.bf16.mxu0 0
  %667 = vmatpush1.bf16.msra.mxu0 %v648
  %668 = vmatprep.subr.bf16.mxu0 0
  %669 = vmatpush1.bf16.msra.mxu0 %v647
  %670 = vmatprep.subr.bf16.mxu0 0
  %671 = vmatpush2.bf16.msra.mxu0 0
  %672 = vmatprep.subr.bf16.mxu0 0
  %673 = vmatpush2.bf16.msra.mxu0 0
  %674 = vmatprep.subr.bf16.mxu0 0
  %675 = vmatpush2.bf16.msra.mxu0 0
  %676 = vmatprep.subr.bf16.mxu0 0
  %677 = vmatpush2.bf16.msra.mxu0 0
  %678 = vmatprep.subr.bf16.mxu0 0
  %679 = vmatpush2.bf16.msra.mxu0 0
  %680 = vmatprep.subr.bf16.mxu0 0
  %681 = vmatpush2.bf16.msra.mxu0 0
  %682 = vmatprep.subr.bf16.mxu0 0
  %683 = vmatpush2.bf16.msra.mxu0 0
  %684 = vmatprep.subr.bf16.mxu0 0
  %685 = vmatpush2.bf16.msra.mxu0 0
  %686 = vmatprep.mubr.bf16.mxu0 0
  %687 = vmatmul.mubr.bf16.gmra.mxu0 %v652
  %v688 = vpop.f32.mrf.mxu0
  %v689 = vadd.f32 %v638, %v688
  %v690 = vpop.f32.mrf.mxu0
  %v691 = vpop.f32.mrf.mxu0
  %v692 = vadd.f32 %v638, %v691
  %v693 = vpop.f32.mrf.mxu0
  %694 = vdwg.mxu0
  %v695 = vpack.c.bf16 %v478, %v477
  %v696 = vpack.c.bf16 %v480, %v479
  %v697 = vld [vmem:[%s2 + $0x88] sm:$0xf]
  %v698 = vld [vmem:[%s2 + $0x8c] sm:$0xf]
  %v699 = vld [vmem:[%s2 + $0x90] sm:$0xf]
  %v700 = vld [vmem:[%s2 + $0x94] sm:$0xf]
  %v701 = vlaneseq
  %v702 = vshrl.u32 %v701, 7
  %v703 = vsub.s32 3, %v702
  %v704 = vrot.slane %v16, %v703
  %v709 = vunpack.c.l.b16 %v697
  %v710 = vunpack.c.l.b16 %v698
  %v711 = vunpack.c.l.b16 %v699
  %v712 = vunpack.c.l.b16 %v700
  %v713 = vpack.c.b16 %v710, %v709
  %v714 = vpack.c.b16 %v712, %v711
  %v718 = vsel %vm64, %v695, 0
  %v721 = vsel %vm64, %v696, 0
  %723 = vmatprep.subr.bf16.mxu0 0
  %724 = vmatpush1.bf16.msra.mxu0 0
  %725 = vmatprep.subr.bf16.mxu0 0
  %726 = vmatpush1.bf16.msra.mxu0 0
  %727 = vmatprep.subr.bf16.mxu0 0
  %728 = vmatpush1.bf16.msra.mxu0 0
  %729 = vmatprep.subr.bf16.mxu0 0
  %730 = vmatpush1.bf16.msra.mxu0 0
  %731 = vmatprep.subr.bf16.mxu0 0
  %732 = vmatpush1.bf16.msra.mxu0 0
  %733 = vmatprep.subr.bf16.mxu0 0
  %734 = vmatpush1.bf16.msra.mxu0 0
  %735 = vmatprep.subr.bf16.mxu0 0
  %736 = vmatpush1.bf16.msra.mxu0 %v714
  %737 = vmatprep.subr.bf16.mxu0 0
  %738 = vmatpush1.bf16.msra.mxu0 %v713
  %739 = vmatprep.subr.bf16.mxu0 0
  %740 = vmatpush2.bf16.msra.mxu0 0
  %741 = vmatprep.subr.bf16.mxu0 0
  %742 = vmatpush2.bf16.msra.mxu0 0
  %743 = vmatprep.subr.bf16.mxu0 0
  %744 = vmatpush2.bf16.msra.mxu0 0
  %745 = vmatprep.subr.bf16.mxu0 0
  %746 = vmatpush2.bf16.msra.mxu0 0
  %747 = vmatprep.subr.bf16.mxu0 0
  %748 = vmatpush2.bf16.msra.mxu0 0
  %749 = vmatprep.subr.bf16.mxu0 0
  %750 = vmatpush2.bf16.msra.mxu0 0
  %751 = vmatprep.subr.bf16.mxu0 0
  %752 = vmatpush2.bf16.msra.mxu0 0
  %753 = vmatprep.subr.bf16.mxu0 0
  %754 = vmatpush2.bf16.msra.mxu0 0
  %755 = vmatprep.mubr.bf16.mxu0 0
  %756 = vmatmul.mubr.bf16.gmra.mxu0 %v718
  %v757 = vpop.f32.mrf.mxu0
  %v758 = vadd.f32 %v704, %v757
  %v759 = vpop.f32.mrf.mxu0
  %v760 = vpop.f32.mrf.mxu0
  %v761 = vadd.f32 %v704, %v760
  %v762 = vpop.f32.mrf.mxu0
  %763 = vmatprep.mubr.bf16.mxu0 0
  %764 = vmatmul.mubr.bf16.gmra.mxu0 %v721
  %v765 = vpop.f32.mrf.mxu0
  %v766 = vadd.f32 %v704, %v765
  %v767 = vpop.f32.mrf.mxu0
  %v768 = vpop.f32.mrf.mxu0
  %v769 = vadd.f32 %v704, %v768
  %v770 = vpop.f32.mrf.mxu0
  %771 = vdwg.mxu0
  %776 = vrot.lane.b32.xlu0 %v758, 120
  %v777 = vpop.permute.xlu0 %776
  %778 = vrot.lane.b32.xlu0 %v761, 120
  %v779 = vpop.permute.xlu0 %778
  %780 = vrot.lane.b32.xlu0 %v766, 120
  %v781 = vpop.permute.xlu0 %780
  %782 = vrot.lane.b32.xlu0 %v769, 120
  %v783 = vpop.permute.xlu0 %782
  %784 = vrot.lane.b32.xlu0 %v758, 112
  %v785 = vpop.permute.xlu0 %784
  %786 = vrot.lane.b32.xlu0 %v761, 112
  %v787 = vpop.permute.xlu0 %786
  %788 = vrot.lane.b32.xlu0 %v766, 112
  %v789 = vpop.permute.xlu0 %788
  %790 = vrot.lane.b32.xlu0 %v769, 112
  %v791 = vpop.permute.xlu0 %790
  %792 = vrot.lane.b32.xlu0 %v758, 104
  %v793 = vpop.permute.xlu0 %792
  %794 = vrot.lane.b32.xlu0 %v761, 104
  %v795 = vpop.permute.xlu0 %794
  %796 = vrot.lane.b32.xlu0 %v766, 104
  %v797 = vpop.permute.xlu0 %796
  %798 = vrot.lane.b32.xlu0 %v769, 104
  %v799 = vpop.permute.xlu0 %798
  %802 = vrot.lane.b32.xlu0 %v689, 120
  %v803 = vpop.permute.xlu0 %802
  %804 = vrot.lane.b32.xlu0 %v692, 120
  %v805 = vpop.permute.xlu0 %804
  %806 = vrot.lane.b32.xlu0 %v689, 112
  %v807 = vpop.permute.xlu0 %806
  %808 = vrot.lane.b32.xlu0 %v692, 112
  %v809 = vpop.permute.xlu0 %808
  %810 = vrot.lane.b32.xlu0 %v689, 104
  %v811 = vpop.permute.xlu0 %810
  %812 = vrot.lane.b32.xlu0 %v692, 104
  %v813 = vpop.permute.xlu0 %812
  %vm814 = vcmask 64512
  %v815 = vsel %vm814, %v758, 0
  %v817 = vsel %vm814, %v761, 0
  %v819 = vsel %vm814, %v689, 0
  %821 = vmatprep.subr.mxu0 0.0
  %822 = vmatpush1.xpose.msra.mxu0 0.0
  %823 = vmatprep.subr.mxu0 0.0
  %824 = vmatpush1.xpose.msra.mxu0 0.0
  %825 = vmatprep.subr.mxu0 0.0
  %826 = vmatpush1.xpose.msra.mxu0 0.0
  %827 = vmatprep.subr.mxu0 0.0
  %828 = vmatpush1.xpose.msra.mxu0 0.0
  %829 = vmatprep.subr.mxu0 0.0
  %830 = vmatpush1.xpose.msra.mxu0 0.0
  %831 = vmatprep.subr.mxu0 0.0
  %832 = vmatpush1.xpose.msra.mxu0 0.0
  %833 = vmatprep.subr.mxu0 0.0
  %834 = vmatpush1.xpose.msra.mxu0 0.0
  %835 = vmatprep.subr.mxu0 0.0
  %836 = vmatpush1.xpose.msra.mxu0 0.0
  %837 = vmatprep.subr.mxu0 0.0
  %838 = vmatpush1.xpose.msra.mxu0 0.0
  %839 = vmatprep.subr.mxu0 0.0
  %840 = vmatpush1.xpose.msra.mxu0 0.0
  %841 = vmatprep.subr.mxu0 0.0
  %842 = vmatpush1.xpose.msra.mxu0 0.0
  %843 = vmatprep.subr.mxu0 0.0
  %844 = vmatpush1.xpose.msra.mxu0 0.0
  %845 = vmatprep.subr.mxu0 0.0
  %846 = vmatpush1.xpose.msra.mxu0 0.0
  %847 = vmatprep.subr.mxu0 0.0
  %848 = vmatpush1.xpose.msra.mxu0 0.0
  %849 = vmatprep.subr.mxu0 0.0
  %850 = vmatpush1.xpose.msra.mxu0 0.0
  %851 = vmatprep.subr.mxu0 0.0
  %852 = vmatpush1.xpose.msra.mxu0 %v819
  %853 = vmatprep.subr.mxu0 0.0
  %854 = vmatpush2.xpose.msra.mxu0 0.0
  %855 = vmatprep.subr.mxu0 0.0
  %856 = vmatpush2.xpose.msra.mxu0 0.0
  %857 = vmatprep.subr.mxu0 0.0
  %858 = vmatpush2.xpose.msra.mxu0 0.0
  %859 = vmatprep.subr.mxu0 0.0
  %860 = vmatpush2.xpose.msra.mxu0 0.0
  %861 = vmatprep.subr.mxu0 0.0
  %862 = vmatpush2.xpose.msra.mxu0 0.0
  %863 = vmatprep.subr.mxu0 0.0
  %864 = vmatpush2.xpose.msra.mxu0 0.0
  %865 = vmatprep.subr.mxu0 0.0
  %866 = vmatpush2.xpose.msra.mxu0 0.0
  %867 = vmatprep.subr.mxu0 0.0
  %868 = vmatpush2.xpose.msra.mxu0 0.0
  %869 = vmatprep.subr.mxu0 0.0
  %870 = vmatpush2.xpose.msra.mxu0 0.0
  %871 = vmatprep.subr.mxu0 0.0
  %872 = vmatpush2.xpose.msra.mxu0 0.0
  %873 = vmatprep.subr.mxu0 0.0
  %874 = vmatpush2.xpose.msra.mxu0 0.0
  %875 = vmatprep.subr.mxu0 0.0
  %876 = vmatpush2.xpose.msra.mxu0 0.0
  %877 = vmatprep.subr.mxu0 0.0
  %878 = vmatpush2.xpose.msra.mxu0 0.0
  %879 = vmatprep.subr.mxu0 0.0
  %880 = vmatpush2.xpose.msra.mxu0 0.0
  %881 = vmatprep.subr.mxu0 0.0
  %882 = vmatpush2.xpose.msra.mxu0 0.0
  %883 = vmatprep.subr.mxu0 0.0
  %884 = vmatpush2.xpose.msra.mxu0 0.0
  %885 = vmatprep.mubr.f32.mxu0 0.0
  %886 = vmatmul.mubr.f32.gmra.mxu0 %v815
  %v887 = vpop.f32.mrf.mxu0
  %v888 = vadd.f32 0.0, %v887
  %v889 = vpop.f32.mrf.mxu0
  %890 = vmatprep.mubr.f32.mxu0 0.0
  %891 = vmatmul.mubr.f32.gmra.mxu0 %v817
  %v892 = vpop.f32.mrf.mxu0
  %v893 = vadd.f32 0.0, %v892
  %v894 = vpop.f32.mrf.mxu0
  %895 = vdwg.mxu0
  %v896 = vsel %vm814, %v766, 0
  %v898 = vsel %vm814, %v769, 0
  %v900 = vsel %vm814, %v692, 0
  %902 = vmatprep.subr.mxu0 0.0
  %903 = vmatpush1.xpose.msra.mxu0 0.0
  %904 = vmatprep.subr.mxu0 0.0
  %905 = vmatpush1.xpose.msra.mxu0 0.0
  %906 = vmatprep.subr.mxu0 0.0
  %907 = vmatpush1.xpose.msra.mxu0 0.0
  %908 = vmatprep.subr.mxu0 0.0
  %909 = vmatpush1.xpose.msra.mxu0 0.0
  %910 = vmatprep.subr.mxu0 0.0
  %911 = vmatpush1.xpose.msra.mxu0 0.0
  %912 = vmatprep.subr.mxu0 0.0
  %913 = vmatpush1.xpose.msra.mxu0 0.0
  %914 = vmatprep.subr.mxu0 0.0
  %915 = vmatpush1.xpose.msra.mxu0 0.0
  %916 = vmatprep.subr.mxu0 0.0
  %917 = vmatpush1.xpose.msra.mxu0 0.0
  %918 = vmatprep.subr.mxu0 0.0
  %919 = vmatpush1.xpose.msra.mxu0 0.0
  %920 = vmatprep.subr.mxu0 0.0
  %921 = vmatpush1.xpose.msra.mxu0 0.0
  %922 = vmatprep.subr.mxu0 0.0
  %923 = vmatpush1.xpose.msra.mxu0 0.0
  %924 = vmatprep.subr.mxu0 0.0
  %925 = vmatpush1.xpose.msra.mxu0 0.0
  %926 = vmatprep.subr.mxu0 0.0
  %927 = vmatpush1.xpose.msra.mxu0 0.0
  %928 = vmatprep.subr.mxu0 0.0
  %929 = vmatpush1.xpose.msra.mxu0 0.0
  %930 = vmatprep.subr.mxu0 0.0
  %931 = vmatpush1.xpose.msra.mxu0 0.0
  %932 = vmatprep.subr.mxu0 0.0
  %933 = vmatpush1.xpose.msra.mxu0 %v900
  %934 = vmatprep.subr.mxu0 0.0
  %935 = vmatpush2.xpose.msra.mxu0 0.0
  %936 = vmatprep.subr.mxu0 0.0
  %937 = vmatpush2.xpose.msra.mxu0 0.0
  %938 = vmatprep.subr.mxu0 0.0
  %939 = vmatpush2.xpose.msra.mxu0 0.0
  %940 = vmatprep.subr.mxu0 0.0
  %941 = vmatpush2.xpose.msra.mxu0 0.0
  %942 = vmatprep.subr.mxu0 0.0
  %943 = vmatpush2.xpose.msra.mxu0 0.0
  %944 = vmatprep.subr.mxu0 0.0
  %945 = vmatpush2.xpose.msra.mxu0 0.0
  %946 = vmatprep.subr.mxu0 0.0
  %947 = vmatpush2.xpose.msra.mxu0 0.0
  %948 = vmatprep.subr.mxu0 0.0
  %949 = vmatpush2.xpose.msra.mxu0 0.0
  %950 = vmatprep.subr.mxu0 0.0
  %951 = vmatpush2.xpose.msra.mxu0 0.0
  %952 = vmatprep.subr.mxu0 0.0
  %953 = vmatpush2.xpose.msra.mxu0 0.0
  %954 = vmatprep.subr.mxu0 0.0
  %955 = vmatpush2.xpose.msra.mxu0 0.0
  %956 = vmatprep.subr.mxu0 0.0
  %957 = vmatpush2.xpose.msra.mxu0 0.0
  %958 = vmatprep.subr.mxu0 0.0
  %959 = vmatpush2.xpose.msra.mxu0 0.0
  %960 = vmatprep.subr.mxu0 0.0
  %961 = vmatpush2.xpose.msra.mxu0 0.0
  %962 = vmatprep.subr.mxu0 0.0
  %963 = vmatpush2.xpose.msra.mxu0 0.0
  %964 = vmatprep.subr.mxu0 0.0
  %965 = vmatpush2.xpose.msra.mxu0 0.0
  %966 = vmatprep.mubr.f32.mxu0 0.0
  %967 = vmatmul.mubr.f32.gmra.mxu0 %v896
  %v968 = vpop.f32.mrf.mxu0
  %v969 = vadd.f32 0.0, %v968
  %v970 = vpop.f32.mrf.mxu0
  %971 = vmatprep.mubr.f32.mxu0 0.0
  %972 = vmatmul.mubr.f32.gmra.mxu0 %v898
  %v973 = vpop.f32.mrf.mxu0
  %v974 = vadd.f32 0.0, %v973
  %v975 = vpop.f32.mrf.mxu0
  %976 = vdwg.mxu0
  %v977 = vsel %vm814, %v777, 0
  %v979 = vsel %vm814, %v779, 0
  %v981 = vsel %vm814, %v803, 0
  %983 = vmatprep.subr.mxu0 0.0
  %984 = vmatpush1.xpose.msra.mxu0 0.0
  %985 = vmatprep.subr.mxu0 0.0
  %986 = vmatpush1.xpose.msra.mxu0 0.0
  %987 = vmatprep.subr.mxu0 0.0
  %988 = vmatpush1.xpose.msra.mxu0 0.0
  %989 = vmatprep.subr.mxu0 0.0
  %990 = vmatpush1.xpose.msra.mxu0 0.0
  %991 = vmatprep.subr.mxu0 0.0
  %992 = vmatpush1.xpose.msra.mxu0 0.0
  %993 = vmatprep.subr.mxu0 0.0
  %994 = vmatpush1.xpose.msra.mxu0 0.0
  %995 = vmatprep.subr.mxu0 0.0
  %996 = vmatpush1.xpose.msra.mxu0 0.0
  %997 = vmatprep.subr.mxu0 0.0
  %998 = vmatpush1.xpose.msra.mxu0 0.0
  %999 = vmatprep.subr.mxu0 0.0
  %1000 = vmatpush1.xpose.msra.mxu0 0.0
  %1001 = vmatprep.subr.mxu0 0.0
  %1002 = vmatpush1.xpose.msra.mxu0 0.0
  %1003 = vmatprep.subr.mxu0 0.0
  %1004 = vmatpush1.xpose.msra.mxu0 0.0
  %1005 = vmatprep.subr.mxu0 0.0
  %1006 = vmatpush1.xpose.msra.mxu0 0.0
  %1007 = vmatprep.subr.mxu0 0.0
  %1008 = vmatpush1.xpose.msra.mxu0 0.0
  %1009 = vmatprep.subr.mxu0 0.0
  %1010 = vmatpush1.xpose.msra.mxu0 0.0
  %1011 = vmatprep.subr.mxu0 0.0
  %1012 = vmatpush1.xpose.msra.mxu0 0.0
  %1013 = vmatprep.subr.mxu0 0.0
  %1014 = vmatpush1.xpose.msra.mxu0 %v981
  %1015 = vmatprep.subr.mxu0 0.0
  %1016 = vmatpush2.xpose.msra.mxu0 0.0
  %1017 = vmatprep.subr.mxu0 0.0
  %1018 = vmatpush2.xpose.msra.mxu0 0.0
  %1019 = vmatprep.subr.mxu0 0.0
  %1020 = vmatpush2.xpose.msra.mxu0 0.0
  %1021 = vmatprep.subr.mxu0 0.0
  %1022 = vmatpush2.xpose.msra.mxu0 0.0
  %1023 = vmatprep.subr.mxu0 0.0
  %1024 = vmatpush2.xpose.msra.mxu0 0.0
  %1025 = vmatprep.subr.mxu0 0.0
  %1026 = vmatpush2.xpose.msra.mxu0 0.0
  %1027 = vmatprep.subr.mxu0 0.0
  %1028 = vmatpush2.xpose.msra.mxu0 0.0
  %1029 = vmatprep.subr.mxu0 0.0
  %1030 = vmatpush2.xpose.msra.mxu0 0.0
  %1031 = vmatprep.subr.mxu0 0.0
  %1032 = vmatpush2.xpose.msra.mxu0 0.0
  %1033 = vmatprep.subr.mxu0 0.0
  %1034 = vmatpush2.xpose.msra.mxu0 0.0
  %1035 = vmatprep.subr.mxu0 0.0
  %1036 = vmatpush2.xpose.msra.mxu0 0.0
  %1037 = vmatprep.subr.mxu0 0.0
  %1038 = vmatpush2.xpose.msra.mxu0 0.0
  %1039 = vmatprep.subr.mxu0 0.0
  %1040 = vmatpush2.xpose.msra.mxu0 0.0
  %1041 = vmatprep.subr.mxu0 0.0
  %1042 = vmatpush2.xpose.msra.mxu0 0.0
  %1043 = vmatprep.subr.mxu0 0.0
  %1044 = vmatpush2.xpose.msra.mxu0 0.0
  %1045 = vmatprep.subr.mxu0 0.0
  %1046 = vmatpush2.xpose.msra.mxu0 0.0
  %1047 = vmatprep.mubr.f32.mxu0 0.0
  %1048 = vmatmul.mubr.f32.gmra.mxu0 %v977
  %v1049 = vpop.f32.mrf.mxu0
  %v1050 = vadd.f32 0.0, %v1049
  %v1051 = vpop.f32.mrf.mxu0
  %1052 = vmatprep.mubr.f32.mxu0 0.0
  %1053 = vmatmul.mubr.f32.gmra.mxu0 %v979
  %v1054 = vpop.f32.mrf.mxu0
  %v1055 = vadd.f32 0.0, %v1054
  %v1056 = vpop.f32.mrf.mxu0
  %1057 = vdwg.mxu0
  %v1058 = vsel %vm814, %v781, 0
  %v1060 = vsel %vm814, %v783, 0
  %v1062 = vsel %vm814, %v805, 0
  %1064 = vmatprep.subr.mxu0 0.0
  %1065 = vmatpush1.xpose.msra.mxu0 0.0
  %1066 = vmatprep.subr.mxu0 0.0
  %1067 = vmatpush1.xpose.msra.mxu0 0.0
  %1068 = vmatprep.subr.mxu0 0.0
  %1069 = vmatpush1.xpose.msra.mxu0 0.0
  %1070 = vmatprep.subr.mxu0 0.0
  %1071 = vmatpush1.xpose.msra.mxu0 0.0
  %1072 = vmatprep.subr.mxu0 0.0
  %1073 = vmatpush1.xpose.msra.mxu0 0.0
  %1074 = vmatprep.subr.mxu0 0.0
  %1075 = vmatpush1.xpose.msra.mxu0 0.0
  %1076 = vmatprep.subr.mxu0 0.0
  %1077 = vmatpush1.xpose.msra.mxu0 0.0
  %1078 = vmatprep.subr.mxu0 0.0
  %1079 = vmatpush1.xpose.msra.mxu0 0.0
  %1080 = vmatprep.subr.mxu0 0.0
  %1081 = vmatpush1.xpose.msra.mxu0 0.0
  %1082 = vmatprep.subr.mxu0 0.0
  %1083 = vmatpush1.xpose.msra.mxu0 0.0
  %1084 = vmatprep.subr.mxu0 0.0
  %1085 = vmatpush1.xpose.msra.mxu0 0.0
  %1086 = vmatprep.subr.mxu0 0.0
  %1087 = vmatpush1.xpose.msra.mxu0 0.0
  %1088 = vmatprep.subr.mxu0 0.0
  %1089 = vmatpush1.xpose.msra.mxu0 0.0
  %1090 = vmatprep.subr.mxu0 0.0
  %1091 = vmatpush1.xpose.msra.mxu0 0.0
  %1092 = vmatprep.subr.mxu0 0.0
  %1093 = vmatpush1.xpose.msra.mxu0 0.0
  %1094 = vmatprep.subr.mxu0 0.0
  %1095 = vmatpush1.xpose.msra.mxu0 %v1062
  %1096 = vmatprep.subr.mxu0 0.0
  %1097 = vmatpush2.xpose.msra.mxu0 0.0
  %1098 = vmatprep.subr.mxu0 0.0
  %1099 = vmatpush2.xpose.msra.mxu0 0.0
  %1100 = vmatprep.subr.mxu0 0.0
  %1101 = vmatpush2.xpose.msra.mxu0 0.0
  %1102 = vmatprep.subr.mxu0 0.0
  %1103 = vmatpush2.xpose.msra.mxu0 0.0
  %1104 = vmatprep.subr.mxu0 0.0
  %1105 = vmatpush2.xpose.msra.mxu0 0.0
  %1106 = vmatprep.subr.mxu0 0.0
  %1107 = vmatpush2.xpose.msra.mxu0 0.0
  %1108 = vmatprep.subr.mxu0 0.0
  %1109 = vmatpush2.xpose.msra.mxu0 0.0
  %1110 = vmatprep.subr.mxu0 0.0
  %1111 = vmatpush2.xpose.msra.mxu0 0.0
  %1112 = vmatprep.subr.mxu0 0.0
  %1113 = vmatpush2.xpose.msra.mxu0 0.0
  %1114 = vmatprep.subr.mxu0 0.0
  %1115 = vmatpush2.xpose.msra.mxu0 0.0
  %1116 = vmatprep.subr.mxu0 0.0
  %1117 = vmatpush2.xpose.msra.mxu0 0.0
  %1118 = vmatprep.subr.mxu0 0.0
  %1119 = vmatpush2.xpose.msra.mxu0 0.0
  %1120 = vmatprep.subr.mxu0 0.0
  %1121 = vmatpush2.xpose.msra.mxu0 0.0
  %1122 = vmatprep.subr.mxu0 0.0
  %1123 = vmatpush2.xpose.msra.mxu0 0.0
  %1124 = vmatprep.subr.mxu0 0.0
  %1125 = vmatpush2.xpose.msra.mxu0 0.0
  %1126 = vmatprep.subr.mxu0 0.0
  %1127 = vmatpush2.xpose.msra.mxu0 0.0
  %1128 = vmatprep.mubr.f32.mxu0 0.0
  %1129 = vmatmul.mubr.f32.gmra.mxu0 %v1058
  %v1130 = vpop.f32.mrf.mxu0
  %v1131 = vadd.f32 0.0, %v1130
  %v1132 = vpop.f32.mrf.mxu0
  %1133 = vmatprep.mubr.f32.mxu0 0.0
  %1134 = vmatmul.mubr.f32.gmra.mxu0 %v1060
  %v1135 = vpop.f32.mrf.mxu0
  %v1136 = vadd.f32 0.0, %v1135
  %v1137 = vpop.f32.mrf.mxu0
  %1138 = vdwg.mxu0
  %v1139 = vsel %vm814, %v785, 0
  %v1141 = vsel %vm814, %v787, 0
  %v1143 = vsel %vm814, %v807, 0
  %1145 = vmatprep.subr.mxu0 0.0
  %1146 = vmatpush1.xpose.msra.mxu0 0.0
  %1147 = vmatprep.subr.mxu0 0.0
  %1148 = vmatpush1.xpose.msra.mxu0 0.0
  %1149 = vmatprep.subr.mxu0 0.0
  %1150 = vmatpush1.xpose.msra.mxu0 0.0
  %1151 = vmatprep.subr.mxu0 0.0
  %1152 = vmatpush1.xpose.msra.mxu0 0.0
  %1153 = vmatprep.subr.mxu0 0.0
  %1154 = vmatpush1.xpose.msra.mxu0 0.0
  %1155 = vmatprep.subr.mxu0 0.0
  %1156 = vmatpush1.xpose.msra.mxu0 0.0
  %1157 = vmatprep.subr.mxu0 0.0
  %1158 = vmatpush1.xpose.msra.mxu0 0.0
  %1159 = vmatprep.subr.mxu0 0.0
  %1160 = vmatpush1.xpose.msra.mxu0 0.0
  %1161 = vmatprep.subr.mxu0 0.0
  %1162 = vmatpush1.xpose.msra.mxu0 0.0
  %1163 = vmatprep.subr.mxu0 0.0
  %1164 = vmatpush1.xpose.msra.mxu0 0.0
  %1165 = vmatprep.subr.mxu0 0.0
  %1166 = vmatpush1.xpose.msra.mxu0 0.0
  %1167 = vmatprep.subr.mxu0 0.0
  %1168 = vmatpush1.xpose.msra.mxu0 0.0
  %1169 = vmatprep.subr.mxu0 0.0
  %1170 = vmatpush1.xpose.msra.mxu0 0.0
  %1171 = vmatprep.subr.mxu0 0.0
  %1172 = vmatpush1.xpose.msra.mxu0 0.0
  %1173 = vmatprep.subr.mxu0 0.0
  %1174 = vmatpush1.xpose.msra.mxu0 0.0
  %1175 = vmatprep.subr.mxu0 0.0
  %1176 = vmatpush1.xpose.msra.mxu0 %v1143
  %1177 = vmatprep.subr.mxu0 0.0
  %1178 = vmatpush2.xpose.msra.mxu0 0.0
  %1179 = vmatprep.subr.mxu0 0.0
  %1180 = vmatpush2.xpose.msra.mxu0 0.0
  %1181 = vmatprep.subr.mxu0 0.0
  %1182 = vmatpush2.xpose.msra.mxu0 0.0
  %1183 = vmatprep.subr.mxu0 0.0
  %1184 = vmatpush2.xpose.msra.mxu0 0.0
  %1185 = vmatprep.subr.mxu0 0.0
  %1186 = vmatpush2.xpose.msra.mxu0 0.0
  %1187 = vmatprep.subr.mxu0 0.0
  %1188 = vmatpush2.xpose.msra.mxu0 0.0
  %1189 = vmatprep.subr.mxu0 0.0
  %1190 = vmatpush2.xpose.msra.mxu0 0.0
  %1191 = vmatprep.subr.mxu0 0.0
  %1192 = vmatpush2.xpose.msra.mxu0 0.0
  %1193 = vmatprep.subr.mxu0 0.0
  %1194 = vmatpush2.xpose.msra.mxu0 0.0
  %1195 = vmatprep.subr.mxu0 0.0
  %1196 = vmatpush2.xpose.msra.mxu0 0.0
  %1197 = vmatprep.subr.mxu0 0.0
  %1198 = vmatpush2.xpose.msra.mxu0 0.0
  %1199 = vmatprep.subr.mxu0 0.0
  %1200 = vmatpush2.xpose.msra.mxu0 0.0
  %1201 = vmatprep.subr.mxu0 0.0
  %1202 = vmatpush2.xpose.msra.mxu0 0.0
  %1203 = vmatprep.subr.mxu0 0.0
  %1204 = vmatpush2.xpose.msra.mxu0 0.0
  %1205 = vmatprep.subr.mxu0 0.0
  %1206 = vmatpush2.xpose.msra.mxu0 0.0
  %1207 = vmatprep.subr.mxu0 0.0
  %1208 = vmatpush2.xpose.msra.mxu0 0.0
  %1209 = vmatprep.mubr.f32.mxu0 0.0
  %1210 = vmatmul.mubr.f32.gmra.mxu0 %v1139
  %v1211 = vpop.f32.mrf.mxu0
  %v1212 = vadd.f32 0.0, %v1211
  %v1213 = vpop.f32.mrf.mxu0
  %1214 = vmatprep.mubr.f32.mxu0 0.0
  %1215 = vmatmul.mubr.f32.gmra.mxu0 %v1141
  %v1216 = vpop.f32.mrf.mxu0
  %v1217 = vadd.f32 0.0, %v1216
  %v1218 = vpop.f32.mrf.mxu0
  %1219 = vdwg.mxu0
  %v1220 = vsel %vm814, %v789, 0
  %v1222 = vsel %vm814, %v791, 0
  %v1224 = vsel %vm814, %v809, 0
  %1226 = vmatprep.subr.mxu0 0.0
  %1227 = vmatpush1.xpose.msra.mxu0 0.0
  %1228 = vmatprep.subr.mxu0 0.0
  %1229 = vmatpush1.xpose.msra.mxu0 0.0
  %1230 = vmatprep.subr.mxu0 0.0
  %1231 = vmatpush1.xpose.msra.mxu0 0.0
  %1232 = vmatprep.subr.mxu0 0.0
  %1233 = vmatpush1.xpose.msra.mxu0 0.0
  %1234 = vmatprep.subr.mxu0 0.0
  %1235 = vmatpush1.xpose.msra.mxu0 0.0
  %1236 = vmatprep.subr.mxu0 0.0
  %1237 = vmatpush1.xpose.msra.mxu0 0.0
  %1238 = vmatprep.subr.mxu0 0.0
  %1239 = vmatpush1.xpose.msra.mxu0 0.0
  %1240 = vmatprep.subr.mxu0 0.0
  %1241 = vmatpush1.xpose.msra.mxu0 0.0
  %1242 = vmatprep.subr.mxu0 0.0
  %1243 = vmatpush1.xpose.msra.mxu0 0.0
  %1244 = vmatprep.subr.mxu0 0.0
  %1245 = vmatpush1.xpose.msra.mxu0 0.0
  %1246 = vmatprep.subr.mxu0 0.0
  %1247 = vmatpush1.xpose.msra.mxu0 0.0
  %1248 = vmatprep.subr.mxu0 0.0
  %1249 = vmatpush1.xpose.msra.mxu0 0.0
  %1250 = vmatprep.subr.mxu0 0.0
  %1251 = vmatpush1.xpose.msra.mxu0 0.0
  %1252 = vmatprep.subr.mxu0 0.0
  %1253 = vmatpush1.xpose.msra.mxu0 0.0
  %1254 = vmatprep.subr.mxu0 0.0
  %1255 = vmatpush1.xpose.msra.mxu0 0.0
  %1256 = vmatprep.subr.mxu0 0.0
  %1257 = vmatpush1.xpose.msra.mxu0 %v1224
  %1258 = vmatprep.subr.mxu0 0.0
  %1259 = vmatpush2.xpose.msra.mxu0 0.0
  %1260 = vmatprep.subr.mxu0 0.0
  %1261 = vmatpush2.xpose.msra.mxu0 0.0
  %1262 = vmatprep.subr.mxu0 0.0
  %1263 = vmatpush2.xpose.msra.mxu0 0.0
  %1264 = vmatprep.subr.mxu0 0.0
  %1265 = vmatpush2.xpose.msra.mxu0 0.0
  %1266 = vmatprep.subr.mxu0 0.0
  %1267 = vmatpush2.xpose.msra.mxu0 0.0
  %1268 = vmatprep.subr.mxu0 0.0
  %1269 = vmatpush2.xpose.msra.mxu0 0.0
  %1270 = vmatprep.subr.mxu0 0.0
  %1271 = vmatpush2.xpose.msra.mxu0 0.0
  %1272 = vmatprep.subr.mxu0 0.0
  %1273 = vmatpush2.xpose.msra.mxu0 0.0
  %1274 = vmatprep.subr.mxu0 0.0
  %1275 = vmatpush2.xpose.msra.mxu0 0.0
  %1276 = vmatprep.subr.mxu0 0.0
  %1277 = vmatpush2.xpose.msra.mxu0 0.0
  %1278 = vmatprep.subr.mxu0 0.0
  %1279 = vmatpush2.xpose.msra.mxu0 0.0
  %1280 = vmatprep.subr.mxu0 0.0
  %1281 = vmatpush2.xpose.msra.mxu0 0.0
  %1282 = vmatprep.subr.mxu0 0.0
  %1283 = vmatpush2.xpose.msra.mxu0 0.0
  %1284 = vmatprep.subr.mxu0 0.0
  %1285 = vmatpush2.xpose.msra.mxu0 0.0
  %1286 = vmatprep.subr.mxu0 0.0
  %1287 = vmatpush2.xpose.msra.mxu0 0.0
  %1288 = vmatprep.subr.mxu0 0.0
  %1289 = vmatpush2.xpose.msra.mxu0 0.0
  %1290 = vmatprep.mubr.f32.mxu0 0.0
  %1291 = vmatmul.mubr.f32.gmra.mxu0 %v1220
  %v1292 = vpop.f32.mrf.mxu0
  %v1293 = vadd.f32 0.0, %v1292
  %v1294 = vpop.f32.mrf.mxu0
  %1295 = vmatprep.mubr.f32.mxu0 0.0
  %1296 = vmatmul.mubr.f32.gmra.mxu0 %v1222
  %v1297 = vpop.f32.mrf.mxu0
  %v1298 = vadd.f32 0.0, %v1297
  %v1299 = vpop.f32.mrf.mxu0
  %1300 = vdwg.mxu0
  %v1301 = vsel %vm814, %v793, 0
  %v1303 = vsel %vm814, %v795, 0
  %v1305 = vsel %vm814, %v811, 0
  %1307 = vmatprep.subr.mxu0 0.0
  %1308 = vmatpush1.xpose.msra.mxu0 0.0
  %1309 = vmatprep.subr.mxu0 0.0
  %1310 = vmatpush1.xpose.msra.mxu0 0.0
  %1311 = vmatprep.subr.mxu0 0.0
  %1312 = vmatpush1.xpose.msra.mxu0 0.0
  %1313 = vmatprep.subr.mxu0 0.0
  %1314 = vmatpush1.xpose.msra.mxu0 0.0
  %1315 = vmatprep.subr.mxu0 0.0
  %1316 = vmatpush1.xpose.msra.mxu0 0.0
  %1317 = vmatprep.subr.mxu0 0.0
  %1318 = vmatpush1.xpose.msra.mxu0 0.0
  %1319 = vmatprep.subr.mxu0 0.0
  %1320 = vmatpush1.xpose.msra.mxu0 0.0
  %1321 = vmatprep.subr.mxu0 0.0
  %1322 = vmatpush1.xpose.msra.mxu0 0.0
  %1323 = vmatprep.subr.mxu0 0.0
  %1324 = vmatpush1.xpose.msra.mxu0 0.0
  %1325 = vmatprep.subr.mxu0 0.0
  %1326 = vmatpush1.xpose.msra.mxu0 0.0
  %1327 = vmatprep.subr.mxu0 0.0
  %1328 = vmatpush1.xpose.msra.mxu0 0.0
  %1329 = vmatprep.subr.mxu0 0.0
  %1330 = vmatpush1.xpose.msra.mxu0 0.0
  %1331 = vmatprep.subr.mxu0 0.0
  %1332 = vmatpush1.xpose.msra.mxu0 0.0
  %1333 = vmatprep.subr.mxu0 0.0
  %1334 = vmatpush1.xpose.msra.mxu0 0.0
  %1335 = vmatprep.subr.mxu0 0.0
  %1336 = vmatpush1.xpose.msra.mxu0 0.0
  %1337 = vmatprep.subr.mxu0 0.0
  %1338 = vmatpush1.xpose.msra.mxu0 %v1305
  %1339 = vmatprep.subr.mxu0 0.0
  %1340 = vmatpush2.xpose.msra.mxu0 0.0
  %1341 = vmatprep.subr.mxu0 0.0
  %1342 = vmatpush2.xpose.msra.mxu0 0.0
  %1343 = vmatprep.subr.mxu0 0.0
  %1344 = vmatpush2.xpose.msra.mxu0 0.0
  %1345 = vmatprep.subr.mxu0 0.0
  %1346 = vmatpush2.xpose.msra.mxu0 0.0
  %1347 = vmatprep.subr.mxu0 0.0
  %1348 = vmatpush2.xpose.msra.mxu0 0.0
  %1349 = vmatprep.subr.mxu0 0.0
  %1350 = vmatpush2.xpose.msra.mxu0 0.0
  %1351 = vmatprep.subr.mxu0 0.0
  %1352 = vmatpush2.xpose.msra.mxu0 0.0
  %1353 = vmatprep.subr.mxu0 0.0
  %1354 = vmatpush2.xpose.msra.mxu0 0.0
  %1355 = vmatprep.subr.mxu0 0.0
  %1356 = vmatpush2.xpose.msra.mxu0 0.0
  %1357 = vmatprep.subr.mxu0 0.0
  %1358 = vmatpush2.xpose.msra.mxu0 0.0
  %1359 = vmatprep.subr.mxu0 0.0
  %1360 = vmatpush2.xpose.msra.mxu0 0.0
  %1361 = vmatprep.subr.mxu0 0.0
  %1362 = vmatpush2.xpose.msra.mxu0 0.0
  %1363 = vmatprep.subr.mxu0 0.0
  %1364 = vmatpush2.xpose.msra.mxu0 0.0
  %1365 = vmatprep.subr.mxu0 0.0
  %1366 = vmatpush2.xpose.msra.mxu0 0.0
  %1367 = vmatprep.subr.mxu0 0.0
  %1368 = vmatpush2.xpose.msra.mxu0 0.0
  %1369 = vmatprep.subr.mxu0 0.0
  %1370 = vmatpush2.xpose.msra.mxu0 0.0
  %1371 = vmatprep.mubr.f32.mxu0 0.0
  %1372 = vmatmul.mubr.f32.gmra.mxu0 %v1301
  %v1373 = vpop.f32.mrf.mxu0
  %v1374 = vadd.f32 0.0, %v1373
  %v1375 = vpop.f32.mrf.mxu0
  %1376 = vmatprep.mubr.f32.mxu0 0.0
  %1377 = vmatmul.mubr.f32.gmra.mxu0 %v1303
  %v1378 = vpop.f32.mrf.mxu0
  %v1379 = vadd.f32 0.0, %v1378
  %v1380 = vpop.f32.mrf.mxu0
  %1381 = vdwg.mxu0
  %v1382 = vsel %vm814, %v797, 0
  %v1384 = vsel %vm814, %v799, 0
  %v1386 = vsel %vm814, %v813, 0
  %1388 = vmatprep.subr.mxu0 0.0
  %1389 = vmatpush1.xpose.msra.mxu0 0.0
  %1390 = vmatprep.subr.mxu0 0.0
  %1391 = vmatpush1.xpose.msra.mxu0 0.0
  %1392 = vmatprep.subr.mxu0 0.0
  %1393 = vmatpush1.xpose.msra.mxu0 0.0
  %1394 = vmatprep.subr.mxu0 0.0
  %1395 = vmatpush1.xpose.msra.mxu0 0.0
  %1396 = vmatprep.subr.mxu0 0.0
  %1397 = vmatpush1.xpose.msra.mxu0 0.0
  %1398 = vmatprep.subr.mxu0 0.0
  %1399 = vmatpush1.xpose.msra.mxu0 0.0
  %1400 = vmatprep.subr.mxu0 0.0
  %1401 = vmatpush1.xpose.msra.mxu0 0.0
  %1402 = vmatprep.subr.mxu0 0.0
  %1403 = vmatpush1.xpose.msra.mxu0 0.0
  %1404 = vmatprep.subr.mxu0 0.0
  %1405 = vmatpush1.xpose.msra.mxu0 0.0
  %1406 = vmatprep.subr.mxu0 0.0
  %1407 = vmatpush1.xpose.msra.mxu0 0.0
  %1408 = vmatprep.subr.mxu0 0.0
  %1409 = vmatpush1.xpose.msra.mxu0 0.0
  %1410 = vmatprep.subr.mxu0 0.0
  %1411 = vmatpush1.xpose.msra.mxu0 0.0
  %1412 = vmatprep.subr.mxu0 0.0
  %1413 = vmatpush1.xpose.msra.mxu0 0.0
  %1414 = vmatprep.subr.mxu0 0.0
  %1415 = vmatpush1.xpose.msra.mxu0 0.0
  %1416 = vmatprep.subr.mxu0 0.0
  %1417 = vmatpush1.xpose.msra.mxu0 0.0
  %1418 = vmatprep.subr.mxu0 0.0
  %1419 = vmatpush1.xpose.msra.mxu0 %v1386
  %1420 = vmatprep.subr.mxu0 0.0
  %1421 = vmatpush2.xpose.msra.mxu0 0.0
  %1422 = vmatprep.subr.mxu0 0.0
  %1423 = vmatpush2.xpose.msra.mxu0 0.0
  %1424 = vmatprep.subr.mxu0 0.0
  %1425 = vmatpush2.xpose.msra.mxu0 0.0
  %1426 = vmatprep.subr.mxu0 0.0
  %1427 = vmatpush2.xpose.msra.mxu0 0.0
  %1428 = vmatprep.subr.mxu0 0.0
  %1429 = vmatpush2.xpose.msra.mxu0 0.0
  %1430 = vmatprep.subr.mxu0 0.0
  %1431 = vmatpush2.xpose.msra.mxu0 0.0
  %1432 = vmatprep.subr.mxu0 0.0
  %1433 = vmatpush2.xpose.msra.mxu0 0.0
  %1434 = vmatprep.subr.mxu0 0.0
  %1435 = vmatpush2.xpose.msra.mxu0 0.0
  %1436 = vmatprep.subr.mxu0 0.0
  %1437 = vmatpush2.xpose.msra.mxu0 0.0
  %1438 = vmatprep.subr.mxu0 0.0
  %1439 = vmatpush2.xpose.msra.mxu0 0.0
  %1440 = vmatprep.subr.mxu0 0.0
  %1441 = vmatpush2.xpose.msra.mxu0 0.0
  %1442 = vmatprep.subr.mxu0 0.0
  %1443 = vmatpush2.xpose.msra.mxu0 0.0
  %1444 = vmatprep.subr.mxu0 0.0
  %1445 = vmatpush2.xpose.msra.mxu0 0.0
  %1446 = vmatprep.subr.mxu0 0.0
  %1447 = vmatpush2.xpose.msra.mxu0 0.0
  %1448 = vmatprep.subr.mxu0 0.0
  %1449 = vmatpush2.xpose.msra.mxu0 0.0
  %1450 = vmatprep.subr.mxu0 0.0
  %1451 = vmatpush2.xpose.msra.mxu0 0.0
  %1452 = vmatprep.mubr.f32.mxu0 0.0
  %1453 = vmatmul.mubr.f32.gmra.mxu0 %v1382
  %v1454 = vpop.f32.mrf.mxu0
  %v1455 = vadd.f32 0.0, %v1454
  %v1456 = vpop.f32.mrf.mxu0
  %1457 = vmatprep.mubr.f32.mxu0 0.0
  %1458 = vmatmul.mubr.f32.gmra.mxu0 %v1384
  %v1459 = vpop.f32.mrf.mxu0
  %v1460 = vadd.f32 0.0, %v1459
  %v1461 = vpop.f32.mrf.mxu0
  %1462 = vdwg.mxu0
  %v1463 = vsel %vm814, %v888, -inf
  %1464 = vmax.xlane.f32.xlu0 %v1463
  %v1465 = vpop.xlane.xlu0 %1464
  %v1466 = vsel %vm814, %v893, -inf
  %1467 = vmax.xlane.f32.xlu0 %v1466
  %v1468 = vpop.xlane.xlu0 %1467
  %v1469 = vsel %vm814, %v969, -inf
  %1470 = vmax.xlane.f32.xlu0 %v1469
  %v1471 = vpop.xlane.xlu0 %1470
  %v1472 = vsel %vm814, %v974, -inf
  %1473 = vmax.xlane.f32.xlu0 %v1472
  %v1474 = vpop.xlane.xlu0 %1473
  %v1475 = vsel %vm814, %v1050, -inf
  %1476 = vmax.xlane.f32.xlu0 %v1475
  %v1477 = vpop.xlane.xlu0 %1476
  %v1478 = vsel %vm814, %v1055, -inf
  %1479 = vmax.xlane.f32.xlu0 %v1478
  %v1480 = vpop.xlane.xlu0 %1479
  %v1481 = vsel %vm814, %v1131, -inf
  %1482 = vmax.xlane.f32.xlu0 %v1481
  %v1483 = vpop.xlane.xlu0 %1482
  %v1484 = vsel %vm814, %v1136, -inf
  %1485 = vmax.xlane.f32.xlu0 %v1484
  %v1486 = vpop.xlane.xlu0 %1485
  %v1487 = vsel %vm814, %v1212, -inf
  %1488 = vmax.xlane.f32.xlu0 %v1487
  %v1489 = vpop.xlane.xlu0 %1488
  %v1490 = vsel %vm814, %v1217, -inf
  %1491 = vmax.xlane.f32.xlu0 %v1490
  %v1492 = vpop.xlane.xlu0 %1491
  %v1493 = vsel %vm814, %v1293, -inf
  %1494 = vmax.xlane.f32.xlu0 %v1493
  %v1495 = vpop.xlane.xlu0 %1494
  %v1496 = vsel %vm814, %v1298, -inf
  %1497 = vmax.xlane.f32.xlu0 %v1496
  %v1498 = vpop.xlane.xlu0 %1497
  %v1499 = vsel %vm814, %v1374, -inf
  %1500 = vmax.xlane.f32.xlu0 %v1499
  %v1501 = vpop.xlane.xlu0 %1500
  %v1502 = vsel %vm814, %v1379, -inf
  %1503 = vmax.xlane.f32.xlu0 %v1502
  %v1504 = vpop.xlane.xlu0 %1503
  %v1505 = vsel %vm814, %v1455, -inf
  %1506 = vmax.xlane.f32.xlu0 %v1505
  %v1507 = vpop.xlane.xlu0 %1506
  %v1508 = vsel %vm814, %v1460, -inf
  %1509 = vmax.xlane.f32.xlu0 %v1508
  %v1510 = vpop.xlane.xlu0 %1509
  %v1511 = vsub.f32 %v888, %v1465
  %v1512 = vsub.f32 %v893, %v1468
  %v1513 = vsub.f32 %v969, %v1471
  %v1514 = vsub.f32 %v974, %v1474
  %v1515 = vsub.f32 %v1050, %v1477
  %v1516 = vsub.f32 %v1055, %v1480
  %v1517 = vsub.f32 %v1131, %v1483
  %v1518 = vsub.f32 %v1136, %v1486
  %v1519 = vsub.f32 %v1212, %v1489
  %v1520 = vsub.f32 %v1217, %v1492
  %v1521 = vsub.f32 %v1293, %v1495
  %v1522 = vsub.f32 %v1298, %v1498
  %v1523 = vsub.f32 %v1374, %v1501
  %v1524 = vsub.f32 %v1379, %v1504
  %v1525 = vsub.f32 %v1455, %v1507
  %v1526 = vsub.f32 %v1460, %v1510
  %v1527 = vmul.f32 %v1511, 1.442695
  %v1528 = vpow.pop %v1527
  %v1529 = vmul.f32 %v1512, 1.442695
  %v1530 = vpow.pop %v1529
  %v1531 = vmul.f32 %v1513, 1.442695
  %v1532 = vpow.pop %v1531
  %v1533 = vmul.f32 %v1514, 1.442695
  %v1534 = vpow.pop %v1533
  %v1535 = vmul.f32 %v1515, 1.442695
  %v1536 = vpow.pop %v1535
  %v1537 = vmul.f32 %v1516, 1.442695
  %v1538 = vpow.pop %v1537
  %v1539 = vmul.f32 %v1517, 1.442695
  %v1540 = vpow.pop %v1539
  %v1541 = vmul.f32 %v1518, 1.442695
  %v1542 = vpow.pop %v1541
  %v1543 = vmul.f32 %v1519, 1.442695
  %v1544 = vpow.pop %v1543
  %v1545 = vmul.f32 %v1520, 1.442695
  %v1546 = vpow.pop %v1545
  %v1547 = vmul.f32 %v1521, 1.442695
  %v1548 = vpow.pop %v1547
  %v1549 = vmul.f32 %v1522, 1.442695
  %v1550 = vpow.pop %v1549
  %v1551 = vmul.f32 %v1523, 1.442695
  %v1552 = vpow.pop %v1551
  %v1553 = vmul.f32 %v1524, 1.442695
  %v1554 = vpow.pop %v1553
  %v1555 = vmul.f32 %v1525, 1.442695
  %v1556 = vpow.pop %v1555
  %v1557 = vmul.f32 %v1526, 1.442695
  %v1558 = vpow.pop %v1557
  %v1559 = vsel %vm814, %v1528, 0.0
  %1560 = vadd.xlane.f32.xlu0 %v1559
  %v1561 = vpop.xlane.xlu0 %1560
  %v1562 = vsel %vm814, %v1530, 0.0
  %1563 = vadd.xlane.f32.xlu0 %v1562
  %v1564 = vpop.xlane.xlu0 %1563
  %v1565 = vsel %vm814, %v1532, 0.0
  %1566 = vadd.xlane.f32.xlu0 %v1565
  %v1567 = vpop.xlane.xlu0 %1566
  %v1568 = vsel %vm814, %v1534, 0.0
  %1569 = vadd.xlane.f32.xlu0 %v1568
  %v1570 = vpop.xlane.xlu0 %1569
  %v1571 = vsel %vm814, %v1536, 0.0
  %1572 = vadd.xlane.f32.xlu0 %v1571
  %v1573 = vpop.xlane.xlu0 %1572
  %v1574 = vsel %vm814, %v1538, 0.0
  %1575 = vadd.xlane.f32.xlu0 %v1574
  %v1576 = vpop.xlane.xlu0 %1575
  %v1577 = vsel %vm814, %v1540, 0.0
  %1578 = vadd.xlane.f32.xlu0 %v1577
  %v1579 = vpop.xlane.xlu0 %1578
  %v1580 = vsel %vm814, %v1542, 0.0
  %1581 = vadd.xlane.f32.xlu0 %v1580
  %v1582 = vpop.xlane.xlu0 %1581
  %v1583 = vsel %vm814, %v1544, 0.0
  %1584 = vadd.xlane.f32.xlu0 %v1583
  %v1585 = vpop.xlane.xlu0 %1584
  %v1586 = vsel %vm814, %v1546, 0.0
  %1587 = vadd.xlane.f32.xlu0 %v1586
  %v1588 = vpop.xlane.xlu0 %1587
  %v1589 = vsel %vm814, %v1548, 0.0
  %1590 = vadd.xlane.f32.xlu0 %v1589
  %v1591 = vpop.xlane.xlu0 %1590
  %v1592 = vsel %vm814, %v1550, 0.0
  %1593 = vadd.xlane.f32.xlu0 %v1592
  %v1594 = vpop.xlane.xlu0 %1593
  %v1595 = vsel %vm814, %v1552, 0.0
  %1596 = vadd.xlane.f32.xlu0 %v1595
  %v1597 = vpop.xlane.xlu0 %1596
  %v1598 = vsel %vm814, %v1554, 0.0
  %1599 = vadd.xlane.f32.xlu0 %v1598
  %v1600 = vpop.xlane.xlu0 %1599
  %v1601 = vsel %vm814, %v1556, 0.0
  %1602 = vadd.xlane.f32.xlu0 %v1601
  %v1603 = vpop.xlane.xlu0 %1602
  %v1604 = vsel %vm814, %v1558, 0.0
  %1605 = vadd.xlane.f32.xlu0 %v1604
  %v1606 = vpop.xlane.xlu0 %1605
  %v1607 = vrcp.pop %v1561
  %v1608 = vmul.f32 %v1528, %v1607
  %v1609 = vrcp.pop %v1564
  %v1610 = vmul.f32 %v1530, %v1609
  %v1611 = vrcp.pop %v1567
  %v1612 = vmul.f32 %v1532, %v1611
  %v1613 = vrcp.pop %v1570
  %v1614 = vmul.f32 %v1534, %v1613
  %v1615 = vrcp.pop %v1573
  %v1616 = vmul.f32 %v1536, %v1615
  %v1617 = vrcp.pop %v1576
  %v1618 = vmul.f32 %v1538, %v1617
  %v1619 = vrcp.pop %v1579
  %v1620 = vmul.f32 %v1540, %v1619
  %v1621 = vrcp.pop %v1582
  %v1622 = vmul.f32 %v1542, %v1621
  %v1623 = vrcp.pop %v1585
  %v1624 = vmul.f32 %v1544, %v1623
  %v1625 = vrcp.pop %v1588
  %v1626 = vmul.f32 %v1546, %v1625
  %v1627 = vrcp.pop %v1591
  %v1628 = vmul.f32 %v1548, %v1627
  %v1629 = vrcp.pop %v1594
  %v1630 = vmul.f32 %v1550, %v1629
  %v1631 = vrcp.pop %v1597
  %v1632 = vmul.f32 %v1552, %v1631
  %v1633 = vrcp.pop %v1600
  %v1634 = vmul.f32 %v1554, %v1633
  %v1635 = vrcp.pop %v1603
  %v1636 = vmul.f32 %v1556, %v1635
  %v1637 = vrcp.pop %v1606
  %v1638 = vmul.f32 %v1558, %v1637
  %v1639 = vsel %vm814, %v1608, 0.0
  %v1640 = vsel %vm814, %v1610, 0.0
  %v1641 = vadd.f32 %v1639, %v1640
  %v1642 = vrot.slane %v1641, 4
  %v1643 = vadd.f32 %v1641, %v1642
  %v1644 = vrot.slane %v1643, 2
  %v1645 = vadd.f32 %v1643, %v1644
  %v1646 = vrot.slane %v1645, 1
  %v1647 = vadd.f32 %v1645, %v1646
  %v1648 = vsel %vm814, %v1612, 0.0
  %v1649 = vsel %vm814, %v1614, 0.0
  %v1650 = vadd.f32 %v1648, %v1649
  %v1651 = vrot.slane %v1650, 4
  %v1652 = vadd.f32 %v1650, %v1651
  %v1653 = vrot.slane %v1652, 2
  %v1654 = vadd.f32 %v1652, %v1653
  %v1655 = vrot.slane %v1654, 1
  %v1656 = vadd.f32 %v1654, %v1655
  %v1657 = vsel %vm814, %v1616, 0.0
  %v1658 = vsel %vm814, %v1618, 0.0
  %v1659 = vadd.f32 %v1657, %v1658
  %v1660 = vrot.slane %v1659, 4
  %v1661 = vadd.f32 %v1659, %v1660
  %v1662 = vrot.slane %v1661, 2
  %v1663 = vadd.f32 %v1661, %v1662
  %v1664 = vrot.slane %v1663, 1
  %v1665 = vadd.f32 %v1663, %v1664
  %v1666 = vsel %vm814, %v1620, 0.0
  %v1667 = vsel %vm814, %v1622, 0.0
  %v1668 = vadd.f32 %v1666, %v1667
  %v1669 = vrot.slane %v1668, 4
  %v1670 = vadd.f32 %v1668, %v1669
  %v1671 = vrot.slane %v1670, 2
  %v1672 = vadd.f32 %v1670, %v1671
  %v1673 = vrot.slane %v1672, 1
  %v1674 = vadd.f32 %v1672, %v1673
  %v1675 = vsel %vm814, %v1624, 0.0
  %v1676 = vsel %vm814, %v1626, 0.0
  %v1677 = vadd.f32 %v1675, %v1676
  %v1678 = vrot.slane %v1677, 4
  %v1679 = vadd.f32 %v1677, %v1678
  %v1680 = vrot.slane %v1679, 2
  %v1681 = vadd.f32 %v1679, %v1680
  %v1682 = vrot.slane %v1681, 1
  %v1683 = vadd.f32 %v1681, %v1682
  %v1684 = vsel %vm814, %v1628, 0.0
  %v1685 = vsel %vm814, %v1630, 0.0
  %v1686 = vadd.f32 %v1684, %v1685
  %v1687 = vrot.slane %v1686, 4
  %v1688 = vadd.f32 %v1686, %v1687
  %v1689 = vrot.slane %v1688, 2
  %v1690 = vadd.f32 %v1688, %v1689
  %v1691 = vrot.slane %v1690, 1
  %v1692 = vadd.f32 %v1690, %v1691
  %v1693 = vsel %vm814, %v1632, 0.0
  %v1694 = vsel %vm814, %v1634, 0.0
  %v1695 = vadd.f32 %v1693, %v1694
  %v1696 = vrot.slane %v1695, 4
  %v1697 = vadd.f32 %v1695, %v1696
  %v1698 = vrot.slane %v1697, 2
  %v1699 = vadd.f32 %v1697, %v1698
  %v1700 = vrot.slane %v1699, 1
  %v1701 = vadd.f32 %v1699, %v1700
  %v1702 = vsel %vm814, %v1636, 0.0
  %v1703 = vsel %vm814, %v1638, 0.0
  %v1704 = vadd.f32 %v1702, %v1703
  %v1705 = vrot.slane %v1704, 4
  %v1706 = vadd.f32 %v1704, %v1705
  %v1707 = vrot.slane %v1706, 2
  %v1708 = vadd.f32 %v1706, %v1707
  %v1709 = vrot.slane %v1708, 1
  %v1710 = vadd.f32 %v1708, %v1709
  %v1711 = vrcp.pop 16.0
  %v1712 = vmul.f32 %v1647, %v1711
  %v1713 = vmul.f32 %v1656, %v1711
  %v1714 = vmul.f32 %v1665, %v1711
  %v1715 = vmul.f32 %v1674, %v1711
  %v1716 = vmul.f32 %v1683, %v1711
  %v1717 = vmul.f32 %v1692, %v1711
  %v1718 = vmul.f32 %v1701, %v1711
  %v1719 = vmul.f32 %v1710, %v1711
  %1720 = vrot.lane.b32.xlu0 %v689, 96
  %v1721 = vpop.permute.xlu0 %1720
  %v1724 = vsel %vm814, %v1712, 0
  %1726 = vmatprep.subr.mxu0 0.0
  %1727 = vmatpush1.msra.mxu0 0.0
  %1728 = vmatprep.subr.mxu0 0.0
  %1729 = vmatpush1.msra.mxu0 0.0
  %1730 = vmatprep.subr.mxu0 0.0
  %1731 = vmatpush1.msra.mxu0 0.0
  %1732 = vmatprep.subr.mxu0 0.0
  %1733 = vmatpush1.msra.mxu0 0.0
  %1734 = vmatprep.subr.mxu0 0.0
  %1735 = vmatpush1.msra.mxu0 0.0
  %1736 = vmatprep.subr.mxu0 0.0
  %1737 = vmatpush1.msra.mxu0 0.0
  %1738 = vmatprep.subr.mxu0 0.0
  %1739 = vmatpush1.msra.mxu0 0.0
  %1740 = vmatprep.subr.mxu0 0.0
  %1741 = vmatpush1.msra.mxu0 0.0
  %1742 = vmatprep.subr.mxu0 0.0
  %1743 = vmatpush1.msra.mxu0 0.0
  %1744 = vmatprep.subr.mxu0 0.0
  %1745 = vmatpush1.msra.mxu0 0.0
  %1746 = vmatprep.subr.mxu0 0.0
  %1747 = vmatpush1.msra.mxu0 0.0
  %1748 = vmatprep.subr.mxu0 0.0
  %1749 = vmatpush1.msra.mxu0 0.0
  %1750 = vmatprep.subr.mxu0 0.0
  %1751 = vmatpush1.msra.mxu0 0.0
  %1752 = vmatprep.subr.mxu0 0.0
  %1753 = vmatpush1.msra.mxu0 0.0
  %1754 = vmatprep.subr.mxu0 0.0
  %1755 = vmatpush1.msra.mxu0 0.0
  %1756 = vmatprep.subr.mxu0 0.0
  %1757 = vmatpush1.msra.mxu0 %v1721
  %1758 = vmatprep.subr.mxu0 0.0
  %1759 = vmatpush2.msra.mxu0 0.0
  %1760 = vmatprep.subr.mxu0 0.0
  %1761 = vmatpush2.msra.mxu0 0.0
  %1762 = vmatprep.subr.mxu0 0.0
  %1763 = vmatpush2.msra.mxu0 0.0
  %1764 = vmatprep.subr.mxu0 0.0
  %1765 = vmatpush2.msra.mxu0 0.0
  %1766 = vmatprep.subr.mxu0 0.0
  %1767 = vmatpush2.msra.mxu0 0.0
  %1768 = vmatprep.subr.mxu0 0.0
  %1769 = vmatpush2.msra.mxu0 0.0
  %1770 = vmatprep.subr.mxu0 0.0
  %1771 = vmatpush2.msra.mxu0 0.0
  %1772 = vmatprep.subr.mxu0 0.0
  %1773 = vmatpush2.msra.mxu0 0.0
  %1774 = vmatprep.subr.mxu0 0.0
  %1775 = vmatpush2.msra.mxu0 0.0
  %1776 = vmatprep.subr.mxu0 0.0
  %1777 = vmatpush2.msra.mxu0 0.0
  %1778 = vmatprep.subr.mxu0 0.0
  %1779 = vmatpush2.msra.mxu0 0.0
  %1780 = vmatprep.subr.mxu0 0.0
  %1781 = vmatpush2.msra.mxu0 0.0
  %1782 = vmatprep.subr.mxu0 0.0
  %1783 = vmatpush2.msra.mxu0 0.0
  %1784 = vmatprep.subr.mxu0 0.0
  %1785 = vmatpush2.msra.mxu0 0.0
  %1786 = vmatprep.subr.mxu0 0.0
  %1787 = vmatpush2.msra.mxu0 0.0
  %1788 = vmatprep.subr.mxu0 0.0
  %1789 = vmatpush2.msra.mxu0 0.0
  %1790 = vmatprep.mubr.f32.mxu0 0.0
  %1791 = vmatmul.mubr.f32.gmra.mxu0 %v1724
  %v1792 = vpop.f32.mrf.mxu0
  %v1793 = vadd.f32 0.0, %v1792
  %v1794 = vpop.f32.mrf.mxu0
  %1795 = vdwg.mxu0
  %1796 = vrot.lane.b32.xlu0 %v692, 96
  %v1797 = vpop.permute.xlu0 %1796
  %v1800 = vsel %vm814, %v1713, 0
  %1802 = vmatprep.subr.mxu0 0.0
  %1803 = vmatpush1.msra.mxu0 0.0
  %1804 = vmatprep.subr.mxu0 0.0
  %1805 = vmatpush1.msra.mxu0 0.0
  %1806 = vmatprep.subr.mxu0 0.0
  %1807 = vmatpush1.msra.mxu0 0.0
  %1808 = vmatprep.subr.mxu0 0.0
  %1809 = vmatpush1.msra.mxu0 0.0
  %1810 = vmatprep.subr.mxu0 0.0
  %1811 = vmatpush1.msra.mxu0 0.0
  %1812 = vmatprep.subr.mxu0 0.0
  %1813 = vmatpush1.msra.mxu0 0.0
  %1814 = vmatprep.subr.mxu0 0.0
  %1815 = vmatpush1.msra.mxu0 0.0
  %1816 = vmatprep.subr.mxu0 0.0
  %1817 = vmatpush1.msra.mxu0 0.0
  %1818 = vmatprep.subr.mxu0 0.0
  %1819 = vmatpush1.msra.mxu0 0.0
  %1820 = vmatprep.subr.mxu0 0.0
  %1821 = vmatpush1.msra.mxu0 0.0
  %1822 = vmatprep.subr.mxu0 0.0
  %1823 = vmatpush1.msra.mxu0 0.0
  %1824 = vmatprep.subr.mxu0 0.0
  %1825 = vmatpush1.msra.mxu0 0.0
  %1826 = vmatprep.subr.mxu0 0.0
  %1827 = vmatpush1.msra.mxu0 0.0
  %1828 = vmatprep.subr.mxu0 0.0
  %1829 = vmatpush1.msra.mxu0 0.0
  %1830 = vmatprep.subr.mxu0 0.0
  %1831 = vmatpush1.msra.mxu0 0.0
  %1832 = vmatprep.subr.mxu0 0.0
  %1833 = vmatpush1.msra.mxu0 %v1797
  %1834 = vmatprep.subr.mxu0 0.0
  %1835 = vmatpush2.msra.mxu0 0.0
  %1836 = vmatprep.subr.mxu0 0.0
  %1837 = vmatpush2.msra.mxu0 0.0
  %1838 = vmatprep.subr.mxu0 0.0
  %1839 = vmatpush2.msra.mxu0 0.0
  %1840 = vmatprep.subr.mxu0 0.0
  %1841 = vmatpush2.msra.mxu0 0.0
  %1842 = vmatprep.subr.mxu0 0.0
  %1843 = vmatpush2.msra.mxu0 0.0
  %1844 = vmatprep.subr.mxu0 0.0
  %1845 = vmatpush2.msra.mxu0 0.0
  %1846 = vmatprep.subr.mxu0 0.0
  %1847 = vmatpush2.msra.mxu0 0.0
  %1848 = vmatprep.subr.mxu0 0.0
  %1849 = vmatpush2.msra.mxu0 0.0
  %1850 = vmatprep.subr.mxu0 0.0
  %1851 = vmatpush2.msra.mxu0 0.0
  %1852 = vmatprep.subr.mxu0 0.0
  %1853 = vmatpush2.msra.mxu0 0.0
  %1854 = vmatprep.subr.mxu0 0.0
  %1855 = vmatpush2.msra.mxu0 0.0
  %1856 = vmatprep.subr.mxu0 0.0
  %1857 = vmatpush2.msra.mxu0 0.0
  %1858 = vmatprep.subr.mxu0 0.0
  %1859 = vmatpush2.msra.mxu0 0.0
  %1860 = vmatprep.subr.mxu0 0.0
  %1861 = vmatpush2.msra.mxu0 0.0
  %1862 = vmatprep.subr.mxu0 0.0
  %1863 = vmatpush2.msra.mxu0 0.0
  %1864 = vmatprep.subr.mxu0 0.0
  %1865 = vmatpush2.msra.mxu0 0.0
  %1866 = vmatprep.mubr.f32.mxu0 0.0
  %1867 = vmatmul.mubr.f32.gmra.mxu0 %v1800
  %v1868 = vpop.f32.mrf.mxu0
  %v1869 = vadd.f32 0.0, %v1868
  %v1870 = vpop.f32.mrf.mxu0
  %1871 = vdwg.mxu0
  %1872 = vrot.lane.b32.xlu0 %v803, 96
  %v1873 = vpop.permute.xlu0 %1872
  %v1876 = vsel %vm814, %v1714, 0
  %1878 = vmatprep.subr.mxu0 0.0
  %1879 = vmatpush1.msra.mxu0 0.0
  %1880 = vmatprep.subr.mxu0 0.0
  %1881 = vmatpush1.msra.mxu0 0.0
  %1882 = vmatprep.subr.mxu0 0.0
  %1883 = vmatpush1.msra.mxu0 0.0
  %1884 = vmatprep.subr.mxu0 0.0
  %1885 = vmatpush1.msra.mxu0 0.0
  %1886 = vmatprep.subr.mxu0 0.0
  %1887 = vmatpush1.msra.mxu0 0.0
  %1888 = vmatprep.subr.mxu0 0.0
  %1889 = vmatpush1.msra.mxu0 0.0
  %1890 = vmatprep.subr.mxu0 0.0
  %1891 = vmatpush1.msra.mxu0 0.0
  %1892 = vmatprep.subr.mxu0 0.0
  %1893 = vmatpush1.msra.mxu0 0.0
  %1894 = vmatprep.subr.mxu0 0.0
  %1895 = vmatpush1.msra.mxu0 0.0
  %1896 = vmatprep.subr.mxu0 0.0
  %1897 = vmatpush1.msra.mxu0 0.0
  %1898 = vmatprep.subr.mxu0 0.0
  %1899 = vmatpush1.msra.mxu0 0.0
  %1900 = vmatprep.subr.mxu0 0.0
  %1901 = vmatpush1.msra.mxu0 0.0
  %1902 = vmatprep.subr.mxu0 0.0
  %1903 = vmatpush1.msra.mxu0 0.0
  %1904 = vmatprep.subr.mxu0 0.0
  %1905 = vmatpush1.msra.mxu0 0.0
  %1906 = vmatprep.subr.mxu0 0.0
  %1907 = vmatpush1.msra.mxu0 0.0
  %1908 = vmatprep.subr.mxu0 0.0
  %1909 = vmatpush1.msra.mxu0 %v1873
  %1910 = vmatprep.subr.mxu0 0.0
  %1911 = vmatpush2.msra.mxu0 0.0
  %1912 = vmatprep.subr.mxu0 0.0
  %1913 = vmatpush2.msra.mxu0 0.0
  %1914 = vmatprep.subr.mxu0 0.0
  %1915 = vmatpush2.msra.mxu0 0.0
  %1916 = vmatprep.subr.mxu0 0.0
  %1917 = vmatpush2.msra.mxu0 0.0
  %1918 = vmatprep.subr.mxu0 0.0
  %1919 = vmatpush2.msra.mxu0 0.0
  %1920 = vmatprep.subr.mxu0 0.0
  %1921 = vmatpush2.msra.mxu0 0.0
  %1922 = vmatprep.subr.mxu0 0.0
  %1923 = vmatpush2.msra.mxu0 0.0
  %1924 = vmatprep.subr.mxu0 0.0
  %1925 = vmatpush2.msra.mxu0 0.0
  %1926 = vmatprep.subr.mxu0 0.0
  %1927 = vmatpush2.msra.mxu0 0.0
  %1928 = vmatprep.subr.mxu0 0.0
  %1929 = vmatpush2.msra.mxu0 0.0
  %1930 = vmatprep.subr.mxu0 0.0
  %1931 = vmatpush2.msra.mxu0 0.0
  %1932 = vmatprep.subr.mxu0 0.0
  %1933 = vmatpush2.msra.mxu0 0.0
  %1934 = vmatprep.subr.mxu0 0.0
  %1935 = vmatpush2.msra.mxu0 0.0
  %1936 = vmatprep.subr.mxu0 0.0
  %1937 = vmatpush2.msra.mxu0 0.0
  %1938 = vmatprep.subr.mxu0 0.0
  %1939 = vmatpush2.msra.mxu0 0.0
  %1940 = vmatprep.subr.mxu0 0.0
  %1941 = vmatpush2.msra.mxu0 0.0
  %1942 = vmatprep.mubr.f32.mxu0 0.0
  %1943 = vmatmul.mubr.f32.gmra.mxu0 %v1876
  %v1944 = vpop.f32.mrf.mxu0
  %v1945 = vadd.f32 0.0, %v1944
  %v1946 = vpop.f32.mrf.mxu0
  %1947 = vdwg.mxu0
  %1948 = vrot.lane.b32.xlu0 %v805, 96
  %v1949 = vpop.permute.xlu0 %1948
  %v1952 = vsel %vm814, %v1715, 0
  %1954 = vmatprep.subr.mxu0 0.0
  %1955 = vmatpush1.msra.mxu0 0.0
  %1956 = vmatprep.subr.mxu0 0.0
  %1957 = vmatpush1.msra.mxu0 0.0
  %1958 = vmatprep.subr.mxu0 0.0
  %1959 = vmatpush1.msra.mxu0 0.0
  %1960 = vmatprep.subr.mxu0 0.0
  %1961 = vmatpush1.msra.mxu0 0.0
  %1962 = vmatprep.subr.mxu0 0.0
  %1963 = vmatpush1.msra.mxu0 0.0
  %1964 = vmatprep.subr.mxu0 0.0
  %1965 = vmatpush1.msra.mxu0 0.0
  %1966 = vmatprep.subr.mxu0 0.0
  %1967 = vmatpush1.msra.mxu0 0.0
  %1968 = vmatprep.subr.mxu0 0.0
  %1969 = vmatpush1.msra.mxu0 0.0
  %1970 = vmatprep.subr.mxu0 0.0
  %1971 = vmatpush1.msra.mxu0 0.0
  %1972 = vmatprep.subr.mxu0 0.0
  %1973 = vmatpush1.msra.mxu0 0.0
  %1974 = vmatprep.subr.mxu0 0.0
  %1975 = vmatpush1.msra.mxu0 0.0
  %1976 = vmatprep.subr.mxu0 0.0
  %1977 = vmatpush1.msra.mxu0 0.0
  %1978 = vmatprep.subr.mxu0 0.0
  %1979 = vmatpush1.msra.mxu0 0.0
  %1980 = vmatprep.subr.mxu0 0.0
  %1981 = vmatpush1.msra.mxu0 0.0
  %1982 = vmatprep.subr.mxu0 0.0
  %1983 = vmatpush1.msra.mxu0 0.0
  %1984 = vmatprep.subr.mxu0 0.0
  %1985 = vmatpush1.msra.mxu0 %v1949
  %1986 = vmatprep.subr.mxu0 0.0
  %1987 = vmatpush2.msra.mxu0 0.0
  %1988 = vmatprep.subr.mxu0 0.0
  %1989 = vmatpush2.msra.mxu0 0.0
  %1990 = vmatprep.subr.mxu0 0.0
  %1991 = vmatpush2.msra.mxu0 0.0
  %1992 = vmatprep.subr.mxu0 0.0
  %1993 = vmatpush2.msra.mxu0 0.0
  %1994 = vmatprep.subr.mxu0 0.0
  %1995 = vmatpush2.msra.mxu0 0.0
  %1996 = vmatprep.subr.mxu0 0.0
  %1997 = vmatpush2.msra.mxu0 0.0
  %1998 = vmatprep.subr.mxu0 0.0
  %1999 = vmatpush2.msra.mxu0 0.0
  %2000 = vmatprep.subr.mxu0 0.0
  %2001 = vmatpush2.msra.mxu0 0.0
  %2002 = vmatprep.subr.mxu0 0.0
  %2003 = vmatpush2.msra.mxu0 0.0
  %2004 = vmatprep.subr.mxu0 0.0
  %2005 = vmatpush2.msra.mxu0 0.0
  %2006 = vmatprep.subr.mxu0 0.0
  %2007 = vmatpush2.msra.mxu0 0.0
  %2008 = vmatprep.subr.mxu0 0.0
  %2009 = vmatpush2.msra.mxu0 0.0
  %2010 = vmatprep.subr.mxu0 0.0
  %2011 = vmatpush2.msra.mxu0 0.0
  %2012 = vmatprep.subr.mxu0 0.0
  %2013 = vmatpush2.msra.mxu0 0.0
  %2014 = vmatprep.subr.mxu0 0.0
  %2015 = vmatpush2.msra.mxu0 0.0
  %2016 = vmatprep.subr.mxu0 0.0
  %2017 = vmatpush2.msra.mxu0 0.0
  %2018 = vmatprep.mubr.f32.mxu0 0.0
  %2019 = vmatmul.mubr.f32.gmra.mxu0 %v1952
  %v2020 = vpop.f32.mrf.mxu0
  %v2021 = vadd.f32 0.0, %v2020
  %v2022 = vpop.f32.mrf.mxu0
  %2023 = vdwg.mxu0
  %2024 = vrot.lane.b32.xlu0 %v807, 96
  %v2025 = vpop.permute.xlu0 %2024
  %v2028 = vsel %vm814, %v1716, 0
  %2030 = vmatprep.subr.mxu0 0.0
  %2031 = vmatpush1.msra.mxu0 0.0
  %2032 = vmatprep.subr.mxu0 0.0
  %2033 = vmatpush1.msra.mxu0 0.0
  %2034 = vmatprep.subr.mxu0 0.0
  %2035 = vmatpush1.msra.mxu0 0.0
  %2036 = vmatprep.subr.mxu0 0.0
  %2037 = vmatpush1.msra.mxu0 0.0
  %2038 = vmatprep.subr.mxu0 0.0
  %2039 = vmatpush1.msra.mxu0 0.0
  %2040 = vmatprep.subr.mxu0 0.0
  %2041 = vmatpush1.msra.mxu0 0.0
  %2042 = vmatprep.subr.mxu0 0.0
  %2043 = vmatpush1.msra.mxu0 0.0
  %2044 = vmatprep.subr.mxu0 0.0
  %2045 = vmatpush1.msra.mxu0 0.0
  %2046 = vmatprep.subr.mxu0 0.0
  %2047 = vmatpush1.msra.mxu0 0.0
  %2048 = vmatprep.subr.mxu0 0.0
  %2049 = vmatpush1.msra.mxu0 0.0
  %2050 = vmatprep.subr.mxu0 0.0
  %2051 = vmatpush1.msra.mxu0 0.0
  %2052 = vmatprep.subr.mxu0 0.0
  %2053 = vmatpush1.msra.mxu0 0.0
  %2054 = vmatprep.subr.mxu0 0.0
  %2055 = vmatpush1.msra.mxu0 0.0
  %2056 = vmatprep.subr.mxu0 0.0
  %2057 = vmatpush1.msra.mxu0 0.0
  %2058 = vmatprep.subr.mxu0 0.0
  %2059 = vmatpush1.msra.mxu0 0.0
  %2060 = vmatprep.subr.mxu0 0.0
  %2061 = vmatpush1.msra.mxu0 %v2025
  %2062 = vmatprep.subr.mxu0 0.0
  %2063 = vmatpush2.msra.mxu0 0.0
  %2064 = vmatprep.subr.mxu0 0.0
  %2065 = vmatpush2.msra.mxu0 0.0
  %2066 = vmatprep.subr.mxu0 0.0
  %2067 = vmatpush2.msra.mxu0 0.0
  %2068 = vmatprep.subr.mxu0 0.0
  %2069 = vmatpush2.msra.mxu0 0.0
  %2070 = vmatprep.subr.mxu0 0.0
  %2071 = vmatpush2.msra.mxu0 0.0
  %2072 = vmatprep.subr.mxu0 0.0
  %2073 = vmatpush2.msra.mxu0 0.0
  %2074 = vmatprep.subr.mxu0 0.0
  %2075 = vmatpush2.msra.mxu0 0.0
  %2076 = vmatprep.subr.mxu0 0.0
  %2077 = vmatpush2.msra.mxu0 0.0
  %2078 = vmatprep.subr.mxu0 0.0
  %2079 = vmatpush2.msra.mxu0 0.0
  %2080 = vmatprep.subr.mxu0 0.0
  %2081 = vmatpush2.msra.mxu0 0.0
  %2082 = vmatprep.subr.mxu0 0.0
  %2083 = vmatpush2.msra.mxu0 0.0
  %2084 = vmatprep.subr.mxu0 0.0
  %2085 = vmatpush2.msra.mxu0 0.0
  %2086 = vmatprep.subr.mxu0 0.0
  %2087 = vmatpush2.msra.mxu0 0.0
  %2088 = vmatprep.subr.mxu0 0.0
  %2089 = vmatpush2.msra.mxu0 0.0
  %2090 = vmatprep.subr.mxu0 0.0
  %2091 = vmatpush2.msra.mxu0 0.0
  %2092 = vmatprep.subr.mxu0 0.0
  %2093 = vmatpush2.msra.mxu0 0.0
  %2094 = vmatprep.mubr.f32.mxu0 0.0
  %2095 = vmatmul.mubr.f32.gmra.mxu0 %v2028
  %v2096 = vpop.f32.mrf.mxu0
  %v2097 = vadd.f32 0.0, %v2096
  %v2098 = vpop.f32.mrf.mxu0
  %2099 = vdwg.mxu0
  %2100 = vrot.lane.b32.xlu0 %v809, 96
  %v2101 = vpop.permute.xlu0 %2100
  %v2104 = vsel %vm814, %v1717, 0
  %2106 = vmatprep.subr.mxu0 0.0
  %2107 = vmatpush1.msra.mxu0 0.0
  %2108 = vmatprep.subr.mxu0 0.0
  %2109 = vmatpush1.msra.mxu0 0.0
  %2110 = vmatprep.subr.mxu0 0.0
  %2111 = vmatpush1.msra.mxu0 0.0
  %2112 = vmatprep.subr.mxu0 0.0
  %2113 = vmatpush1.msra.mxu0 0.0
  %2114 = vmatprep.subr.mxu0 0.0
  %2115 = vmatpush1.msra.mxu0 0.0
  %2116 = vmatprep.subr.mxu0 0.0
  %2117 = vmatpush1.msra.mxu0 0.0
  %2118 = vmatprep.subr.mxu0 0.0
  %2119 = vmatpush1.msra.mxu0 0.0
  %2120 = vmatprep.subr.mxu0 0.0
  %2121 = vmatpush1.msra.mxu0 0.0
  %2122 = vmatprep.subr.mxu0 0.0
  %2123 = vmatpush1.msra.mxu0 0.0
  %2124 = vmatprep.subr.mxu0 0.0
  %2125 = vmatpush1.msra.mxu0 0.0
  %2126 = vmatprep.subr.mxu0 0.0
  %2127 = vmatpush1.msra.mxu0 0.0
  %2128 = vmatprep.subr.mxu0 0.0
  %2129 = vmatpush1.msra.mxu0 0.0
  %2130 = vmatprep.subr.mxu0 0.0
  %2131 = vmatpush1.msra.mxu0 0.0
  %2132 = vmatprep.subr.mxu0 0.0
  %2133 = vmatpush1.msra.mxu0 0.0
  %2134 = vmatprep.subr.mxu0 0.0
  %2135 = vmatpush1.msra.mxu0 0.0
  %2136 = vmatprep.subr.mxu0 0.0
  %2137 = vmatpush1.msra.mxu0 %v2101
  %2138 = vmatprep.subr.mxu0 0.0
  %2139 = vmatpush2.msra.mxu0 0.0
  %2140 = vmatprep.subr.mxu0 0.0
  %2141 = vmatpush2.msra.mxu0 0.0
  %2142 = vmatprep.subr.mxu0 0.0
  %2143 = vmatpush2.msra.mxu0 0.0
  %2144 = vmatprep.subr.mxu0 0.0
  %2145 = vmatpush2.msra.mxu0 0.0
  %2146 = vmatprep.subr.mxu0 0.0
  %2147 = vmatpush2.msra.mxu0 0.0
  %2148 = vmatprep.subr.mxu0 0.0
  %2149 = vmatpush2.msra.mxu0 0.0
  %2150 = vmatprep.subr.mxu0 0.0
  %2151 = vmatpush2.msra.mxu0 0.0
  %2152 = vmatprep.subr.mxu0 0.0
  %2153 = vmatpush2.msra.mxu0 0.0
  %2154 = vmatprep.subr.mxu0 0.0
  %2155 = vmatpush2.msra.mxu0 0.0
  %2156 = vmatprep.subr.mxu0 0.0
  %2157 = vmatpush2.msra.mxu0 0.0
  %2158 = vmatprep.subr.mxu0 0.0
  %2159 = vmatpush2.msra.mxu0 0.0
  %2160 = vmatprep.subr.mxu0 0.0
  %2161 = vmatpush2.msra.mxu0 0.0
  %2162 = vmatprep.subr.mxu0 0.0
  %2163 = vmatpush2.msra.mxu0 0.0
  %2164 = vmatprep.subr.mxu0 0.0
  %2165 = vmatpush2.msra.mxu0 0.0
  %2166 = vmatprep.subr.mxu0 0.0
  %2167 = vmatpush2.msra.mxu0 0.0
  %2168 = vmatprep.subr.mxu0 0.0
  %2169 = vmatpush2.msra.mxu0 0.0
  %2170 = vmatprep.mubr.f32.mxu0 0.0
  %2171 = vmatmul.mubr.f32.gmra.mxu0 %v2104
  %v2172 = vpop.f32.mrf.mxu0
  %v2173 = vadd.f32 0.0, %v2172
  %v2174 = vpop.f32.mrf.mxu0
  %2175 = vdwg.mxu0
  %2176 = vrot.lane.b32.xlu0 %v811, 96
  %v2177 = vpop.permute.xlu0 %2176
  %v2180 = vsel %vm814, %v1718, 0
  %2182 = vmatprep.subr.mxu0 0.0
  %2183 = vmatpush1.msra.mxu0 0.0
  %2184 = vmatprep.subr.mxu0 0.0
  %2185 = vmatpush1.msra.mxu0 0.0
  %2186 = vmatprep.subr.mxu0 0.0
  %2187 = vmatpush1.msra.mxu0 0.0
  %2188 = vmatprep.subr.mxu0 0.0
  %2189 = vmatpush1.msra.mxu0 0.0
  %2190 = vmatprep.subr.mxu0 0.0
  %2191 = vmatpush1.msra.mxu0 0.0
  %2192 = vmatprep.subr.mxu0 0.0
  %2193 = vmatpush1.msra.mxu0 0.0
  %2194 = vmatprep.subr.mxu0 0.0
  %2195 = vmatpush1.msra.mxu0 0.0
  %2196 = vmatprep.subr.mxu0 0.0
  %2197 = vmatpush1.msra.mxu0 0.0
  %2198 = vmatprep.subr.mxu0 0.0
  %2199 = vmatpush1.msra.mxu0 0.0
  %2200 = vmatprep.subr.mxu0 0.0
  %2201 = vmatpush1.msra.mxu0 0.0
  %2202 = vmatprep.subr.mxu0 0.0
  %2203 = vmatpush1.msra.mxu0 0.0
  %2204 = vmatprep.subr.mxu0 0.0
  %2205 = vmatpush1.msra.mxu0 0.0
  %2206 = vmatprep.subr.mxu0 0.0
  %2207 = vmatpush1.msra.mxu0 0.0
  %2208 = vmatprep.subr.mxu0 0.0
  %2209 = vmatpush1.msra.mxu0 0.0
  %2210 = vmatprep.subr.mxu0 0.0
  %2211 = vmatpush1.msra.mxu0 0.0
  %2212 = vmatprep.subr.mxu0 0.0
  %2213 = vmatpush1.msra.mxu0 %v2177
  %2214 = vmatprep.subr.mxu0 0.0
  %2215 = vmatpush2.msra.mxu0 0.0
  %2216 = vmatprep.subr.mxu0 0.0
  %2217 = vmatpush2.msra.mxu0 0.0
  %2218 = vmatprep.subr.mxu0 0.0
  %2219 = vmatpush2.msra.mxu0 0.0
  %2220 = vmatprep.subr.mxu0 0.0
  %2221 = vmatpush2.msra.mxu0 0.0
  %2222 = vmatprep.subr.mxu0 0.0
  %2223 = vmatpush2.msra.mxu0 0.0
  %2224 = vmatprep.subr.mxu0 0.0
  %2225 = vmatpush2.msra.mxu0 0.0
  %2226 = vmatprep.subr.mxu0 0.0
  %2227 = vmatpush2.msra.mxu0 0.0
  %2228 = vmatprep.subr.mxu0 0.0
  %2229 = vmatpush2.msra.mxu0 0.0
  %2230 = vmatprep.subr.mxu0 0.0
  %2231 = vmatpush2.msra.mxu0 0.0
  %2232 = vmatprep.subr.mxu0 0.0
  %2233 = vmatpush2.msra.mxu0 0.0
  %2234 = vmatprep.subr.mxu0 0.0
  %2235 = vmatpush2.msra.mxu0 0.0
  %2236 = vmatprep.subr.mxu0 0.0
  %2237 = vmatpush2.msra.mxu0 0.0
  %2238 = vmatprep.subr.mxu0 0.0
  %2239 = vmatpush2.msra.mxu0 0.0
  %2240 = vmatprep.subr.mxu0 0.0
  %2241 = vmatpush2.msra.mxu0 0.0
  %2242 = vmatprep.subr.mxu0 0.0
  %2243 = vmatpush2.msra.mxu0 0.0
  %2244 = vmatprep.subr.mxu0 0.0
  %2245 = vmatpush2.msra.mxu0 0.0
  %2246 = vmatprep.mubr.f32.mxu0 0.0
  %2247 = vmatmul.mubr.f32.gmra.mxu0 %v2180
  %v2248 = vpop.f32.mrf.mxu0
  %v2249 = vadd.f32 0.0, %v2248
  %v2250 = vpop.f32.mrf.mxu0
  %2251 = vdwg.mxu0
  %2252 = vrot.lane.b32.xlu0 %v813, 96
  %v2253 = vpop.permute.xlu0 %2252
  %v2256 = vsel %vm814, %v1719, 0
  %2258 = vmatprep.subr.mxu0 0.0
  %2259 = vmatpush1.msra.mxu0 0.0
  %2260 = vmatprep.subr.mxu0 0.0
  %2261 = vmatpush1.msra.mxu0 0.0
  %2262 = vmatprep.subr.mxu0 0.0
  %2263 = vmatpush1.msra.mxu0 0.0
  %2264 = vmatprep.subr.mxu0 0.0
  %2265 = vmatpush1.msra.mxu0 0.0
  %2266 = vmatprep.subr.mxu0 0.0
  %2267 = vmatpush1.msra.mxu0 0.0
  %2268 = vmatprep.subr.mxu0 0.0
  %2269 = vmatpush1.msra.mxu0 0.0
  %2270 = vmatprep.subr.mxu0 0.0
  %2271 = vmatpush1.msra.mxu0 0.0
  %2272 = vmatprep.subr.mxu0 0.0
  %2273 = vmatpush1.msra.mxu0 0.0
  %2274 = vmatprep.subr.mxu0 0.0
  %2275 = vmatpush1.msra.mxu0 0.0
  %2276 = vmatprep.subr.mxu0 0.0
  %2277 = vmatpush1.msra.mxu0 0.0
  %2278 = vmatprep.subr.mxu0 0.0
  %2279 = vmatpush1.msra.mxu0 0.0
  %2280 = vmatprep.subr.mxu0 0.0
  %2281 = vmatpush1.msra.mxu0 0.0
  %2282 = vmatprep.subr.mxu0 0.0
  %2283 = vmatpush1.msra.mxu0 0.0
  %2284 = vmatprep.subr.mxu0 0.0
  %2285 = vmatpush1.msra.mxu0 0.0
  %2286 = vmatprep.subr.mxu0 0.0
  %2287 = vmatpush1.msra.mxu0 0.0
  %2288 = vmatprep.subr.mxu0 0.0
  %2289 = vmatpush1.msra.mxu0 %v2253
  %2290 = vmatprep.subr.mxu0 0.0
  %2291 = vmatpush2.msra.mxu0 0.0
  %2292 = vmatprep.subr.mxu0 0.0
  %2293 = vmatpush2.msra.mxu0 0.0
  %2294 = vmatprep.subr.mxu0 0.0
  %2295 = vmatpush2.msra.mxu0 0.0
  %2296 = vmatprep.subr.mxu0 0.0
  %2297 = vmatpush2.msra.mxu0 0.0
  %2298 = vmatprep.subr.mxu0 0.0
  %2299 = vmatpush2.msra.mxu0 0.0
  %2300 = vmatprep.subr.mxu0 0.0
  %2301 = vmatpush2.msra.mxu0 0.0
  %2302 = vmatprep.subr.mxu0 0.0
  %2303 = vmatpush2.msra.mxu0 0.0
  %2304 = vmatprep.subr.mxu0 0.0
  %2305 = vmatpush2.msra.mxu0 0.0
  %2306 = vmatprep.subr.mxu0 0.0
  %2307 = vmatpush2.msra.mxu0 0.0
  %2308 = vmatprep.subr.mxu0 0.0
  %2309 = vmatpush2.msra.mxu0 0.0
  %2310 = vmatprep.subr.mxu0 0.0
  %2311 = vmatpush2.msra.mxu0 0.0
  %2312 = vmatprep.subr.mxu0 0.0
  %2313 = vmatpush2.msra.mxu0 0.0
  %2314 = vmatprep.subr.mxu0 0.0
  %2315 = vmatpush2.msra.mxu0 0.0
  %2316 = vmatprep.subr.mxu0 0.0
  %2317 = vmatpush2.msra.mxu0 0.0
  %2318 = vmatprep.subr.mxu0 0.0
  %2319 = vmatpush2.msra.mxu0 0.0
  %2320 = vmatprep.subr.mxu0 0.0
  %2321 = vmatpush2.msra.mxu0 0.0
  %2322 = vmatprep.mubr.f32.mxu0 0.0
  %2323 = vmatmul.mubr.f32.gmra.mxu0 %v2256
  %v2324 = vpop.f32.mrf.mxu0
  %v2325 = vadd.f32 0.0, %v2324
  %v2326 = vpop.f32.mrf.mxu0
  %2327 = vdwg.mxu0
  %v2330 = vrot.slane %v1869, 7
  %v2331 = vsel %vm559, %v2330, %v1793
  %v2335 = vrot.slane %v2021, 7
  %v2336 = vsel %vm559, %v2335, %v1945
  %2337 = vrot.lane.b32.xlu0 %v2336, 8
  %v2338 = vpop.permute.xlu0 %2337
  %v2342 = vrot.slane %v2173, 7
  %v2343 = vsel %vm559, %v2342, %v2097
  %2344 = vrot.lane.b32.xlu0 %v2343, 16
  %v2345 = vpop.permute.xlu0 %2344
  %v2349 = vrot.slane %v2325, 7
  %v2350 = vsel %vm559, %v2349, %v2249
  %2351 = vrot.lane.b32.xlu0 %v2350, 24
  %v2352 = vpop.permute.xlu0 %2351
  %v2354 = vsel %vm814, %v2331, %v2338
  %vm2355 = vcmask 130048
  %v2356 = vsel %vm2355, %v2354, %v2345
  %vm2357 = vcmask 195584
  %v2358 = vsel %vm2357, %v2356, %v2352
  %2359 = vrot.lane.b32.xlu0 %v689, 64
  %v2360 = vpop.permute.xlu0 %2359
  %2361 = vrot.lane.b32.xlu0 %v758, 96
  %v2362 = vpop.permute.xlu0 %2361
  %2363 = vrot.lane.b32.xlu0 %v761, 96
  %v2364 = vpop.permute.xlu0 %2363
  %v2365 = vsel %vm814, %v2360, 0
  %v2367 = vsel %vm814, %v2362, 0
  %v2369 = vsel %vm814, %v2364, 0
  %2371 = vmatprep.subr.mxu0 0.0
  %2372 = vmatpush1.xpose.msra.mxu0 0.0
  %2373 = vmatprep.subr.mxu0 0.0
  %2374 = vmatpush1.xpose.msra.mxu0 0.0
  %2375 = vmatprep.subr.mxu0 0.0
  %2376 = vmatpush1.xpose.msra.mxu0 0.0
  %2377 = vmatprep.subr.mxu0 0.0
  %2378 = vmatpush1.xpose.msra.mxu0 0.0
  %2379 = vmatprep.subr.mxu0 0.0
  %2380 = vmatpush1.xpose.msra.mxu0 0.0
  %2381 = vmatprep.subr.mxu0 0.0
  %2382 = vmatpush1.xpose.msra.mxu0 0.0
  %2383 = vmatprep.subr.mxu0 0.0
  %2384 = vmatpush1.xpose.msra.mxu0 0.0
  %2385 = vmatprep.subr.mxu0 0.0
  %2386 = vmatpush1.xpose.msra.mxu0 0.0
  %2387 = vmatprep.subr.mxu0 0.0
  %2388 = vmatpush1.xpose.msra.mxu0 0.0
  %2389 = vmatprep.subr.mxu0 0.0
  %2390 = vmatpush1.xpose.msra.mxu0 0.0
  %2391 = vmatprep.subr.mxu0 0.0
  %2392 = vmatpush1.xpose.msra.mxu0 0.0
  %2393 = vmatprep.subr.mxu0 0.0
  %2394 = vmatpush1.xpose.msra.mxu0 0.0
  %2395 = vmatprep.subr.mxu0 0.0
  %2396 = vmatpush1.xpose.msra.mxu0 0.0
  %2397 = vmatprep.subr.mxu0 0.0
  %2398 = vmatpush1.xpose.msra.mxu0 0.0
  %2399 = vmatprep.subr.mxu0 0.0
  %2400 = vmatpush1.xpose.msra.mxu0 %v2369
  %2401 = vmatprep.subr.mxu0 0.0
  %2402 = vmatpush1.xpose.msra.mxu0 %v2367
  %2403 = vmatprep.subr.mxu0 0.0
  %2404 = vmatpush2.xpose.msra.mxu0 0.0
  %2405 = vmatprep.subr.mxu0 0.0
  %2406 = vmatpush2.xpose.msra.mxu0 0.0
  %2407 = vmatprep.subr.mxu0 0.0
  %2408 = vmatpush2.xpose.msra.mxu0 0.0
  %2409 = vmatprep.subr.mxu0 0.0
  %2410 = vmatpush2.xpose.msra.mxu0 0.0
  %2411 = vmatprep.subr.mxu0 0.0
  %2412 = vmatpush2.xpose.msra.mxu0 0.0
  %2413 = vmatprep.subr.mxu0 0.0
  %2414 = vmatpush2.xpose.msra.mxu0 0.0
  %2415 = vmatprep.subr.mxu0 0.0
  %2416 = vmatpush2.xpose.msra.mxu0 0.0
  %2417 = vmatprep.subr.mxu0 0.0
  %2418 = vmatpush2.xpose.msra.mxu0 0.0
  %2419 = vmatprep.subr.mxu0 0.0
  %2420 = vmatpush2.xpose.msra.mxu0 0.0
  %2421 = vmatprep.subr.mxu0 0.0
  %2422 = vmatpush2.xpose.msra.mxu0 0.0
  %2423 = vmatprep.subr.mxu0 0.0
  %2424 = vmatpush2.xpose.msra.mxu0 0.0
  %2425 = vmatprep.subr.mxu0 0.0
  %2426 = vmatpush2.xpose.msra.mxu0 0.0
  %2427 = vmatprep.subr.mxu0 0.0
  %2428 = vmatpush2.xpose.msra.mxu0 0.0
  %2429 = vmatprep.subr.mxu0 0.0
  %2430 = vmatpush2.xpose.msra.mxu0 0.0
  %2431 = vmatprep.subr.mxu0 0.0
  %2432 = vmatpush2.xpose.msra.mxu0 0.0
  %2433 = vmatprep.subr.mxu0 0.0
  %2434 = vmatpush2.xpose.msra.mxu0 0.0
  %2435 = vmatprep.mubr.f32.mxu0 0.0
  %2436 = vmatmul.mubr.f32.gmra.mxu0 %v2365
  %v2437 = vpop.f32.mrf.mxu0
  %v2438 = vadd.f32 0.0, %v2437
  %v2439 = vpop.f32.mrf.mxu0
  %2440 = vdwg.mxu0
  %2441 = vrot.lane.b32.xlu0 %v692, 64
  %v2442 = vpop.permute.xlu0 %2441
  %2443 = vrot.lane.b32.xlu0 %v766, 96
  %v2444 = vpop.permute.xlu0 %2443
  %2445 = vrot.lane.b32.xlu0 %v769, 96
  %v2446 = vpop.permute.xlu0 %2445
  %v2447 = vsel %vm814, %v2442, 0
  %v2449 = vsel %vm814, %v2444, 0
  %v2451 = vsel %vm814, %v2446, 0
  %2453 = vmatprep.subr.mxu0 0.0
  %2454 = vmatpush1.xpose.msra.mxu0 0.0
  %2455 = vmatprep.subr.mxu0 0.0
  %2456 = vmatpush1.xpose.msra.mxu0 0.0
  %2457 = vmatprep.subr.mxu0 0.0
  %2458 = vmatpush1.xpose.msra.mxu0 0.0
  %2459 = vmatprep.subr.mxu0 0.0
  %2460 = vmatpush1.xpose.msra.mxu0 0.0
  %2461 = vmatprep.subr.mxu0 0.0
  %2462 = vmatpush1.xpose.msra.mxu0 0.0
  %2463 = vmatprep.subr.mxu0 0.0
  %2464 = vmatpush1.xpose.msra.mxu0 0.0
  %2465 = vmatprep.subr.mxu0 0.0
  %2466 = vmatpush1.xpose.msra.mxu0 0.0
  %2467 = vmatprep.subr.mxu0 0.0
  %2468 = vmatpush1.xpose.msra.mxu0 0.0
  %2469 = vmatprep.subr.mxu0 0.0
  %2470 = vmatpush1.xpose.msra.mxu0 0.0
  %2471 = vmatprep.subr.mxu0 0.0
  %2472 = vmatpush1.xpose.msra.mxu0 0.0
  %2473 = vmatprep.subr.mxu0 0.0
  %2474 = vmatpush1.xpose.msra.mxu0 0.0
  %2475 = vmatprep.subr.mxu0 0.0
  %2476 = vmatpush1.xpose.msra.mxu0 0.0
  %2477 = vmatprep.subr.mxu0 0.0
  %2478 = vmatpush1.xpose.msra.mxu0 0.0
  %2479 = vmatprep.subr.mxu0 0.0
  %2480 = vmatpush1.xpose.msra.mxu0 0.0
  %2481 = vmatprep.subr.mxu0 0.0
  %2482 = vmatpush1.xpose.msra.mxu0 %v2451
  %2483 = vmatprep.subr.mxu0 0.0
  %2484 = vmatpush1.xpose.msra.mxu0 %v2449
  %2485 = vmatprep.subr.mxu0 0.0
  %2486 = vmatpush2.xpose.msra.mxu0 0.0
  %2487 = vmatprep.subr.mxu0 0.0
  %2488 = vmatpush2.xpose.msra.mxu0 0.0
  %2489 = vmatprep.subr.mxu0 0.0
  %2490 = vmatpush2.xpose.msra.mxu0 0.0
  %2491 = vmatprep.subr.mxu0 0.0
  %2492 = vmatpush2.xpose.msra.mxu0 0.0
  %2493 = vmatprep.subr.mxu0 0.0
  %2494 = vmatpush2.xpose.msra.mxu0 0.0
  %2495 = vmatprep.subr.mxu0 0.0
  %2496 = vmatpush2.xpose.msra.mxu0 0.0
  %2497 = vmatprep.subr.mxu0 0.0
  %2498 = vmatpush2.xpose.msra.mxu0 0.0
  %2499 = vmatprep.subr.mxu0 0.0
  %2500 = vmatpush2.xpose.msra.mxu0 0.0
  %2501 = vmatprep.subr.mxu0 0.0
  %2502 = vmatpush2.xpose.msra.mxu0 0.0
  %2503 = vmatprep.subr.mxu0 0.0
  %2504 = vmatpush2.xpose.msra.mxu0 0.0
  %2505 = vmatprep.subr.mxu0 0.0
  %2506 = vmatpush2.xpose.msra.mxu0 0.0
  %2507 = vmatprep.subr.mxu0 0.0
  %2508 = vmatpush2.xpose.msra.mxu0 0.0
  %2509 = vmatprep.subr.mxu0 0.0
  %2510 = vmatpush2.xpose.msra.mxu0 0.0
  %2511 = vmatprep.subr.mxu0 0.0
  %2512 = vmatpush2.xpose.msra.mxu0 0.0
  %2513 = vmatprep.subr.mxu0 0.0
  %2514 = vmatpush2.xpose.msra.mxu0 0.0
  %2515 = vmatprep.subr.mxu0 0.0
  %2516 = vmatpush2.xpose.msra.mxu0 0.0
  %2517 = vmatprep.mubr.f32.mxu0 0.0
  %2518 = vmatmul.mubr.f32.gmra.mxu0 %v2447
  %v2519 = vpop.f32.mrf.mxu0
  %v2520 = vadd.f32 0.0, %v2519
  %v2521 = vpop.f32.mrf.mxu0
  %2522 = vdwg.mxu0
  %2523 = vrot.lane.b32.xlu0 %v803, 64
  %v2524 = vpop.permute.xlu0 %2523
  %2525 = vrot.lane.b32.xlu0 %v777, 96
  %v2526 = vpop.permute.xlu0 %2525
  %2527 = vrot.lane.b32.xlu0 %v779, 96
  %v2528 = vpop.permute.xlu0 %2527
  %v2529 = vsel %vm814, %v2524, 0
  %v2531 = vsel %vm814, %v2526, 0
  %v2533 = vsel %vm814, %v2528, 0
  %2535 = vmatprep.subr.mxu0 0.0
  %2536 = vmatpush1.xpose.msra.mxu0 0.0
  %2537 = vmatprep.subr.mxu0 0.0
  %2538 = vmatpush1.xpose.msra.mxu0 0.0
  %2539 = vmatprep.subr.mxu0 0.0
  %2540 = vmatpush1.xpose.msra.mxu0 0.0
  %2541 = vmatprep.subr.mxu0 0.0
  %2542 = vmatpush1.xpose.msra.mxu0 0.0
  %2543 = vmatprep.subr.mxu0 0.0
  %2544 = vmatpush1.xpose.msra.mxu0 0.0
  %2545 = vmatprep.subr.mxu0 0.0
  %2546 = vmatpush1.xpose.msra.mxu0 0.0
  %2547 = vmatprep.subr.mxu0 0.0
  %2548 = vmatpush1.xpose.msra.mxu0 0.0
  %2549 = vmatprep.subr.mxu0 0.0
  %2550 = vmatpush1.xpose.msra.mxu0 0.0
  %2551 = vmatprep.subr.mxu0 0.0
  %2552 = vmatpush1.xpose.msra.mxu0 0.0
  %2553 = vmatprep.subr.mxu0 0.0
  %2554 = vmatpush1.xpose.msra.mxu0 0.0
  %2555 = vmatprep.subr.mxu0 0.0
  %2556 = vmatpush1.xpose.msra.mxu0 0.0
  %2557 = vmatprep.subr.mxu0 0.0
  %2558 = vmatpush1.xpose.msra.mxu0 0.0
  %2559 = vmatprep.subr.mxu0 0.0
  %2560 = vmatpush1.xpose.msra.mxu0 0.0
  %2561 = vmatprep.subr.mxu0 0.0
  %2562 = vmatpush1.xpose.msra.mxu0 0.0
  %2563 = vmatprep.subr.mxu0 0.0
  %2564 = vmatpush1.xpose.msra.mxu0 %v2533
  %2565 = vmatprep.subr.mxu0 0.0
  %2566 = vmatpush1.xpose.msra.mxu0 %v2531
  %2567 = vmatprep.subr.mxu0 0.0
  %2568 = vmatpush2.xpose.msra.mxu0 0.0
  %2569 = vmatprep.subr.mxu0 0.0
  %2570 = vmatpush2.xpose.msra.mxu0 0.0
  %2571 = vmatprep.subr.mxu0 0.0
  %2572 = vmatpush2.xpose.msra.mxu0 0.0
  %2573 = vmatprep.subr.mxu0 0.0
  %2574 = vmatpush2.xpose.msra.mxu0 0.0
  %2575 = vmatprep.subr.mxu0 0.0
  %2576 = vmatpush2.xpose.msra.mxu0 0.0
  %2577 = vmatprep.subr.mxu0 0.0
  %2578 = vmatpush2.xpose.msra.mxu0 0.0
  %2579 = vmatprep.subr.mxu0 0.0
  %2580 = vmatpush2.xpose.msra.mxu0 0.0
  %2581 = vmatprep.subr.mxu0 0.0
  %2582 = vmatpush2.xpose.msra.mxu0 0.0
  %2583 = vmatprep.subr.mxu0 0.0
  %2584 = vmatpush2.xpose.msra.mxu0 0.0
  %2585 = vmatprep.subr.mxu0 0.0
  %2586 = vmatpush2.xpose.msra.mxu0 0.0
  %2587 = vmatprep.subr.mxu0 0.0
  %2588 = vmatpush2.xpose.msra.mxu0 0.0
  %2589 = vmatprep.subr.mxu0 0.0
  %2590 = vmatpush2.xpose.msra.mxu0 0.0
  %2591 = vmatprep.subr.mxu0 0.0
  %2592 = vmatpush2.xpose.msra.mxu0 0.0
  %2593 = vmatprep.subr.mxu0 0.0
  %2594 = vmatpush2.xpose.msra.mxu0 0.0
  %2595 = vmatprep.subr.mxu0 0.0
  %2596 = vmatpush2.xpose.msra.mxu0 0.0
  %2597 = vmatprep.subr.mxu0 0.0
  %2598 = vmatpush2.xpose.msra.mxu0 0.0
  %2599 = vmatprep.mubr.f32.mxu0 0.0
  %2600 = vmatmul.mubr.f32.gmra.mxu0 %v2529
  %v2601 = vpop.f32.mrf.mxu0
  %v2602 = vadd.f32 0.0, %v2601
  %v2603 = vpop.f32.mrf.mxu0
  %2604 = vdwg.mxu0
  %2605 = vrot.lane.b32.xlu0 %v805, 64
  %v2606 = vpop.permute.xlu0 %2605
  %2607 = vrot.lane.b32.xlu0 %v781, 96
  %v2608 = vpop.permute.xlu0 %2607
  %2609 = vrot.lane.b32.xlu0 %v783, 96
  %v2610 = vpop.permute.xlu0 %2609
  %v2611 = vsel %vm814, %v2606, 0
  %v2613 = vsel %vm814, %v2608, 0
  %v2615 = vsel %vm814, %v2610, 0
  %2617 = vmatprep.subr.mxu0 0.0
  %2618 = vmatpush1.xpose.msra.mxu0 0.0
  %2619 = vmatprep.subr.mxu0 0.0
  %2620 = vmatpush1.xpose.msra.mxu0 0.0
  %2621 = vmatprep.subr.mxu0 0.0
  %2622 = vmatpush1.xpose.msra.mxu0 0.0
  %2623 = vmatprep.subr.mxu0 0.0
  %2624 = vmatpush1.xpose.msra.mxu0 0.0
  %2625 = vmatprep.subr.mxu0 0.0
  %2626 = vmatpush1.xpose.msra.mxu0 0.0
  %2627 = vmatprep.subr.mxu0 0.0
  %2628 = vmatpush1.xpose.msra.mxu0 0.0
  %2629 = vmatprep.subr.mxu0 0.0
  %2630 = vmatpush1.xpose.msra.mxu0 0.0
  %2631 = vmatprep.subr.mxu0 0.0
  %2632 = vmatpush1.xpose.msra.mxu0 0.0
  %2633 = vmatprep.subr.mxu0 0.0
  %2634 = vmatpush1.xpose.msra.mxu0 0.0
  %2635 = vmatprep.subr.mxu0 0.0
  %2636 = vmatpush1.xpose.msra.mxu0 0.0
  %2637 = vmatprep.subr.mxu0 0.0
  %2638 = vmatpush1.xpose.msra.mxu0 0.0
  %2639 = vmatprep.subr.mxu0 0.0
  %2640 = vmatpush1.xpose.msra.mxu0 0.0
  %2641 = vmatprep.subr.mxu0 0.0
  %2642 = vmatpush1.xpose.msra.mxu0 0.0
  %2643 = vmatprep.subr.mxu0 0.0
  %2644 = vmatpush1.xpose.msra.mxu0 0.0
  %2645 = vmatprep.subr.mxu0 0.0
  %2646 = vmatpush1.xpose.msra.mxu0 %v2615
  %2647 = vmatprep.subr.mxu0 0.0
  %2648 = vmatpush1.xpose.msra.mxu0 %v2613
  %2649 = vmatprep.subr.mxu0 0.0
  %2650 = vmatpush2.xpose.msra.mxu0 0.0
  %2651 = vmatprep.subr.mxu0 0.0
  %2652 = vmatpush2.xpose.msra.mxu0 0.0
  %2653 = vmatprep.subr.mxu0 0.0
  %2654 = vmatpush2.xpose.msra.mxu0 0.0
  %2655 = vmatprep.subr.mxu0 0.0
  %2656 = vmatpush2.xpose.msra.mxu0 0.0
  %2657 = vmatprep.subr.mxu0 0.0
  %2658 = vmatpush2.xpose.msra.mxu0 0.0
  %2659 = vmatprep.subr.mxu0 0.0
  %2660 = vmatpush2.xpose.msra.mxu0 0.0
  %2661 = vmatprep.subr.mxu0 0.0
  %2662 = vmatpush2.xpose.msra.mxu0 0.0
  %2663 = vmatprep.subr.mxu0 0.0
  %2664 = vmatpush2.xpose.msra.mxu0 0.0
  %2665 = vmatprep.subr.mxu0 0.0
  %2666 = vmatpush2.xpose.msra.mxu0 0.0
  %2667 = vmatprep.subr.mxu0 0.0
  %2668 = vmatpush2.xpose.msra.mxu0 0.0
  %2669 = vmatprep.subr.mxu0 0.0
  %2670 = vmatpush2.xpose.msra.mxu0 0.0
  %2671 = vmatprep.subr.mxu0 0.0
  %2672 = vmatpush2.xpose.msra.mxu0 0.0
  %2673 = vmatprep.subr.mxu0 0.0
  %2674 = vmatpush2.xpose.msra.mxu0 0.0
  %2675 = vmatprep.subr.mxu0 0.0
  %2676 = vmatpush2.xpose.msra.mxu0 0.0
  %2677 = vmatprep.subr.mxu0 0.0
  %2678 = vmatpush2.xpose.msra.mxu0 0.0
  %2679 = vmatprep.subr.mxu0 0.0
  %2680 = vmatpush2.xpose.msra.mxu0 0.0
  %2681 = vmatprep.mubr.f32.mxu0 0.0
  %2682 = vmatmul.mubr.f32.gmra.mxu0 %v2611
  %v2683 = vpop.f32.mrf.mxu0
  %v2684 = vadd.f32 0.0, %v2683
  %v2685 = vpop.f32.mrf.mxu0
  %2686 = vdwg.mxu0
  %2687 = vrot.lane.b32.xlu0 %v807, 64
  %v2688 = vpop.permute.xlu0 %2687
  %2689 = vrot.lane.b32.xlu0 %v785, 96
  %v2690 = vpop.permute.xlu0 %2689
  %2691 = vrot.lane.b32.xlu0 %v787, 96
  %v2692 = vpop.permute.xlu0 %2691
  %v2693 = vsel %vm814, %v2688, 0
  %v2695 = vsel %vm814, %v2690, 0
  %v2697 = vsel %vm814, %v2692, 0
  %2699 = vmatprep.subr.mxu0 0.0
  %2700 = vmatpush1.xpose.msra.mxu0 0.0
  %2701 = vmatprep.subr.mxu0 0.0
  %2702 = vmatpush1.xpose.msra.mxu0 0.0
  %2703 = vmatprep.subr.mxu0 0.0
  %2704 = vmatpush1.xpose.msra.mxu0 0.0
  %2705 = vmatprep.subr.mxu0 0.0
  %2706 = vmatpush1.xpose.msra.mxu0 0.0
  %2707 = vmatprep.subr.mxu0 0.0
  %2708 = vmatpush1.xpose.msra.mxu0 0.0
  %2709 = vmatprep.subr.mxu0 0.0
  %2710 = vmatpush1.xpose.msra.mxu0 0.0
  %2711 = vmatprep.subr.mxu0 0.0
  %2712 = vmatpush1.xpose.msra.mxu0 0.0
  %2713 = vmatprep.subr.mxu0 0.0
  %2714 = vmatpush1.xpose.msra.mxu0 0.0
  %2715 = vmatprep.subr.mxu0 0.0
  %2716 = vmatpush1.xpose.msra.mxu0 0.0
  %2717 = vmatprep.subr.mxu0 0.0
  %2718 = vmatpush1.xpose.msra.mxu0 0.0
  %2719 = vmatprep.subr.mxu0 0.0
  %2720 = vmatpush1.xpose.msra.mxu0 0.0
  %2721 = vmatprep.subr.mxu0 0.0
  %2722 = vmatpush1.xpose.msra.mxu0 0.0
  %2723 = vmatprep.subr.mxu0 0.0
  %2724 = vmatpush1.xpose.msra.mxu0 0.0
  %2725 = vmatprep.subr.mxu0 0.0
  %2726 = vmatpush1.xpose.msra.mxu0 0.0
  %2727 = vmatprep.subr.mxu0 0.0
  %2728 = vmatpush1.xpose.msra.mxu0 %v2697
  %2729 = vmatprep.subr.mxu0 0.0
  %2730 = vmatpush1.xpose.msra.mxu0 %v2695
  %2731 = vmatprep.subr.mxu0 0.0
  %2732 = vmatpush2.xpose.msra.mxu0 0.0
  %2733 = vmatprep.subr.mxu0 0.0
  %2734 = vmatpush2.xpose.msra.mxu0 0.0
  %2735 = vmatprep.subr.mxu0 0.0
  %2736 = vmatpush2.xpose.msra.mxu0 0.0
  %2737 = vmatprep.subr.mxu0 0.0
  %2738 = vmatpush2.xpose.msra.mxu0 0.0
  %2739 = vmatprep.subr.mxu0 0.0
  %2740 = vmatpush2.xpose.msra.mxu0 0.0
  %2741 = vmatprep.subr.mxu0 0.0
  %2742 = vmatpush2.xpose.msra.mxu0 0.0
  %2743 = vmatprep.subr.mxu0 0.0
  %2744 = vmatpush2.xpose.msra.mxu0 0.0
  %2745 = vmatprep.subr.mxu0 0.0
  %2746 = vmatpush2.xpose.msra.mxu0 0.0
  %2747 = vmatprep.subr.mxu0 0.0
  %2748 = vmatpush2.xpose.msra.mxu0 0.0
  %2749 = vmatprep.subr.mxu0 0.0
  %2750 = vmatpush2.xpose.msra.mxu0 0.0
  %2751 = vmatprep.subr.mxu0 0.0
  %2752 = vmatpush2.xpose.msra.mxu0 0.0
  %2753 = vmatprep.subr.mxu0 0.0
  %2754 = vmatpush2.xpose.msra.mxu0 0.0
  %2755 = vmatprep.subr.mxu0 0.0
  %2756 = vmatpush2.xpose.msra.mxu0 0.0
  %2757 = vmatprep.subr.mxu0 0.0
  %2758 = vmatpush2.xpose.msra.mxu0 0.0
  %2759 = vmatprep.subr.mxu0 0.0
  %2760 = vmatpush2.xpose.msra.mxu0 0.0
  %2761 = vmatprep.subr.mxu0 0.0
  %2762 = vmatpush2.xpose.msra.mxu0 0.0
  %2763 = vmatprep.mubr.f32.mxu0 0.0
  %2764 = vmatmul.mubr.f32.gmra.mxu0 %v2693
  %v2765 = vpop.f32.mrf.mxu0
  %v2766 = vadd.f32 0.0, %v2765
  %v2767 = vpop.f32.mrf.mxu0
  %2768 = vdwg.mxu0
  %2769 = vrot.lane.b32.xlu0 %v809, 64
  %v2770 = vpop.permute.xlu0 %2769
  %2771 = vrot.lane.b32.xlu0 %v789, 96
  %v2772 = vpop.permute.xlu0 %2771
  %2773 = vrot.lane.b32.xlu0 %v791, 96
  %v2774 = vpop.permute.xlu0 %2773
  %v2775 = vsel %vm814, %v2770, 0
  %v2777 = vsel %vm814, %v2772, 0
  %v2779 = vsel %vm814, %v2774, 0
  %2781 = vmatprep.subr.mxu0 0.0
  %2782 = vmatpush1.xpose.msra.mxu0 0.0
  %2783 = vmatprep.subr.mxu0 0.0
  %2784 = vmatpush1.xpose.msra.mxu0 0.0
  %2785 = vmatprep.subr.mxu0 0.0
  %2786 = vmatpush1.xpose.msra.mxu0 0.0
  %2787 = vmatprep.subr.mxu0 0.0
  %2788 = vmatpush1.xpose.msra.mxu0 0.0
  %2789 = vmatprep.subr.mxu0 0.0
  %2790 = vmatpush1.xpose.msra.mxu0 0.0
  %2791 = vmatprep.subr.mxu0 0.0
  %2792 = vmatpush1.xpose.msra.mxu0 0.0
  %2793 = vmatprep.subr.mxu0 0.0
  %2794 = vmatpush1.xpose.msra.mxu0 0.0
  %2795 = vmatprep.subr.mxu0 0.0
  %2796 = vmatpush1.xpose.msra.mxu0 0.0
  %2797 = vmatprep.subr.mxu0 0.0
  %2798 = vmatpush1.xpose.msra.mxu0 0.0
  %2799 = vmatprep.subr.mxu0 0.0
  %2800 = vmatpush1.xpose.msra.mxu0 0.0
  %2801 = vmatprep.subr.mxu0 0.0
  %2802 = vmatpush1.xpose.msra.mxu0 0.0
  %2803 = vmatprep.subr.mxu0 0.0
  %2804 = vmatpush1.xpose.msra.mxu0 0.0
  %2805 = vmatprep.subr.mxu0 0.0
  %2806 = vmatpush1.xpose.msra.mxu0 0.0
  %2807 = vmatprep.subr.mxu0 0.0
  %2808 = vmatpush1.xpose.msra.mxu0 0.0
  %2809 = vmatprep.subr.mxu0 0.0
  %2810 = vmatpush1.xpose.msra.mxu0 %v2779
  %2811 = vmatprep.subr.mxu0 0.0
  %2812 = vmatpush1.xpose.msra.mxu0 %v2777
  %2813 = vmatprep.subr.mxu0 0.0
  %2814 = vmatpush2.xpose.msra.mxu0 0.0
  %2815 = vmatprep.subr.mxu0 0.0
  %2816 = vmatpush2.xpose.msra.mxu0 0.0
  %2817 = vmatprep.subr.mxu0 0.0
  %2818 = vmatpush2.xpose.msra.mxu0 0.0
  %2819 = vmatprep.subr.mxu0 0.0
  %2820 = vmatpush2.xpose.msra.mxu0 0.0
  %2821 = vmatprep.subr.mxu0 0.0
  %2822 = vmatpush2.xpose.msra.mxu0 0.0
  %2823 = vmatprep.subr.mxu0 0.0
  %2824 = vmatpush2.xpose.msra.mxu0 0.0
  %2825 = vmatprep.subr.mxu0 0.0
  %2826 = vmatpush2.xpose.msra.mxu0 0.0
  %2827 = vmatprep.subr.mxu0 0.0
  %2828 = vmatpush2.xpose.msra.mxu0 0.0
  %2829 = vmatprep.subr.mxu0 0.0
  %2830 = vmatpush2.xpose.msra.mxu0 0.0
  %2831 = vmatprep.subr.mxu0 0.0
  %2832 = vmatpush2.xpose.msra.mxu0 0.0
  %2833 = vmatprep.subr.mxu0 0.0
  %2834 = vmatpush2.xpose.msra.mxu0 0.0
  %2835 = vmatprep.subr.mxu0 0.0
  %2836 = vmatpush2.xpose.msra.mxu0 0.0
  %2837 = vmatprep.subr.mxu0 0.0
  %2838 = vmatpush2.xpose.msra.mxu0 0.0
  %2839 = vmatprep.subr.mxu0 0.0
  %2840 = vmatpush2.xpose.msra.mxu0 0.0
  %2841 = vmatprep.subr.mxu0 0.0
  %2842 = vmatpush2.xpose.msra.mxu0 0.0
  %2843 = vmatprep.subr.mxu0 0.0
  %2844 = vmatpush2.xpose.msra.mxu0 0.0
  %2845 = vmatprep.mubr.f32.mxu0 0.0
  %2846 = vmatmul.mubr.f32.gmra.mxu0 %v2775
  %v2847 = vpop.f32.mrf.mxu0
  %v2848 = vadd.f32 0.0, %v2847
  %v2849 = vpop.f32.mrf.mxu0
  %2850 = vdwg.mxu0
  %2851 = vrot.lane.b32.xlu0 %v811, 64
  %v2852 = vpop.permute.xlu0 %2851
  %2853 = vrot.lane.b32.xlu0 %v793, 96
  %v2854 = vpop.permute.xlu0 %2853
  %2855 = vrot.lane.b32.xlu0 %v795, 96
  %v2856 = vpop.permute.xlu0 %2855
  %v2857 = vsel %vm814, %v2852, 0
  %v2859 = vsel %vm814, %v2854, 0
  %v2861 = vsel %vm814, %v2856, 0
  %2863 = vmatprep.subr.mxu0 0.0
  %2864 = vmatpush1.xpose.msra.mxu0 0.0
  %2865 = vmatprep.subr.mxu0 0.0
  %2866 = vmatpush1.xpose.msra.mxu0 0.0
  %2867 = vmatprep.subr.mxu0 0.0
  %2868 = vmatpush1.xpose.msra.mxu0 0.0
  %2869 = vmatprep.subr.mxu0 0.0
  %2870 = vmatpush1.xpose.msra.mxu0 0.0
  %2871 = vmatprep.subr.mxu0 0.0
  %2872 = vmatpush1.xpose.msra.mxu0 0.0
  %2873 = vmatprep.subr.mxu0 0.0
  %2874 = vmatpush1.xpose.msra.mxu0 0.0
  %2875 = vmatprep.subr.mxu0 0.0
  %2876 = vmatpush1.xpose.msra.mxu0 0.0
  %2877 = vmatprep.subr.mxu0 0.0
  %2878 = vmatpush1.xpose.msra.mxu0 0.0
  %2879 = vmatprep.subr.mxu0 0.0
  %2880 = vmatpush1.xpose.msra.mxu0 0.0
  %2881 = vmatprep.subr.mxu0 0.0
  %2882 = vmatpush1.xpose.msra.mxu0 0.0
  %2883 = vmatprep.subr.mxu0 0.0
  %2884 = vmatpush1.xpose.msra.mxu0 0.0
  %2885 = vmatprep.subr.mxu0 0.0
  %2886 = vmatpush1.xpose.msra.mxu0 0.0
  %2887 = vmatprep.subr.mxu0 0.0
  %2888 = vmatpush1.xpose.msra.mxu0 0.0
  %2889 = vmatprep.subr.mxu0 0.0
  %2890 = vmatpush1.xpose.msra.mxu0 0.0
  %2891 = vmatprep.subr.mxu0 0.0
  %2892 = vmatpush1.xpose.msra.mxu0 %v2861
  %2893 = vmatprep.subr.mxu0 0.0
  %2894 = vmatpush1.xpose.msra.mxu0 %v2859
  %2895 = vmatprep.subr.mxu0 0.0
  %2896 = vmatpush2.xpose.msra.mxu0 0.0
  %2897 = vmatprep.subr.mxu0 0.0
  %2898 = vmatpush2.xpose.msra.mxu0 0.0
  %2899 = vmatprep.subr.mxu0 0.0
  %2900 = vmatpush2.xpose.msra.mxu0 0.0
  %2901 = vmatprep.subr.mxu0 0.0
  %2902 = vmatpush2.xpose.msra.mxu0 0.0
  %2903 = vmatprep.subr.mxu0 0.0
  %2904 = vmatpush2.xpose.msra.mxu0 0.0
  %2905 = vmatprep.subr.mxu0 0.0
  %2906 = vmatpush2.xpose.msra.mxu0 0.0
  %2907 = vmatprep.subr.mxu0 0.0
  %2908 = vmatpush2.xpose.msra.mxu0 0.0
  %2909 = vmatprep.subr.mxu0 0.0
  %2910 = vmatpush2.xpose.msra.mxu0 0.0
  %2911 = vmatprep.subr.mxu0 0.0
  %2912 = vmatpush2.xpose.msra.mxu0 0.0
  %2913 = vmatprep.subr.mxu0 0.0
  %2914 = vmatpush2.xpose.msra.mxu0 0.0
  %2915 = vmatprep.subr.mxu0 0.0
  %2916 = vmatpush2.xpose.msra.mxu0 0.0
  %2917 = vmatprep.subr.mxu0 0.0
  %2918 = vmatpush2.xpose.msra.mxu0 0.0
  %2919 = vmatprep.subr.mxu0 0.0
  %2920 = vmatpush2.xpose.msra.mxu0 0.0
  %2921 = vmatprep.subr.mxu0 0.0
  %2922 = vmatpush2.xpose.msra.mxu0 0.0
  %2923 = vmatprep.subr.mxu0 0.0
  %2924 = vmatpush2.xpose.msra.mxu0 0.0
  %2925 = vmatprep.subr.mxu0 0.0
  %2926 = vmatpush2.xpose.msra.mxu0 0.0
  %2927 = vmatprep.mubr.f32.mxu0 0.0
  %2928 = vmatmul.mubr.f32.gmra.mxu0 %v2857
  %v2929 = vpop.f32.mrf.mxu0
  %v2930 = vadd.f32 0.0, %v2929
  %v2931 = vpop.f32.mrf.mxu0
  %2932 = vdwg.mxu0
  %2933 = vrot.lane.b32.xlu0 %v813, 64
  %v2934 = vpop.permute.xlu0 %2933
  %2935 = vrot.lane.b32.xlu0 %v797, 96
  %v2936 = vpop.permute.xlu0 %2935
  %2937 = vrot.lane.b32.xlu0 %v799, 96
  %v2938 = vpop.permute.xlu0 %2937
  %v2939 = vsel %vm814, %v2934, 0
  %v2941 = vsel %vm814, %v2936, 0
  %v2943 = vsel %vm814, %v2938, 0
  %2945 = vmatprep.subr.mxu0 0.0
  %2946 = vmatpush1.xpose.msra.mxu0 0.0
  %2947 = vmatprep.subr.mxu0 0.0
  %2948 = vmatpush1.xpose.msra.mxu0 0.0
  %2949 = vmatprep.subr.mxu0 0.0
  %2950 = vmatpush1.xpose.msra.mxu0 0.0
  %2951 = vmatprep.subr.mxu0 0.0
  %2952 = vmatpush1.xpose.msra.mxu0 0.0
  %2953 = vmatprep.subr.mxu0 0.0
  %2954 = vmatpush1.xpose.msra.mxu0 0.0
  %2955 = vmatprep.subr.mxu0 0.0
  %2956 = vmatpush1.xpose.msra.mxu0 0.0
  %2957 = vmatprep.subr.mxu0 0.0
  %2958 = vmatpush1.xpose.msra.mxu0 0.0
  %2959 = vmatprep.subr.mxu0 0.0
  %2960 = vmatpush1.xpose.msra.mxu0 0.0
  %2961 = vmatprep.subr.mxu0 0.0
  %2962 = vmatpush1.xpose.msra.mxu0 0.0
  %2963 = vmatprep.subr.mxu0 0.0
  %2964 = vmatpush1.xpose.msra.mxu0 0.0
  %2965 = vmatprep.subr.mxu0 0.0
  %2966 = vmatpush1.xpose.msra.mxu0 0.0
  %2967 = vmatprep.subr.mxu0 0.0
  %2968 = vmatpush1.xpose.msra.mxu0 0.0
  %2969 = vmatprep.subr.mxu0 0.0
  %2970 = vmatpush1.xpose.msra.mxu0 0.0
  %2971 = vmatprep.subr.mxu0 0.0
  %2972 = vmatpush1.xpose.msra.mxu0 0.0
  %2973 = vmatprep.subr.mxu0 0.0
  %2974 = vmatpush1.xpose.msra.mxu0 %v2943
  %2975 = vmatprep.subr.mxu0 0.0
  %2976 = vmatpush1.xpose.msra.mxu0 %v2941
  %2977 = vmatprep.subr.mxu0 0.0
  %2978 = vmatpush2.xpose.msra.mxu0 0.0
  %2979 = vmatprep.subr.mxu0 0.0
  %2980 = vmatpush2.xpose.msra.mxu0 0.0
  %2981 = vmatprep.subr.mxu0 0.0
  %2982 = vmatpush2.xpose.msra.mxu0 0.0
  %2983 = vmatprep.subr.mxu0 0.0
  %2984 = vmatpush2.xpose.msra.mxu0 0.0
  %2985 = vmatprep.subr.mxu0 0.0
  %2986 = vmatpush2.xpose.msra.mxu0 0.0
  %2987 = vmatprep.subr.mxu0 0.0
  %2988 = vmatpush2.xpose.msra.mxu0 0.0
  %2989 = vmatprep.subr.mxu0 0.0
  %2990 = vmatpush2.xpose.msra.mxu0 0.0
  %2991 = vmatprep.subr.mxu0 0.0
  %2992 = vmatpush2.xpose.msra.mxu0 0.0
  %2993 = vmatprep.subr.mxu0 0.0
  %2994 = vmatpush2.xpose.msra.mxu0 0.0
  %2995 = vmatprep.subr.mxu0 0.0
  %2996 = vmatpush2.xpose.msra.mxu0 0.0
  %2997 = vmatprep.subr.mxu0 0.0
  %2998 = vmatpush2.xpose.msra.mxu0 0.0
  %2999 = vmatprep.subr.mxu0 0.0
  %3000 = vmatpush2.xpose.msra.mxu0 0.0
  %3001 = vmatprep.subr.mxu0 0.0
  %3002 = vmatpush2.xpose.msra.mxu0 0.0
  %3003 = vmatprep.subr.mxu0 0.0
  %3004 = vmatpush2.xpose.msra.mxu0 0.0
  %3005 = vmatprep.subr.mxu0 0.0
  %3006 = vmatpush2.xpose.msra.mxu0 0.0
  %3007 = vmatprep.subr.mxu0 0.0
  %3008 = vmatpush2.xpose.msra.mxu0 0.0
  %3009 = vmatprep.mubr.f32.mxu0 0.0
  %3010 = vmatmul.mubr.f32.gmra.mxu0 %v2939
  %v3011 = vpop.f32.mrf.mxu0
  %v3012 = vadd.f32 0.0, %v3011
  %v3013 = vpop.f32.mrf.mxu0
  %3014 = vdwg.mxu0
  %v3015 = vsel %vm2355, %v2438, -inf
  %3016 = vmax.xlane.f32.xlu0 %v3015
  %v3017 = vpop.xlane.xlu0 %3016
  %v3018 = vsel %vm2355, %v2520, -inf
  %3019 = vmax.xlane.f32.xlu0 %v3018
  %v3020 = vpop.xlane.xlu0 %3019
  %v3021 = vsel %vm2355, %v2602, -inf
  %3022 = vmax.xlane.f32.xlu0 %v3021
  %v3023 = vpop.xlane.xlu0 %3022
  %v3024 = vsel %vm2355, %v2684, -inf
  %3025 = vmax.xlane.f32.xlu0 %v3024
  %v3026 = vpop.xlane.xlu0 %3025
  %v3027 = vsel %vm2355, %v2766, -inf
  %3028 = vmax.xlane.f32.xlu0 %v3027
  %v3029 = vpop.xlane.xlu0 %3028
  %v3030 = vsel %vm2355, %v2848, -inf
  %3031 = vmax.xlane.f32.xlu0 %v3030
  %v3032 = vpop.xlane.xlu0 %3031
  %v3033 = vsel %vm2355, %v2930, -inf
  %3034 = vmax.xlane.f32.xlu0 %v3033
  %v3035 = vpop.xlane.xlu0 %3034
  %v3036 = vsel %vm2355, %v3012, -inf
  %3037 = vmax.xlane.f32.xlu0 %v3036
  %v3038 = vpop.xlane.xlu0 %3037
  %v3039 = vsub.f32 %v2438, %v3017
  %v3040 = vsub.f32 %v2520, %v3020
  %v3041 = vsub.f32 %v2602, %v3023
  %v3042 = vsub.f32 %v2684, %v3026
  %v3043 = vsub.f32 %v2766, %v3029
  %v3044 = vsub.f32 %v2848, %v3032
  %v3045 = vsub.f32 %v2930, %v3035
  %v3046 = vsub.f32 %v3012, %v3038
  %v3047 = vmul.f32 %v3039, 1.442695
  %v3048 = vpow.pop %v3047
  %v3049 = vmul.f32 %v3040, 1.442695
  %v3050 = vpow.pop %v3049
  %v3051 = vmul.f32 %v3041, 1.442695
  %v3052 = vpow.pop %v3051
  %v3053 = vmul.f32 %v3042, 1.442695
  %v3054 = vpow.pop %v3053
  %v3055 = vmul.f32 %v3043, 1.442695
  %v3056 = vpow.pop %v3055
  %v3057 = vmul.f32 %v3044, 1.442695
  %v3058 = vpow.pop %v3057
  %v3059 = vmul.f32 %v3045, 1.442695
  %v3060 = vpow.pop %v3059
  %v3061 = vmul.f32 %v3046, 1.442695
  %v3062 = vpow.pop %v3061
  %v3063 = vsel %vm2355, %v3048, 0.0
  %3064 = vadd.xlane.f32.xlu0 %v3063
  %v3065 = vpop.xlane.xlu0 %3064
  %v3066 = vsel %vm2355, %v3050, 0.0
  %3067 = vadd.xlane.f32.xlu0 %v3066
  %v3068 = vpop.xlane.xlu0 %3067
  %v3069 = vsel %vm2355, %v3052, 0.0
  %3070 = vadd.xlane.f32.xlu0 %v3069
  %v3071 = vpop.xlane.xlu0 %3070
  %v3072 = vsel %vm2355, %v3054, 0.0
  %3073 = vadd.xlane.f32.xlu0 %v3072
  %v3074 = vpop.xlane.xlu0 %3073
  %v3075 = vsel %vm2355, %v3056, 0.0
  %3076 = vadd.xlane.f32.xlu0 %v3075
  %v3077 = vpop.xlane.xlu0 %3076
  %v3078 = vsel %vm2355, %v3058, 0.0
  %3079 = vadd.xlane.f32.xlu0 %v3078
  %v3080 = vpop.xlane.xlu0 %3079
  %v3081 = vsel %vm2355, %v3060, 0.0
  %3082 = vadd.xlane.f32.xlu0 %v3081
  %v3083 = vpop.xlane.xlu0 %3082
  %v3084 = vsel %vm2355, %v3062, 0.0
  %3085 = vadd.xlane.f32.xlu0 %v3084
  %v3086 = vpop.xlane.xlu0 %3085
  %v3087 = vrcp.pop %v3065
  %v3088 = vmul.f32 %v3048, %v3087
  %v3089 = vrcp.pop %v3068
  %v3090 = vmul.f32 %v3050, %v3089
  %v3091 = vrcp.pop %v3071
  %v3092 = vmul.f32 %v3052, %v3091
  %v3093 = vrcp.pop %v3074
  %v3094 = vmul.f32 %v3054, %v3093
  %v3095 = vrcp.pop %v3077
  %v3096 = vmul.f32 %v3056, %v3095
  %v3097 = vrcp.pop %v3080
  %v3098 = vmul.f32 %v3058, %v3097
  %v3099 = vrcp.pop %v3083
  %v3100 = vmul.f32 %v3060, %v3099
  %v3101 = vrcp.pop %v3086
  %v3102 = vmul.f32 %v3062, %v3101
  %v3103 = vsel %vm2355, %v3088, 0.0
  %v3104 = vrot.slane %v3103, 4
  %v3105 = vadd.f32 %v3103, %v3104
  %v3106 = vrot.slane %v3105, 2
  %v3107 = vadd.f32 %v3105, %v3106
  %v3108 = vrot.slane %v3107, 1
  %v3109 = vadd.f32 %v3107, %v3108
  %v3110 = vsel %vm2355, %v3090, 0.0
  %v3111 = vrot.slane %v3110, 4
  %v3112 = vadd.f32 %v3110, %v3111
  %v3113 = vrot.slane %v3112, 2
  %v3114 = vadd.f32 %v3112, %v3113
  %v3115 = vrot.slane %v3114, 1
  %v3116 = vadd.f32 %v3114, %v3115
  %v3117 = vsel %vm2355, %v3092, 0.0
  %v3118 = vrot.slane %v3117, 4
  %v3119 = vadd.f32 %v3117, %v3118
  %v3120 = vrot.slane %v3119, 2
  %v3121 = vadd.f32 %v3119, %v3120
  %v3122 = vrot.slane %v3121, 1
  %v3123 = vadd.f32 %v3121, %v3122
  %v3124 = vsel %vm2355, %v3094, 0.0
  %v3125 = vrot.slane %v3124, 4
  %v3126 = vadd.f32 %v3124, %v3125
  %v3127 = vrot.slane %v3126, 2
  %v3128 = vadd.f32 %v3126, %v3127
  %v3129 = vrot.slane %v3128, 1
  %v3130 = vadd.f32 %v3128, %v3129
  %v3131 = vsel %vm2355, %v3096, 0.0
  %v3132 = vrot.slane %v3131, 4
  %v3133 = vadd.f32 %v3131, %v3132
  %v3134 = vrot.slane %v3133, 2
  %v3135 = vadd.f32 %v3133, %v3134
  %v3136 = vrot.slane %v3135, 1
  %v3137 = vadd.f32 %v3135, %v3136
  %v3138 = vsel %vm2355, %v3098, 0.0
  %v3139 = vrot.slane %v3138, 4
  %v3140 = vadd.f32 %v3138, %v3139
  %v3141 = vrot.slane %v3140, 2
  %v3142 = vadd.f32 %v3140, %v3141
  %v3143 = vrot.slane %v3142, 1
  %v3144 = vadd.f32 %v3142, %v3143
  %v3145 = vsel %vm2355, %v3100, 0.0
  %v3146 = vrot.slane %v3145, 4
  %v3147 = vadd.f32 %v3145, %v3146
  %v3148 = vrot.slane %v3147, 2
  %v3149 = vadd.f32 %v3147, %v3148
  %v3150 = vrot.slane %v3149, 1
  %v3151 = vadd.f32 %v3149, %v3150
  %v3152 = vsel %vm2355, %v3102, 0.0
  %v3153 = vrot.slane %v3152, 4
  %v3154 = vadd.f32 %v3152, %v3153
  %v3155 = vrot.slane %v3154, 2
  %v3156 = vadd.f32 %v3154, %v3155
  %v3157 = vrot.slane %v3156, 1
  %v3158 = vadd.f32 %v3156, %v3157
  %v3159 = vrcp.pop 8.0
  %v3160 = vmul.f32 %v3109, %v3159
  %v3161 = vmul.f32 %v3116, %v3159
  %v3162 = vmul.f32 %v3123, %v3159
  %v3163 = vmul.f32 %v3130, %v3159
  %v3164 = vmul.f32 %v3137, %v3159
  %v3165 = vmul.f32 %v3144, %v3159
  %v3166 = vmul.f32 %v3151, %v3159
  %v3167 = vmul.f32 %v3158, %v3159
  %3168 = vrot.lane.b32.xlu0 %v758, 64
  %v3169 = vpop.permute.xlu0 %3168
  %3170 = vrot.lane.b32.xlu0 %v761, 64
  %v3171 = vpop.permute.xlu0 %3170
  %v3175 = vsel %vm2355, %v3160, 0
  %3177 = vmatprep.subr.mxu0 0.0
  %3178 = vmatpush1.msra.mxu0 0.0
  %3179 = vmatprep.subr.mxu0 0.0
  %3180 = vmatpush1.msra.mxu0 0.0
  %3181 = vmatprep.subr.mxu0 0.0
  %3182 = vmatpush1.msra.mxu0 0.0
  %3183 = vmatprep.subr.mxu0 0.0
  %3184 = vmatpush1.msra.mxu0 0.0
  %3185 = vmatprep.subr.mxu0 0.0
  %3186 = vmatpush1.msra.mxu0 0.0
  %3187 = vmatprep.subr.mxu0 0.0
  %3188 = vmatpush1.msra.mxu0 0.0
  %3189 = vmatprep.subr.mxu0 0.0
  %3190 = vmatpush1.msra.mxu0 0.0
  %3191 = vmatprep.subr.mxu0 0.0
  %3192 = vmatpush1.msra.mxu0 0.0
  %3193 = vmatprep.subr.mxu0 0.0
  %3194 = vmatpush1.msra.mxu0 0.0
  %3195 = vmatprep.subr.mxu0 0.0
  %3196 = vmatpush1.msra.mxu0 0.0
  %3197 = vmatprep.subr.mxu0 0.0
  %3198 = vmatpush1.msra.mxu0 0.0
  %3199 = vmatprep.subr.mxu0 0.0
  %3200 = vmatpush1.msra.mxu0 0.0
  %3201 = vmatprep.subr.mxu0 0.0
  %3202 = vmatpush1.msra.mxu0 0.0
  %3203 = vmatprep.subr.mxu0 0.0
  %3204 = vmatpush1.msra.mxu0 0.0
  %3205 = vmatprep.subr.mxu0 0.0
  %3206 = vmatpush1.msra.mxu0 %v3171
  %3207 = vmatprep.subr.mxu0 0.0
  %3208 = vmatpush1.msra.mxu0 %v3169
  %3209 = vmatprep.subr.mxu0 0.0
  %3210 = vmatpush2.msra.mxu0 0.0
  %3211 = vmatprep.subr.mxu0 0.0
  %3212 = vmatpush2.msra.mxu0 0.0
  %3213 = vmatprep.subr.mxu0 0.0
  %3214 = vmatpush2.msra.mxu0 0.0
  %3215 = vmatprep.subr.mxu0 0.0
  %3216 = vmatpush2.msra.mxu0 0.0
  %3217 = vmatprep.subr.mxu0 0.0
  %3218 = vmatpush2.msra.mxu0 0.0
  %3219 = vmatprep.subr.mxu0 0.0
  %3220 = vmatpush2.msra.mxu0 0.0
  %3221 = vmatprep.subr.mxu0 0.0
  %3222 = vmatpush2.msra.mxu0 0.0
  %3223 = vmatprep.subr.mxu0 0.0
  %3224 = vmatpush2.msra.mxu0 0.0
  %3225 = vmatprep.subr.mxu0 0.0
  %3226 = vmatpush2.msra.mxu0 0.0
  %3227 = vmatprep.subr.mxu0 0.0
  %3228 = vmatpush2.msra.mxu0 0.0
  %3229 = vmatprep.subr.mxu0 0.0
  %3230 = vmatpush2.msra.mxu0 0.0
  %3231 = vmatprep.subr.mxu0 0.0
  %3232 = vmatpush2.msra.mxu0 0.0
  %3233 = vmatprep.subr.mxu0 0.0
  %3234 = vmatpush2.msra.mxu0 0.0
  %3235 = vmatprep.subr.mxu0 0.0
  %3236 = vmatpush2.msra.mxu0 0.0
  %3237 = vmatprep.subr.mxu0 0.0
  %3238 = vmatpush2.msra.mxu0 0.0
  %3239 = vmatprep.subr.mxu0 0.0
  %3240 = vmatpush2.msra.mxu0 0.0
  %3241 = vmatprep.mubr.f32.mxu0 0.0
  %3242 = vmatmul.mubr.f32.gmra.mxu0 %v3175
  %v3243 = vpop.f32.mrf.mxu0
  %v3244 = vadd.f32 0.0, %v3243
  %v3245 = vpop.f32.mrf.mxu0
  %3246 = vdwg.mxu0
  %3247 = vrot.lane.b32.xlu0 %v766, 64
  %v3248 = vpop.permute.xlu0 %3247
  %3249 = vrot.lane.b32.xlu0 %v769, 64
  %v3250 = vpop.permute.xlu0 %3249
  %v3254 = vsel %vm2355, %v3161, 0
  %3256 = vmatprep.subr.mxu0 0.0
  %3257 = vmatpush1.msra.mxu0 0.0
  %3258 = vmatprep.subr.mxu0 0.0
  %3259 = vmatpush1.msra.mxu0 0.0
  %3260 = vmatprep.subr.mxu0 0.0
  %3261 = vmatpush1.msra.mxu0 0.0
  %3262 = vmatprep.subr.mxu0 0.0
  %3263 = vmatpush1.msra.mxu0 0.0
  %3264 = vmatprep.subr.mxu0 0.0
  %3265 = vmatpush1.msra.mxu0 0.0
  %3266 = vmatprep.subr.mxu0 0.0
  %3267 = vmatpush1.msra.mxu0 0.0
  %3268 = vmatprep.subr.mxu0 0.0
  %3269 = vmatpush1.msra.mxu0 0.0
  %3270 = vmatprep.subr.mxu0 0.0
  %3271 = vmatpush1.msra.mxu0 0.0
  %3272 = vmatprep.subr.mxu0 0.0
  %3273 = vmatpush1.msra.mxu0 0.0
  %3274 = vmatprep.subr.mxu0 0.0
  %3275 = vmatpush1.msra.mxu0 0.0
  %3276 = vmatprep.subr.mxu0 0.0
  %3277 = vmatpush1.msra.mxu0 0.0
  %3278 = vmatprep.subr.mxu0 0.0
  %3279 = vmatpush1.msra.mxu0 0.0
  %3280 = vmatprep.subr.mxu0 0.0
  %3281 = vmatpush1.msra.mxu0 0.0
  %3282 = vmatprep.subr.mxu0 0.0
  %3283 = vmatpush1.msra.mxu0 0.0
  %3284 = vmatprep.subr.mxu0 0.0
  %3285 = vmatpush1.msra.mxu0 %v3250
  %3286 = vmatprep.subr.mxu0 0.0
  %3287 = vmatpush1.msra.mxu0 %v3248
  %3288 = vmatprep.subr.mxu0 0.0
  %3289 = vmatpush2.msra.mxu0 0.0
  %3290 = vmatprep.subr.mxu0 0.0
  %3291 = vmatpush2.msra.mxu0 0.0
  %3292 = vmatprep.subr.mxu0 0.0
  %3293 = vmatpush2.msra.mxu0 0.0
  %3294 = vmatprep.subr.mxu0 0.0
  %3295 = vmatpush2.msra.mxu0 0.0
  %3296 = vmatprep.subr.mxu0 0.0
  %3297 = vmatpush2.msra.mxu0 0.0
  %3298 = vmatprep.subr.mxu0 0.0
  %3299 = vmatpush2.msra.mxu0 0.0
  %3300 = vmatprep.subr.mxu0 0.0
  %3301 = vmatpush2.msra.mxu0 0.0
  %3302 = vmatprep.subr.mxu0 0.0
  %3303 = vmatpush2.msra.mxu0 0.0
  %3304 = vmatprep.subr.mxu0 0.0
  %3305 = vmatpush2.msra.mxu0 0.0
  %3306 = vmatprep.subr.mxu0 0.0
  %3307 = vmatpush2.msra.mxu0 0.0
  %3308 = vmatprep.subr.mxu0 0.0
  %3309 = vmatpush2.msra.mxu0 0.0
  %3310 = vmatprep.subr.mxu0 0.0
  %3311 = vmatpush2.msra.mxu0 0.0
  %3312 = vmatprep.subr.mxu0 0.0
  %3313 = vmatpush2.msra.mxu0 0.0
  %3314 = vmatprep.subr.mxu0 0.0
  %3315 = vmatpush2.msra.mxu0 0.0
  %3316 = vmatprep.subr.mxu0 0.0
  %3317 = vmatpush2.msra.mxu0 0.0
  %3318 = vmatprep.subr.mxu0 0.0
  %3319 = vmatpush2.msra.mxu0 0.0
  %3320 = vmatprep.mubr.f32.mxu0 0.0
  %3321 = vmatmul.mubr.f32.gmra.mxu0 %v3254
  %v3322 = vpop.f32.mrf.mxu0
  %v3323 = vadd.f32 0.0, %v3322
  %v3324 = vpop.f32.mrf.mxu0
  %3325 = vdwg.mxu0
  %3326 = vrot.lane.b32.xlu0 %v777, 64
  %v3327 = vpop.permute.xlu0 %3326
  %3328 = vrot.lane.b32.xlu0 %v779, 64
  %v3329 = vpop.permute.xlu0 %3328
  %v3333 = vsel %vm2355, %v3162, 0
  %3335 = vmatprep.subr.mxu0 0.0
  %3336 = vmatpush1.msra.mxu0 0.0
  %3337 = vmatprep.subr.mxu0 0.0
  %3338 = vmatpush1.msra.mxu0 0.0
  %3339 = vmatprep.subr.mxu0 0.0
  %3340 = vmatpush1.msra.mxu0 0.0
  %3341 = vmatprep.subr.mxu0 0.0
  %3342 = vmatpush1.msra.mxu0 0.0
  %3343 = vmatprep.subr.mxu0 0.0
  %3344 = vmatpush1.msra.mxu0 0.0
  %3345 = vmatprep.subr.mxu0 0.0
  %3346 = vmatpush1.msra.mxu0 0.0
  %3347 = vmatprep.subr.mxu0 0.0
  %3348 = vmatpush1.msra.mxu0 0.0
  %3349 = vmatprep.subr.mxu0 0.0
  %3350 = vmatpush1.msra.mxu0 0.0
  %3351 = vmatprep.subr.mxu0 0.0
  %3352 = vmatpush1.msra.mxu0 0.0
  %3353 = vmatprep.subr.mxu0 0.0
  %3354 = vmatpush1.msra.mxu0 0.0
  %3355 = vmatprep.subr.mxu0 0.0
  %3356 = vmatpush1.msra.mxu0 0.0
  %3357 = vmatprep.subr.mxu0 0.0
  %3358 = vmatpush1.msra.mxu0 0.0
  %3359 = vmatprep.subr.mxu0 0.0
  %3360 = vmatpush1.msra.mxu0 0.0
  %3361 = vmatprep.subr.mxu0 0.0
  %3362 = vmatpush1.msra.mxu0 0.0
  %3363 = vmatprep.subr.mxu0 0.0
  %3364 = vmatpush1.msra.mxu0 %v3329
  %3365 = vmatprep.subr.mxu0 0.0
  %3366 = vmatpush1.msra.mxu0 %v3327
  %3367 = vmatprep.subr.mxu0 0.0
  %3368 = vmatpush2.msra.mxu0 0.0
  %3369 = vmatprep.subr.mxu0 0.0
  %3370 = vmatpush2.msra.mxu0 0.0
  %3371 = vmatprep.subr.mxu0 0.0
  %3372 = vmatpush2.msra.mxu0 0.0
  %3373 = vmatprep.subr.mxu0 0.0
  %3374 = vmatpush2.msra.mxu0 0.0
  %3375 = vmatprep.subr.mxu0 0.0
  %3376 = vmatpush2.msra.mxu0 0.0
  %3377 = vmatprep.subr.mxu0 0.0
  %3378 = vmatpush2.msra.mxu0 0.0
  %3379 = vmatprep.subr.mxu0 0.0
  %3380 = vmatpush2.msra.mxu0 0.0
  %3381 = vmatprep.subr.mxu0 0.0
  %3382 = vmatpush2.msra.mxu0 0.0
  %3383 = vmatprep.subr.mxu0 0.0
  %3384 = vmatpush2.msra.mxu0 0.0
  %3385 = vmatprep.subr.mxu0 0.0
  %3386 = vmatpush2.msra.mxu0 0.0
  %3387 = vmatprep.subr.mxu0 0.0
  %3388 = vmatpush2.msra.mxu0 0.0
  %3389 = vmatprep.subr.mxu0 0.0
  %3390 = vmatpush2.msra.mxu0 0.0
  %3391 = vmatprep.subr.mxu0 0.0
  %3392 = vmatpush2.msra.mxu0 0.0
  %3393 = vmatprep.subr.mxu0 0.0
  %3394 = vmatpush2.msra.mxu0 0.0
  %3395 = vmatprep.subr.mxu0 0.0
  %3396 = vmatpush2.msra.mxu0 0.0
  %3397 = vmatprep.subr.mxu0 0.0
  %3398 = vmatpush2.msra.mxu0 0.0
  %3399 = vmatprep.mubr.f32.mxu0 0.0
  %3400 = vmatmul.mubr.f32.gmra.mxu0 %v3333
  %v3401 = vpop.f32.mrf.mxu0
  %v3402 = vadd.f32 0.0, %v3401
  %v3403 = vpop.f32.mrf.mxu0
  %3404 = vdwg.mxu0
  %3405 = vrot.lane.b32.xlu0 %v781, 64
  %v3406 = vpop.permute.xlu0 %3405
  %3407 = vrot.lane.b32.xlu0 %v783, 64
  %v3408 = vpop.permute.xlu0 %3407
  %v3412 = vsel %vm2355, %v3163, 0
  %3414 = vmatprep.subr.mxu0 0.0
  %3415 = vmatpush1.msra.mxu0 0.0
  %3416 = vmatprep.subr.mxu0 0.0
  %3417 = vmatpush1.msra.mxu0 0.0
  %3418 = vmatprep.subr.mxu0 0.0
  %3419 = vmatpush1.msra.mxu0 0.0
  %3420 = vmatprep.subr.mxu0 0.0
  %3421 = vmatpush1.msra.mxu0 0.0
  %3422 = vmatprep.subr.mxu0 0.0
  %3423 = vmatpush1.msra.mxu0 0.0
  %3424 = vmatprep.subr.mxu0 0.0
  %3425 = vmatpush1.msra.mxu0 0.0
  %3426 = vmatprep.subr.mxu0 0.0
  %3427 = vmatpush1.msra.mxu0 0.0
  %3428 = vmatprep.subr.mxu0 0.0
  %3429 = vmatpush1.msra.mxu0 0.0
  %3430 = vmatprep.subr.mxu0 0.0
  %3431 = vmatpush1.msra.mxu0 0.0
  %3432 = vmatprep.subr.mxu0 0.0
  %3433 = vmatpush1.msra.mxu0 0.0
  %3434 = vmatprep.subr.mxu0 0.0
  %3435 = vmatpush1.msra.mxu0 0.0
  %3436 = vmatprep.subr.mxu0 0.0
  %3437 = vmatpush1.msra.mxu0 0.0
  %3438 = vmatprep.subr.mxu0 0.0
  %3439 = vmatpush1.msra.mxu0 0.0
  %3440 = vmatprep.subr.mxu0 0.0
  %3441 = vmatpush1.msra.mxu0 0.0
  %3442 = vmatprep.subr.mxu0 0.0
  %3443 = vmatpush1.msra.mxu0 %v3408
  %3444 = vmatprep.subr.mxu0 0.0
  %3445 = vmatpush1.msra.mxu0 %v3406
  %3446 = vmatprep.subr.mxu0 0.0
  %3447 = vmatpush2.msra.mxu0 0.0
  %3448 = vmatprep.subr.mxu0 0.0
  %3449 = vmatpush2.msra.mxu0 0.0
  %3450 = vmatprep.subr.mxu0 0.0
  %3451 = vmatpush2.msra.mxu0 0.0
  %3452 = vmatprep.subr.mxu0 0.0
  %3453 = vmatpush2.msra.mxu0 0.0
  %3454 = vmatprep.subr.mxu0 0.0
  %3455 = vmatpush2.msra.mxu0 0.0
  %3456 = vmatprep.subr.mxu0 0.0
  %3457 = vmatpush2.msra.mxu0 0.0
  %3458 = vmatprep.subr.mxu0 0.0
  %3459 = vmatpush2.msra.mxu0 0.0
  %3460 = vmatprep.subr.mxu0 0.0
  %3461 = vmatpush2.msra.mxu0 0.0
  %3462 = vmatprep.subr.mxu0 0.0
  %3463 = vmatpush2.msra.mxu0 0.0
  %3464 = vmatprep.subr.mxu0 0.0
  %3465 = vmatpush2.msra.mxu0 0.0
  %3466 = vmatprep.subr.mxu0 0.0
  %3467 = vmatpush2.msra.mxu0 0.0
  %3468 = vmatprep.subr.mxu0 0.0
  %3469 = vmatpush2.msra.mxu0 0.0
  %3470 = vmatprep.subr.mxu0 0.0
  %3471 = vmatpush2.msra.mxu0 0.0
  %3472 = vmatprep.subr.mxu0 0.0
  %3473 = vmatpush2.msra.mxu0 0.0
  %3474 = vmatprep.subr.mxu0 0.0
  %3475 = vmatpush2.msra.mxu0 0.0
  %3476 = vmatprep.subr.mxu0 0.0
  %3477 = vmatpush2.msra.mxu0 0.0
  %3478 = vmatprep.mubr.f32.mxu0 0.0
  %3479 = vmatmul.mubr.f32.gmra.mxu0 %v3412
  %v3480 = vpop.f32.mrf.mxu0
  %v3481 = vadd.f32 0.0, %v3480
  %v3482 = vpop.f32.mrf.mxu0
  %3483 = vdwg.mxu0
  %3484 = vrot.lane.b32.xlu0 %v785, 64
  %v3485 = vpop.permute.xlu0 %3484
  %3486 = vrot.lane.b32.xlu0 %v787, 64
  %v3487 = vpop.permute.xlu0 %3486
  %v3491 = vsel %vm2355, %v3164, 0
  %3493 = vmatprep.subr.mxu0 0.0
  %3494 = vmatpush1.msra.mxu0 0.0
  %3495 = vmatprep.subr.mxu0 0.0
  %3496 = vmatpush1.msra.mxu0 0.0
  %3497 = vmatprep.subr.mxu0 0.0
  %3498 = vmatpush1.msra.mxu0 0.0
  %3499 = vmatprep.subr.mxu0 0.0
  %3500 = vmatpush1.msra.mxu0 0.0
  %3501 = vmatprep.subr.mxu0 0.0
  %3502 = vmatpush1.msra.mxu0 0.0
  %3503 = vmatprep.subr.mxu0 0.0
  %3504 = vmatpush1.msra.mxu0 0.0
  %3505 = vmatprep.subr.mxu0 0.0
  %3506 = vmatpush1.msra.mxu0 0.0
  %3507 = vmatprep.subr.mxu0 0.0
  %3508 = vmatpush1.msra.mxu0 0.0
  %3509 = vmatprep.subr.mxu0 0.0
  %3510 = vmatpush1.msra.mxu0 0.0
  %3511 = vmatprep.subr.mxu0 0.0
  %3512 = vmatpush1.msra.mxu0 0.0
  %3513 = vmatprep.subr.mxu0 0.0
  %3514 = vmatpush1.msra.mxu0 0.0
  %3515 = vmatprep.subr.mxu0 0.0
  %3516 = vmatpush1.msra.mxu0 0.0
  %3517 = vmatprep.subr.mxu0 0.0
  %3518 = vmatpush1.msra.mxu0 0.0
  %3519 = vmatprep.subr.mxu0 0.0
  %3520 = vmatpush1.msra.mxu0 0.0
  %3521 = vmatprep.subr.mxu0 0.0
  %3522 = vmatpush1.msra.mxu0 %v3487
  %3523 = vmatprep.subr.mxu0 0.0
  %3524 = vmatpush1.msra.mxu0 %v3485
  %3525 = vmatprep.subr.mxu0 0.0
  %3526 = vmatpush2.msra.mxu0 0.0
  %3527 = vmatprep.subr.mxu0 0.0
  %3528 = vmatpush2.msra.mxu0 0.0
  %3529 = vmatprep.subr.mxu0 0.0
  %3530 = vmatpush2.msra.mxu0 0.0
  %3531 = vmatprep.subr.mxu0 0.0
  %3532 = vmatpush2.msra.mxu0 0.0
  %3533 = vmatprep.subr.mxu0 0.0
  %3534 = vmatpush2.msra.mxu0 0.0
  %3535 = vmatprep.subr.mxu0 0.0
  %3536 = vmatpush2.msra.mxu0 0.0
  %3537 = vmatprep.subr.mxu0 0.0
  %3538 = vmatpush2.msra.mxu0 0.0
  %3539 = vmatprep.subr.mxu0 0.0
  %3540 = vmatpush2.msra.mxu0 0.0
  %3541 = vmatprep.subr.mxu0 0.0
  %3542 = vmatpush2.msra.mxu0 0.0
  %3543 = vmatprep.subr.mxu0 0.0
  %3544 = vmatpush2.msra.mxu0 0.0
  %3545 = vmatprep.subr.mxu0 0.0
  %3546 = vmatpush2.msra.mxu0 0.0
  %3547 = vmatprep.subr.mxu0 0.0
  %3548 = vmatpush2.msra.mxu0 0.0
  %3549 = vmatprep.subr.mxu0 0.0
  %3550 = vmatpush2.msra.mxu0 0.0
  %3551 = vmatprep.subr.mxu0 0.0
  %3552 = vmatpush2.msra.mxu0 0.0
  %3553 = vmatprep.subr.mxu0 0.0
  %3554 = vmatpush2.msra.mxu0 0.0
  %3555 = vmatprep.subr.mxu0 0.0
  %3556 = vmatpush2.msra.mxu0 0.0
  %3557 = vmatprep.mubr.f32.mxu0 0.0
  %3558 = vmatmul.mubr.f32.gmra.mxu0 %v3491
  %v3559 = vpop.f32.mrf.mxu0
  %v3560 = vadd.f32 0.0, %v3559
  %v3561 = vpop.f32.mrf.mxu0
  %3562 = vdwg.mxu0
  %3563 = vrot.lane.b32.xlu0 %v789, 64
  %v3564 = vpop.permute.xlu0 %3563
  %3565 = vrot.lane.b32.xlu0 %v791, 64
  %v3566 = vpop.permute.xlu0 %3565
  %v3570 = vsel %vm2355, %v3165, 0
  %3572 = vmatprep.subr.mxu0 0.0
  %3573 = vmatpush1.msra.mxu0 0.0
  %3574 = vmatprep.subr.mxu0 0.0
  %3575 = vmatpush1.msra.mxu0 0.0
  %3576 = vmatprep.subr.mxu0 0.0
  %3577 = vmatpush1.msra.mxu0 0.0
  %3578 = vmatprep.subr.mxu0 0.0
  %3579 = vmatpush1.msra.mxu0 0.0
  %3580 = vmatprep.subr.mxu0 0.0
  %3581 = vmatpush1.msra.mxu0 0.0
  %3582 = vmatprep.subr.mxu0 0.0
  %3583 = vmatpush1.msra.mxu0 0.0
  %3584 = vmatprep.subr.mxu0 0.0
  %3585 = vmatpush1.msra.mxu0 0.0
  %3586 = vmatprep.subr.mxu0 0.0
  %3587 = vmatpush1.msra.mxu0 0.0
  %3588 = vmatprep.subr.mxu0 0.0
  %3589 = vmatpush1.msra.mxu0 0.0
  %3590 = vmatprep.subr.mxu0 0.0
  %3591 = vmatpush1.msra.mxu0 0.0
  %3592 = vmatprep.subr.mxu0 0.0
  %3593 = vmatpush1.msra.mxu0 0.0
  %3594 = vmatprep.subr.mxu0 0.0
  %3595 = vmatpush1.msra.mxu0 0.0
  %3596 = vmatprep.subr.mxu0 0.0
  %3597 = vmatpush1.msra.mxu0 0.0
  %3598 = vmatprep.subr.mxu0 0.0
  %3599 = vmatpush1.msra.mxu0 0.0
  %3600 = vmatprep.subr.mxu0 0.0
  %3601 = vmatpush1.msra.mxu0 %v3566
  %3602 = vmatprep.subr.mxu0 0.0
  %3603 = vmatpush1.msra.mxu0 %v3564
  %3604 = vmatprep.subr.mxu0 0.0
  %3605 = vmatpush2.msra.mxu0 0.0
  %3606 = vmatprep.subr.mxu0 0.0
  %3607 = vmatpush2.msra.mxu0 0.0
  %3608 = vmatprep.subr.mxu0 0.0
  %3609 = vmatpush2.msra.mxu0 0.0
  %3610 = vmatprep.subr.mxu0 0.0
  %3611 = vmatpush2.msra.mxu0 0.0
  %3612 = vmatprep.subr.mxu0 0.0
  %3613 = vmatpush2.msra.mxu0 0.0
  %3614 = vmatprep.subr.mxu0 0.0
  %3615 = vmatpush2.msra.mxu0 0.0
  %3616 = vmatprep.subr.mxu0 0.0
  %3617 = vmatpush2.msra.mxu0 0.0
  %3618 = vmatprep.subr.mxu0 0.0
  %3619 = vmatpush2.msra.mxu0 0.0
  %3620 = vmatprep.subr.mxu0 0.0
  %3621 = vmatpush2.msra.mxu0 0.0
  %3622 = vmatprep.subr.mxu0 0.0
  %3623 = vmatpush2.msra.mxu0 0.0
  %3624 = vmatprep.subr.mxu0 0.0
  %3625 = vmatpush2.msra.mxu0 0.0
  %3626 = vmatprep.subr.mxu0 0.0
  %3627 = vmatpush2.msra.mxu0 0.0
  %3628 = vmatprep.subr.mxu0 0.0
  %3629 = vmatpush2.msra.mxu0 0.0
  %3630 = vmatprep.subr.mxu0 0.0
  %3631 = vmatpush2.msra.mxu0 0.0
  %3632 = vmatprep.subr.mxu0 0.0
  %3633 = vmatpush2.msra.mxu0 0.0
  %3634 = vmatprep.subr.mxu0 0.0
  %3635 = vmatpush2.msra.mxu0 0.0
  %3636 = vmatprep.mubr.f32.mxu0 0.0
  %3637 = vmatmul.mubr.f32.gmra.mxu0 %v3570
  %v3638 = vpop.f32.mrf.mxu0
  %v3639 = vadd.f32 0.0, %v3638
  %v3640 = vpop.f32.mrf.mxu0
  %3641 = vdwg.mxu0
  %3642 = vrot.lane.b32.xlu0 %v793, 64
  %v3643 = vpop.permute.xlu0 %3642
  %3644 = vrot.lane.b32.xlu0 %v795, 64
  %v3645 = vpop.permute.xlu0 %3644
  %v3649 = vsel %vm2355, %v3166, 0
  %3651 = vmatprep.subr.mxu0 0.0
  %3652 = vmatpush1.msra.mxu0 0.0
  %3653 = vmatprep.subr.mxu0 0.0
  %3654 = vmatpush1.msra.mxu0 0.0
  %3655 = vmatprep.subr.mxu0 0.0
  %3656 = vmatpush1.msra.mxu0 0.0
  %3657 = vmatprep.subr.mxu0 0.0
  %3658 = vmatpush1.msra.mxu0 0.0
  %3659 = vmatprep.subr.mxu0 0.0
  %3660 = vmatpush1.msra.mxu0 0.0
  %3661 = vmatprep.subr.mxu0 0.0
  %3662 = vmatpush1.msra.mxu0 0.0
  %3663 = vmatprep.subr.mxu0 0.0
  %3664 = vmatpush1.msra.mxu0 0.0
  %3665 = vmatprep.subr.mxu0 0.0
  %3666 = vmatpush1.msra.mxu0 0.0
  %3667 = vmatprep.subr.mxu0 0.0
  %3668 = vmatpush1.msra.mxu0 0.0
  %3669 = vmatprep.subr.mxu0 0.0
  %3670 = vmatpush1.msra.mxu0 0.0
  %3671 = vmatprep.subr.mxu0 0.0
  %3672 = vmatpush1.msra.mxu0 0.0
  %3673 = vmatprep.subr.mxu0 0.0
  %3674 = vmatpush1.msra.mxu0 0.0
  %3675 = vmatprep.subr.mxu0 0.0
  %3676 = vmatpush1.msra.mxu0 0.0
  %3677 = vmatprep.subr.mxu0 0.0
  %3678 = vmatpush1.msra.mxu0 0.0
  %3679 = vmatprep.subr.mxu0 0.0
  %3680 = vmatpush1.msra.mxu0 %v3645
  %3681 = vmatprep.subr.mxu0 0.0
  %3682 = vmatpush1.msra.mxu0 %v3643
  %3683 = vmatprep.subr.mxu0 0.0
  %3684 = vmatpush2.msra.mxu0 0.0
  %3685 = vmatprep.subr.mxu0 0.0
  %3686 = vmatpush2.msra.mxu0 0.0
  %3687 = vmatprep.subr.mxu0 0.0
  %3688 = vmatpush2.msra.mxu0 0.0
  %3689 = vmatprep.subr.mxu0 0.0
  %3690 = vmatpush2.msra.mxu0 0.0
  %3691 = vmatprep.subr.mxu0 0.0
  %3692 = vmatpush2.msra.mxu0 0.0
  %3693 = vmatprep.subr.mxu0 0.0
  %3694 = vmatpush2.msra.mxu0 0.0
  %3695 = vmatprep.subr.mxu0 0.0
  %3696 = vmatpush2.msra.mxu0 0.0
  %3697 = vmatprep.subr.mxu0 0.0
  %3698 = vmatpush2.msra.mxu0 0.0
  %3699 = vmatprep.subr.mxu0 0.0
  %3700 = vmatpush2.msra.mxu0 0.0
  %3701 = vmatprep.subr.mxu0 0.0
  %3702 = vmatpush2.msra.mxu0 0.0
  %3703 = vmatprep.subr.mxu0 0.0
  %3704 = vmatpush2.msra.mxu0 0.0
  %3705 = vmatprep.subr.mxu0 0.0
  %3706 = vmatpush2.msra.mxu0 0.0
  %3707 = vmatprep.subr.mxu0 0.0
  %3708 = vmatpush2.msra.mxu0 0.0
  %3709 = vmatprep.subr.mxu0 0.0
  %3710 = vmatpush2.msra.mxu0 0.0
  %3711 = vmatprep.subr.mxu0 0.0
  %3712 = vmatpush2.msra.mxu0 0.0
  %3713 = vmatprep.subr.mxu0 0.0
  %3714 = vmatpush2.msra.mxu0 0.0
  %3715 = vmatprep.mubr.f32.mxu0 0.0
  %3716 = vmatmul.mubr.f32.gmra.mxu0 %v3649
  %v3717 = vpop.f32.mrf.mxu0
  %v3718 = vadd.f32 0.0, %v3717
  %v3719 = vpop.f32.mrf.mxu0
  %3720 = vdwg.mxu0
  %3721 = vrot.lane.b32.xlu0 %v797, 64
  %v3722 = vpop.permute.xlu0 %3721
  %3723 = vrot.lane.b32.xlu0 %v799, 64
  %v3724 = vpop.permute.xlu0 %3723
  %v3728 = vsel %vm2355, %v3167, 0
  %3730 = vmatprep.subr.mxu0 0.0
  %3731 = vmatpush1.msra.mxu0 0.0
  %3732 = vmatprep.subr.mxu0 0.0
  %3733 = vmatpush1.msra.mxu0 0.0
  %3734 = vmatprep.subr.mxu0 0.0
  %3735 = vmatpush1.msra.mxu0 0.0
  %3736 = vmatprep.subr.mxu0 0.0
  %3737 = vmatpush1.msra.mxu0 0.0
  %3738 = vmatprep.subr.mxu0 0.0
  %3739 = vmatpush1.msra.mxu0 0.0
  %3740 = vmatprep.subr.mxu0 0.0
  %3741 = vmatpush1.msra.mxu0 0.0
  %3742 = vmatprep.subr.mxu0 0.0
  %3743 = vmatpush1.msra.mxu0 0.0
  %3744 = vmatprep.subr.mxu0 0.0
  %3745 = vmatpush1.msra.mxu0 0.0
  %3746 = vmatprep.subr.mxu0 0.0
  %3747 = vmatpush1.msra.mxu0 0.0
  %3748 = vmatprep.subr.mxu0 0.0
  %3749 = vmatpush1.msra.mxu0 0.0
  %3750 = vmatprep.subr.mxu0 0.0
  %3751 = vmatpush1.msra.mxu0 0.0
  %3752 = vmatprep.subr.mxu0 0.0
  %3753 = vmatpush1.msra.mxu0 0.0
  %3754 = vmatprep.subr.mxu0 0.0
  %3755 = vmatpush1.msra.mxu0 0.0
  %3756 = vmatprep.subr.mxu0 0.0
  %3757 = vmatpush1.msra.mxu0 0.0
  %3758 = vmatprep.subr.mxu0 0.0
  %3759 = vmatpush1.msra.mxu0 %v3724
  %3760 = vmatprep.subr.mxu0 0.0
  %3761 = vmatpush1.msra.mxu0 %v3722
  %3762 = vmatprep.subr.mxu0 0.0
  %3763 = vmatpush2.msra.mxu0 0.0
  %3764 = vmatprep.subr.mxu0 0.0
  %3765 = vmatpush2.msra.mxu0 0.0
  %3766 = vmatprep.subr.mxu0 0.0
  %3767 = vmatpush2.msra.mxu0 0.0
  %3768 = vmatprep.subr.mxu0 0.0
  %3769 = vmatpush2.msra.mxu0 0.0
  %3770 = vmatprep.subr.mxu0 0.0
  %3771 = vmatpush2.msra.mxu0 0.0
  %3772 = vmatprep.subr.mxu0 0.0
  %3773 = vmatpush2.msra.mxu0 0.0
  %3774 = vmatprep.subr.mxu0 0.0
  %3775 = vmatpush2.msra.mxu0 0.0
  %3776 = vmatprep.subr.mxu0 0.0
  %3777 = vmatpush2.msra.mxu0 0.0
  %3778 = vmatprep.subr.mxu0 0.0
  %3779 = vmatpush2.msra.mxu0 0.0
  %3780 = vmatprep.subr.mxu0 0.0
  %3781 = vmatpush2.msra.mxu0 0.0
  %3782 = vmatprep.subr.mxu0 0.0
  %3783 = vmatpush2.msra.mxu0 0.0
  %3784 = vmatprep.subr.mxu0 0.0
  %3785 = vmatpush2.msra.mxu0 0.0
  %3786 = vmatprep.subr.mxu0 0.0
  %3787 = vmatpush2.msra.mxu0 0.0
  %3788 = vmatprep.subr.mxu0 0.0
  %3789 = vmatpush2.msra.mxu0 0.0
  %3790 = vmatprep.subr.mxu0 0.0
  %3791 = vmatpush2.msra.mxu0 0.0
  %3792 = vmatprep.subr.mxu0 0.0
  %3793 = vmatpush2.msra.mxu0 0.0
  %3794 = vmatprep.mubr.f32.mxu0 0.0
  %3795 = vmatmul.mubr.f32.gmra.mxu0 %v3728
  %v3796 = vpop.f32.mrf.mxu0
  %v3797 = vadd.f32 0.0, %v3796
  %v3798 = vpop.f32.mrf.mxu0
  %3799 = vdwg.mxu0
  %v3802 = vrot.slane %v3323, 7
  %v3803 = vsel %vm559, %v3802, %v3244
  %v3807 = vrot.slane %v3481, 7
  %v3808 = vsel %vm559, %v3807, %v3402
  %3809 = vrot.lane.b32.xlu0 %v3808, 8
  %v3810 = vpop.permute.xlu0 %3809
  %v3814 = vrot.slane %v3639, 7
  %v3815 = vsel %vm559, %v3814, %v3560
  %3816 = vrot.lane.b32.xlu0 %v3815, 16
  %v3817 = vpop.permute.xlu0 %3816
  %v3821 = vrot.slane %v3797, 7
  %v3822 = vsel %vm559, %v3821, %v3718
  %3823 = vrot.lane.b32.xlu0 %v3822, 24
  %v3824 = vpop.permute.xlu0 %3823
  %v3826 = vsel %vm814, %v3803, %v3810
  %v3827 = vsel %vm2355, %v3826, %v3817
  %v3828 = vsel %vm2357, %v3827, %v3824
  %3830 = vrot.lane.b32.xlu0 %v3828, 32
  %v3831 = vpop.permute.xlu0 %3830
  %3834 = vrot.lane.b32.xlu0 %v629, 64
  %v3835 = vpop.permute.xlu0 %3834
  %3838 = vrot.lane.b32.xlu0 %v2358, 96
  %v3839 = vpop.permute.xlu0 %3838
  %v3841 = vsel %vm64, %v121, %v3831
  %v3842 = vsel %vm194, %v3841, %v3835
  %vm3843 = vcmask 785408
  %v3844 = vsel %vm3843, %v3842, %v3839
  %v3845 = vpack.c.bf16 %v3844, %v3844
  %v3846 = vld [vmem:[%s2 + $0x98] sm:$0xf]
  %v3847 = vld [vmem:[%s2 + $0x9c] sm:$0xf]
  %v3848 = vld [vmem:[%s2 + $0xa0] sm:$0xf]
  %v3849 = vld [vmem:[%s2 + $0xa4] sm:$0xf]
  %v3850 = vld [vmem:[%s2 + $0xa8] sm:$0xf]
  %v3851 = vld [vmem:[%s2 + $0xac] sm:$0xf]
  %v3852 = vld [vmem:[%s2 + $0xb0] sm:$0xf]
  %v3853 = vld [vmem:[%s2 + $0xb4] sm:$0xf]
  %v3854 = vld [vmem:[%s2 + $0xb8] sm:$0xf]
  %v3855 = vld [vmem:[%s2 + $0xbc] sm:$0xf]
  %v3856 = vld [vmem:[%s2 + $0xc0] sm:$0xf]
  %v3857 = vld [vmem:[%s2 + $0xc4] sm:$0xf]
  %v3858 = vld [vmem:[%s2 + $0xc8] sm:$0xf]
  %v3859 = vld [vmem:[%s2 + $0xcc] sm:$0xf]
  %v3860 = vld [vmem:[%s2 + $0xd0] sm:$0xf]
  %v3861 = vld [vmem:[%s2 + $0xd4] sm:$0xf]
  %v3862 = vlaneseq
  %v3863 = vshrl.u32 %v3862, 7
  %v3864 = vsub.s32 4, %v3863
  %v3865 = vrot.slane %v16, %v3864
  %v3882 = vunpack.c.l.b16 %v3846
  %v3883 = vunpack.c.l.b16 %v3847
  %v3884 = vunpack.c.l.b16 %v3848
  %v3885 = vunpack.c.l.b16 %v3849
  %v3886 = vunpack.c.l.b16 %v3850
  %v3887 = vunpack.c.l.b16 %v3851
  %v3888 = vunpack.c.l.b16 %v3852
  %v3889 = vunpack.c.l.b16 %v3853
  %v3890 = vunpack.c.l.b16 %v3854
  %v3891 = vunpack.c.l.b16 %v3855
  %v3892 = vunpack.c.l.b16 %v3856
  %v3893 = vunpack.c.l.b16 %v3857
  %v3894 = vunpack.c.l.b16 %v3858
  %v3895 = vunpack.c.l.b16 %v3859
  %v3896 = vunpack.c.l.b16 %v3860
  %v3897 = vunpack.c.l.b16 %v3861
  %v3898 = vpack.c.b16 %v3883, %v3882
  %v3899 = vpack.c.b16 %v3885, %v3884
  %v3900 = vpack.c.b16 %v3887, %v3886
  %v3901 = vpack.c.b16 %v3889, %v3888
  %v3902 = vpack.c.b16 %v3891, %v3890
  %v3903 = vpack.c.b16 %v3893, %v3892
  %v3904 = vpack.c.b16 %v3895, %v3894
  %v3905 = vpack.c.b16 %v3897, %v3896
  %3914 = vmatprep.subr.bf16.mxu0 0
  %3915 = vmatpush1.bf16.msra.mxu0 %v3905
  %3916 = vmatprep.subr.bf16.mxu0 0
  %3917 = vmatpush1.bf16.msra.mxu0 %v3904
  %3918 = vmatprep.subr.bf16.mxu0 0
  %3919 = vmatpush1.bf16.msra.mxu0 %v3903
  %3920 = vmatprep.subr.bf16.mxu0 0
  %3921 = vmatpush1.bf16.msra.mxu0 %v3902
  %3922 = vmatprep.subr.bf16.mxu0 0
  %3923 = vmatpush1.bf16.msra.mxu0 %v3901
  %3924 = vmatprep.subr.bf16.mxu0 0
  %3925 = vmatpush1.bf16.msra.mxu0 %v3900
  %3926 = vmatprep.subr.bf16.mxu0 0
  %3927 = vmatpush1.bf16.msra.mxu0 %v3899
  %3928 = vmatprep.subr.bf16.mxu0 0
  %3929 = vmatpush1.bf16.msra.mxu0 %v3898
  %3930 = vmatprep.subr.bf16.mxu0 0
  %3931 = vmatpush2.bf16.msra.mxu0 0
  %3932 = vmatprep.subr.bf16.mxu0 0
  %3933 = vmatpush2.bf16.msra.mxu0 0
  %3934 = vmatprep.subr.bf16.mxu0 0
  %3935 = vmatpush2.bf16.msra.mxu0 0
  %3936 = vmatprep.subr.bf16.mxu0 0
  %3937 = vmatpush2.bf16.msra.mxu0 0
  %3938 = vmatprep.subr.bf16.mxu0 0
  %3939 = vmatpush2.bf16.msra.mxu0 0
  %3940 = vmatprep.subr.bf16.mxu0 0
  %3941 = vmatpush2.bf16.msra.mxu0 0
  %3942 = vmatprep.subr.bf16.mxu0 0
  %3943 = vmatpush2.bf16.msra.mxu0 0
  %3944 = vmatprep.subr.bf16.mxu0 0
  %3945 = vmatpush2.bf16.msra.mxu0 0
  %3946 = vmatprep.mubr.bf16.mxu0 0
  %3947 = vmatmul.mubr.bf16.gmra.mxu0 %v3845
  %v3948 = vpop.f32.mrf.mxu0
  %v3949 = vadd.f32 %v3865, %v3948
  %v3950 = vpop.f32.mrf.mxu0
  %v3951 = vpop.f32.mrf.mxu0
  %v3952 = vpop.f32.mrf.mxu0
  %3953 = vdwg.mxu0
  %v3954 = vmax.f32 %v3949, 0.0
  %v3955 = vpack.c.bf16 %v3954, %v3954
  %v3956 = vld [vmem:[%s2 + $0xd8] sm:$0xf]
  %v3957 = vld [vmem:[%s2 + $0xdc] sm:$0xf]
  %v3958 = vld [vmem:[%s2 + $0xe0] sm:$0xf]
  %v3959 = vld [vmem:[%s2 + $0xe4] sm:$0xf]
  %v3960 = vlaneseq
  %v3961 = vshrl.u32 %v3960, 7
  %v3962 = vsub.s32 5, %v3961
  %v3963 = vrot.slane %v16, %v3962
  %v3968 = vunpack.c.l.b16 %v3956
  %v3969 = vunpack.c.l.b16 %v3957
  %v3970 = vunpack.c.l.b16 %v3958
  %v3971 = vunpack.c.l.b16 %v3959
  %v3972 = vpack.c.b16 %v3969, %v3968
  %v3973 = vpack.c.b16 %v3971, %v3970
  %v3977 = vsel %vm64, %v3955, 0
  %3979 = vmatprep.subr.bf16.mxu0 0
  %3980 = vmatpush1.bf16.msra.mxu0 0
  %3981 = vmatprep.subr.bf16.mxu0 0
  %3982 = vmatpush1.bf16.msra.mxu0 0
  %3983 = vmatprep.subr.bf16.mxu0 0
  %3984 = vmatpush1.bf16.msra.mxu0 0
  %3985 = vmatprep.subr.bf16.mxu0 0
  %3986 = vmatpush1.bf16.msra.mxu0 0
  %3987 = vmatprep.subr.bf16.mxu0 0
  %3988 = vmatpush1.bf16.msra.mxu0 0
  %3989 = vmatprep.subr.bf16.mxu0 0
  %3990 = vmatpush1.bf16.msra.mxu0 0
  %3991 = vmatprep.subr.bf16.mxu0 0
  %3992 = vmatpush1.bf16.msra.mxu0 %v3973
  %3993 = vmatprep.subr.bf16.mxu0 0
  %3994 = vmatpush1.bf16.msra.mxu0 %v3972
  %3995 = vmatprep.subr.bf16.mxu0 0
  %3996 = vmatpush2.bf16.msra.mxu0 0
  %3997 = vmatprep.subr.bf16.mxu0 0
  %3998 = vmatpush2.bf16.msra.mxu0 0
  %3999 = vmatprep.subr.bf16.mxu0 0
  %4000 = vmatpush2.bf16.msra.mxu0 0
  %4001 = vmatprep.subr.bf16.mxu0 0
  %4002 = vmatpush2.bf16.msra.mxu0 0
  %4003 = vmatprep.subr.bf16.mxu0 0
  %4004 = vmatpush2.bf16.msra.mxu0 0
  %4005 = vmatprep.subr.bf16.mxu0 0
  %4006 = vmatpush2.bf16.msra.mxu0 0
  %4007 = vmatprep.subr.bf16.mxu0 0
  %4008 = vmatpush2.bf16.msra.mxu0 0
  %4009 = vmatprep.subr.bf16.mxu0 0
  %4010 = vmatpush2.bf16.msra.mxu0 0
  %4011 = vmatprep.mubr.bf16.mxu0 0
  %4012 = vmatmul.mubr.bf16.gmra.mxu0 %v3977
  %v4013 = vpop.f32.mrf.mxu0
  %v4014 = vadd.f32 %v3963, %v4013
  %v4015 = vpop.f32.mrf.mxu0
  %v4016 = vpop.f32.mrf.mxu0
  %v4017 = vpop.f32.mrf.mxu0
  %4018 = vdwg.mxu0
  %4019 = vst [vmem:[%s3] sm:$0x3] %v4014
  // Predicated region
  $region14: #{fuse_forward.1} parent=0 // pred_check
    _
  $region15: #{fuse_forward.1} parent=0 // pred_check_branch
    %4021 = sbr.rel (0) target = $region17
  $region16: #{fuse_forward.1} parent=0 // pred_region
    _
  $region17: #{fuse_forward.1} parent=0 // pred_fallthru
    _
  // Predicated region
  $region18: #{fuse_forward.1} parent=0 // pred_check
    _
  $region19: #{fuse_forward.1} parent=0 // pred_check_branch
    %4023 = sbr.rel (0) target = $region21
  $region20: #{fuse_forward.1} parent=0 // pred_region
    _
  $region21: #{fuse_forward.1} parent=0 // pred_fallthru
    _

</llo_original>
